<compile_context>
chip_gen: v6e
topology: v6e:2x2x1
jax: 0.10.0
libtpu: 0.0.40
codegen_flags: <defaults>
</compile_context>

<pallas_src>
import functools
import numpy as np

import jax
import jax.numpy as jnp
from jax.experimental import pallas as pl
from jax.experimental.pallas import tpu as pltpu


# ----------------------------------------------------------------------------
# Tiling helpers
# ----------------------------------------------------------------------------
_TM_FULL = 1024          # single i-block threshold (rows)
_TM_SPLIT = 512          # i-tile when M must be split (large patch batches)
_TN_MAX = 512            # j-tile cap (>= 2 j-blocks for wide N -> megacore)
_TK_MAX = 2048           # whole-K threshold (no K pad, no reduction ramp)
_VMEM_LIMIT = 48 * 1024 * 1024   # explicit scoped-VMEM budget (safe v5e/v6e/v7x)


def _round_up(x, m):
    return ((x + m - 1) // m) * m


def _largest_tile(dim, cap):
    """Largest multiple of 128 that divides `dim` (itself a 128-multiple), <= cap."""
    best = 128
    t = 128
    while t <= cap:
        if dim % t == 0:
            best = t
        t += 128
    return best


def _pad_to(a, axis, target):
    d = a.shape[axis]
    if d == target:
        return a
    widths = [(0, 0)] * a.ndim
    widths[axis] = (0, target - d)
    return jnp.pad(a, widths)


def _gelu_erf(y):
    # Exact-erf GELU (torch nn.GELU default). erf via Abramowitz & Stegun
    # 7.1.26 rational approximation (|err| <= 1.5e-7); the divide goes to the
    # EUP slot via the approximate reciprocal.
    a1, a2, a3, a4, a5 = 0.254829592, -0.284496736, 1.421413741, -1.453152027, 1.061405429
    z = y * 0.7071067811865476
    az = jnp.abs(z)
    t = pl.reciprocal(1.0 + 0.3275911 * az, approx=True)
    poly = ((((a5 * t + a4) * t + a3) * t + a2) * t + a1) * t
    erf_abs = 1.0 - poly * jnp.exp(-az * az)
    erf = jnp.where(z >= 0.0, erf_abs, -erf_abs)
    return 0.5 * y * (1.0 + erf)


# ----------------------------------------------------------------------------
# Tiled matmul kernel with fused epilogue (bias / GELU / up to two residuals)
# ----------------------------------------------------------------------------
def _matmul_kernel(*refs, activation, n_residual):
    x_ref, w_ref, b_ref = refs[0], refs[1], refs[2]
    res_refs = refs[3:3 + n_residual]
    o_ref = refs[3 + n_residual]
    acc_ref = refs[4 + n_residual]

    k = pl.program_id(2)

    @pl.when(k == 0)
    def _():
        acc_ref[...] = jnp.zeros_like(acc_ref)

    # Operands arrive already in bf16; accumulate in f32 on the MXU.
    acc_ref[...] += jnp.dot(x_ref[...], w_ref[...],
                            preferred_element_type=jnp.float32)

    @pl.when(k == pl.num_programs(2) - 1)
    def _():
        y = acc_ref[...] + b_ref[...]
        if activation == "gelu":
            y = _gelu_erf(y)
        for r in res_refs:                       # residual stream / control hidden
            y = y + r[...].astype(jnp.float32)
        o_ref[...] = y.astype(o_ref.dtype)


def pallas_matmul(x, w, b, *, residuals=(), activation=None,
                  out_dtype=jnp.bfloat16):
    M, K = x.shape
    _, N = w.shape

    # -- K: whole K in one step when it fits (no 768->1024 pad, no ramp). --
    if K <= _TK_MAX:
        tk, Kp = K, K
    else:
        Kp = _round_up(K, 128)
        tk = _largest_tile(Kp, _TK_MAX)

    # -- M: single i-block for typical B*S so weights stream from HBM once. --
    if M <= _TM_FULL:
        tm, Mp = M, M
    else:
        tm = _TM_SPLIT
        Mp = _round_up(M, tm)

    # -- N: full if small, else a 128-multiple divisor (no weight padding). --
    if N <= _TN_MAX:
        tn, Np = N, N
    else:
        Np = _round_up(N, 128)
        tn = _largest_tile(Np, _TN_MAX)

    # Pre-cast activations to bf16 BEFORE padding / DMA (halves x traffic and
    # removes the per-k VPU cast in the kernel).
    x_p = _pad_to(_pad_to(x.astype(jnp.bfloat16), 0, Mp), 1, Kp)
    w_p = w.astype(jnp.bfloat16)
    if (Kp, Np) != (K, N):
        w_p = _pad_to(_pad_to(w_p, 0, Kp), 1, Np)
    b_p = _pad_to(b.astype(jnp.float32).reshape(1, N), 1, Np)

    grid = (Mp // tm, Np // tn, Kp // tk)

    in_specs = [
        pl.BlockSpec((tm, tk), lambda i, j, k: (i, k)),
        pl.BlockSpec((tk, tn), lambda i, j, k: (k, j)),
        pl.BlockSpec((1, tn), lambda i, j, k: (0, j)),
    ]
    args = [x_p, w_p, b_p]
    for r in residuals:
        r_p = _pad_to(_pad_to(r, 0, Mp), 1, Np)
        in_specs.append(pl.BlockSpec((tm, tn), lambda i, j, k: (i, j)))
        args.append(r_p)

    kern = functools.partial(_matmul_kernel, activation=activation,
                             n_residual=len(residuals))
    out = pl.pallas_call(
        kern,
        out_shape=jax.ShapeDtypeStruct((Mp, Np), out_dtype),
        grid=grid,
        in_specs=in_specs,
        out_specs=pl.BlockSpec((tm, tn), lambda i, j, k: (i, j)),
        scratch_shapes=[pltpu.VMEM((tm, tn), jnp.float32)],
        compiler_params=pltpu.CompilerParams(
            dimension_semantics=("parallel", "parallel", "arbitrary"),
            vmem_limit_bytes=_VMEM_LIMIT),
    )(*args)
    if (Mp, Np) != (M, N):
        out = out[:M, :N]
    return out


def linear(x, w, b, *, residuals=(), activation=None, out_dtype=jnp.bfloat16):
    lead = x.shape[:-1]
    N = w.shape[1]
    rs = tuple(r.reshape(-1, N) for r in residuals)
    y = pallas_matmul(x.reshape(-1, x.shape[-1]), w, b,
                      residuals=rs, activation=activation, out_dtype=out_dtype)
    return y.reshape(*lead, N)


# ----------------------------------------------------------------------------
# Row-tiled LayerNorm (f32 statistics, arbitrary in/out dtype)
# ----------------------------------------------------------------------------
def _layernorm_kernel(x_ref, g_ref, b_ref, o_ref):
    x = x_ref[...].astype(jnp.float32)
    mean = jnp.mean(x, axis=-1, keepdims=True)
    c = x - mean
    var = jnp.mean(c * c, axis=-1, keepdims=True)
    y = c * jax.lax.rsqrt(var + 1e-5) * g_ref[...] + b_ref[...]
    o_ref[...] = y.astype(o_ref.dtype)


def layernorm(x, g, b, *, out_dtype=jnp.bfloat16):
    lead = x.shape[:-1]
    D = x.shape[-1]
    x2 = x.reshape(-1, D)
    M = x2.shape[0]
    if M <= 1024:
        tm, Mp = M, M               # single block
    else:
        tm = 512                    # HBM-bound: 512-row tiles ~85% of roofline
        Mp = _round_up(M, tm)
    x2p = _pad_to(x2, 0, Mp)
    y = pl.pallas_call(
        _layernorm_kernel,
        out_shape=jax.ShapeDtypeStruct((Mp, D), out_dtype),
        grid=(Mp // tm,),
        in_specs=[
            pl.BlockSpec((tm, D), lambda i: (i, 0)),
            pl.BlockSpec((1, D), lambda i: (0, 0)),
            pl.BlockSpec((1, D), lambda i: (0, 0)),
        ],
        out_specs=pl.BlockSpec((tm, D), lambda i: (i, 0)),
        compiler_params=pltpu.CompilerParams(dimension_semantics=("parallel",)),
    )(x2p, g.reshape(1, D).astype(jnp.float32), b.reshape(1, D).astype(jnp.float32))
    if Mp != M:
        y = y[:M]
    return y.reshape(*lead, D)


# ----------------------------------------------------------------------------
# Attention: grid=(B*heads,), per-head (S, Dh) blocks delivered by BlockSpec
# DMA, full-block stores, in-kernel causal mask, approx-reciprocal softmax.
# ----------------------------------------------------------------------------
def _attention_kernel(q_ref, k_ref, v_ref, o_ref, *, scale, causal):
    q = q_ref[0]                                            # (S, Dh) bf16
    k = k_ref[0]
    v = v_ref[0]
    s = jax.lax.dot_general(
        q, k, (((1,), (1,)), ((), ())),
        preferred_element_type=jnp.float32) * scale         # (S, S) f32
    if causal:
        S = s.shape[0]
        row = jax.lax.broadcasted_iota(jnp.int32, (S, S), 0)
        col = jax.lax.broadcasted_iota(jnp.int32, (S, S), 1)
        s = jnp.where(col > row, -1e30, s)
    s = s - jnp.max(s, axis=-1, keepdims=True)
    p = jnp.exp(s)
    inv = pl.reciprocal(jnp.sum(p, axis=-1, keepdims=True), approx=True)
    o = jnp.dot(p.astype(v.dtype), v, preferred_element_type=jnp.float32) * inv
    o_ref[0] = o.astype(o_ref.dtype)


def pallas_attention(qkv, n_heads, causal):
    B, S, threeD = qkv.shape
    D = threeD // 3
    Dh = D // n_heads
    # Split the packed (B, S, 3D) projection into per-head (B*H, S, Dh) slabs
    # in the wrapper so the kernel gets head tiles via BlockSpec DMA (no
    # in-kernel 64-lane column slicing, no unrolled per-head loop).
    qkv5 = qkv.reshape(B, S, 3, n_heads, Dh).transpose(2, 0, 3, 1, 4)
    q = qkv5[0].reshape(B * n_heads, S, Dh)
    k = qkv5[1].reshape(B * n_heads, S, Dh)
    v = qkv5[2].reshape(B * n_heads, S, Dh)

    kern = functools.partial(_attention_kernel, scale=float(Dh) ** -0.5,
                             causal=causal)
    out = pl.pallas_call(
        kern,
        out_shape=jax.ShapeDtypeStruct((B * n_heads, S, Dh), jnp.bfloat16),
        grid=(B * n_heads,),
        in_specs=[pl.BlockSpec((1, S, Dh), lambda i: (i, 0, 0))] * 3,
        out_specs=pl.BlockSpec((1, S, Dh), lambda i: (i, 0, 0)),
        compiler_params=pltpu.CompilerParams(dimension_semantics=("parallel",)),
    )(q, k, v)
    return out.reshape(B, n_heads, S, Dh).transpose(0, 2, 1, 3).reshape(B, S, D)


# ----------------------------------------------------------------------------
# L2 normalization (final features, f32, exact divide)
# ----------------------------------------------------------------------------
def _l2norm_kernel(x_ref, o_ref):
    x = x_ref[...]
    n = jnp.sqrt(jnp.sum(x * x, axis=-1, keepdims=True))
    o_ref[...] = x / jnp.maximum(n, 1e-12)    # matches F.normalize(p=2, eps=1e-12)


def l2_normalize(x):
    M, D = x.shape
    return pl.pallas_call(
        _l2norm_kernel,
        out_shape=jax.ShapeDtypeStruct((M, D), jnp.float32),
        grid=(1,),
        in_specs=[pl.BlockSpec((M, D), lambda i: (0, 0))],
        out_specs=pl.BlockSpec((M, D), lambda i: (0, 0)),
    )(x.astype(jnp.float32))


# ----------------------------------------------------------------------------
# CLIP building blocks (glue in JAX, compute in Pallas kernels above)
# ----------------------------------------------------------------------------
def multi_head_attention(x_ln, p, n_heads, causal, residual):
    qkv = linear(x_ln, p["in_w"], p["in_b"])                  # (B, S, 3D) bf16
    ctx = pallas_attention(qkv, n_heads, causal)              # (B, S, D) bf16
    # out-proj with fused bias + residual add, back to the f32 residual stream
    return linear(ctx, p["out_w"], p["out_b"],
                  residuals=(residual,), out_dtype=jnp.float32)


def resblock(x, p, n_heads, causal, control=None):
    # x = x + attn(ln_1(x)); x = x + mlp(ln_2(x)) [+ control, fused]
    x_ln = layernorm(x, p["ln1_g"], p["ln1_b"])
    x = multi_head_attention(x_ln, p["attn"], n_heads, causal, residual=x)
    h_ln = layernorm(x, p["ln2_g"], p["ln2_b"])
    h = linear(h_ln, p["fc_w"], p["fc_b"], activation="gelu")     # fused GELU
    residuals = (x,) if control is None else (x, control)         # fused control add
    return linear(h, p["proj_w"], p["proj_b"],
                  residuals=residuals, out_dtype=jnp.float32)


def transformer(x, layers, n_heads, causal, control=None, zero_convs=None,
                output_hiddens=False):
    # ControlTransformer semantics: per layer run the resblock, emit a
    # zero-conv (Linear) hidden; the main visual transformer adds the control
    # hidden to each layer's output (fused into the proj epilogue here).
    hiddens = []
    for i, lp in enumerate(layers):
        ctrl = control[i] if control is not None else None
        x = resblock(x, lp, n_heads, causal, control=ctrl)
        if output_hiddens:
            # hiddens travel in bf16 (half the HBM write traffic)
            hiddens.append(linear(x, zero_convs[i]["w"], zero_convs[i]["b"]))
    if output_hiddens:
        return x, hiddens
    return x


def vision_transformer(image, p, cfg, control=None, output_hiddens=False):
    B, C, H, W = image.shape
    ps = cfg["patch_size"]
    gh, gw = H // ps, W // ps
    width = cfg["width"]

    # Conv2d(C, width, kernel=ps, stride=ps, bias=False) as patch matmul.
    patches = (
        image.reshape(B, C, gh, ps, gw, ps)
        .transpose(0, 2, 4, 1, 3, 5)           # (B, gh, gw, C, ps, ps)
        .reshape(B * gh * gw, C * ps * ps)
    )
    x = pallas_matmul(patches, p["conv_w"],
                      jnp.zeros((width,), jnp.float32), out_dtype=jnp.float32)
    x = x.reshape(B, gh * gw, width)

    cls = jnp.broadcast_to(p["cls"], (B, 1, width))
    x = jnp.concatenate([cls, x], axis=1)       # (B, 1+gh*gw, width)
    x = x + p["pos"]
    x = layernorm(x, p["ln_pre_g"], p["ln_pre_b"], out_dtype=jnp.float32)

    out = transformer(
        x, p["layers"], cfg["heads"], causal=False,
        control=control, zero_convs=p.get("zero_convs"),
        output_hiddens=output_hiddens,
    )
    if output_hiddens:
        x, hiddens = out
    else:
        x, hiddens = out, None

    pooled = x[:, 0, :]                                    # 'tok' pooling (CLS)
    pooled = layernorm(pooled, p["ln_post_g"], p["ln_post_b"])
    pooled = pallas_matmul(pooled, p["proj"],
                           jnp.zeros((p["proj"].shape[1],), jnp.float32),
                           out_dtype=jnp.float32)
    if output_hiddens:
        return pooled, hiddens
    return pooled


def encode_text(tokens, p, cfg):
    B, S = tokens.shape
    x = p["tok_emb"][tokens]                               # (B, S, D) gather
    x = x + p["pos"][None, :S, :]
    x = transformer(x, p["layers"], cfg["heads"], causal=True)
    x = layernorm(x, p["ln_final_g"], p["ln_final_b"])
    eot = jnp.argmax(tokens, axis=-1)                      # EOT = highest token id
    pooled = x[jnp.arange(B), eot]                         # (B, D)
    pooled = pallas_matmul(pooled, p["text_proj"],
                           jnp.zeros((p["text_proj"].shape[1],), jnp.float32),
                           out_dtype=jnp.float32)
    return pooled


# ----------------------------------------------------------------------------
# SrCLIP forward
# ----------------------------------------------------------------------------
def srclip_forward(params, image, text, vcfg, tcfg):
    caption, degradation = jnp.split(text, 2, axis=-1)

    # encode_image(image, control=True, normalize=True)
    degra_features, hiddens = vision_transformer(
        image, params["visual_control"], vcfg, output_hiddens=True
    )
    image_features = vision_transformer(
        image, params["visual"], vcfg, control=hiddens
    )
    image_features = l2_normalize(image_features)
    degra_features = l2_normalize(degra_features)

    text_features = l2_normalize(encode_text(caption, params["text"], tcfg))
    text_degra_features = l2_normalize(encode_text(degradation, params["text"], tcfg))

    return {
        "image_features": image_features,
        "text_features": text_features,
        "image_degra_features": degra_features,
        "text_degra_features": text_degra_features,
        "logit_scale": jnp.exp(params["logit_scale"]),
    }


# ----------------------------------------------------------------------------
# Deterministic parameter initialization (matmul weights pre-cast to bf16)
# ----------------------------------------------------------------------------
def init_params(key, vcfg, tcfg, embed_dim):
    keys = iter(jax.random.split(key, 512))

    def nrm(shape, std=0.02, dtype=jnp.float32):
        return (std * jax.random.normal(next(keys), shape)).astype(dtype)

    def wgt(shape, std=0.02):
        return nrm(shape, std, jnp.bfloat16)   # matmul weights stored in bf16

    def zeros(shape):
        return jnp.zeros(shape, jnp.float32)

    def ones(shape):
        return jnp.ones(shape, jnp.float32)

    def init_resblock(d):
        return dict(
            ln1_g=ones((1, d)), ln1_b=zeros((1, d)),
            attn=dict(
                in_w=wgt((d, 3 * d)), in_b=zeros((3 * d,)),
                out_w=wgt((d, d)), out_b=zeros((d,)),
            ),
            ln2_g=ones((1, d)), ln2_b=zeros((1, d)),
            fc_w=wgt((d, 4 * d)), fc_b=zeros((4 * d,)),
            proj_w=wgt((4 * d, d)), proj_b=zeros((d,)),
        )

    dv = vcfg["width"]
    seq = 1 + (vcfg["image_size"] // vcfg["patch_size"]) ** 2
    visual = dict(
        conv_w=wgt((vcfg["in_ch"] * vcfg["patch_size"] ** 2, dv)),
        cls=nrm((1, 1, dv)),
        pos=nrm((1, seq, dv)),
        ln_pre_g=ones((1, dv)), ln_pre_b=zeros((1, dv)),
        layers=[init_resblock(dv) for _ in range(vcfg["layers"])],
        ln_post_g=ones((1, dv)), ln_post_b=zeros((1, dv)),
        proj=wgt((dv, embed_dim)),
    )

    # visual_control starts with deepcopy-equal weights (same values) as the
    # main tower, plus the control zero-convs.  Reference zero-inits these
    # ("zero_module"); small nonzero values here so the control path is
    # numerically exercised in the demo.
    visual_control = dict(visual)
    visual_control["zero_convs"] = [
        dict(w=wgt((dv, dv), std=0.01), b=zeros((dv,)))
        for _ in range(vcfg["layers"])
    ]

    dt = tcfg["width"]
    text = dict(
        tok_emb=nrm((tcfg["vocab"], dt)),
        pos=nrm((tcfg["ctx"], dt)),
        layers=[init_resblock(dt) for _ in range(tcfg["layers"])],
        ln_final_g=ones((1, dt)), ln_final_b=zeros((1, dt)),
        text_proj=wgt((dt, embed_dim)),
    )

    return dict(
        visual=visual,
        visual_control=visual_control,
        text=text,
        logit_scale=jnp.asarray(np.log(1.0 / 0.07), jnp.float32),
    )


# ----------------------------------------------------------------------------
if __name__ == "__main__":
    # Small synthetic config consistent with a CLIP ViT.
    embed_dim = 32
    vcfg = dict(image_size=16, patch_size=8, in_ch=3, width=32, heads=4, layers=2)
    tcfg = dict(vocab=64, ctx=8, width=32, heads=4, layers=2)

    key = jax.random.PRNGKey(0)
    k_img, k_txt, k_par = jax.random.split(key, 3)

    image = jax.random.normal(k_img, (2, 3, 16, 16), jnp.float32)        # NCHW
    text = jax.random.randint(k_txt, (2, 16), 1, tcfg["vocab"], jnp.int32)

    params = init_params(k_par, vcfg, tcfg, embed_dim)

    fwd = jax.jit(functools.partial(srclip_forward, vcfg=vcfg, tcfg=tcfg))
    out = fwd(params, image, text)
    out = jax.block_until_ready(out)

    ok = all(
        bool(jnp.all(jnp.isfinite(v))) for v in jax.tree_util.tree_leaves(out)
    )
    # Normalized features should have unit norm.
    ok = ok and bool(
        jnp.allclose(jnp.linalg.norm(out["image_features"], axis=-1), 1.0, atol=1e-4)
    )
    ok = ok and bool(
        jnp.allclose(jnp.linalg.norm(out["text_features"], axis=-1), 1.0, atol=1e-4)
    )
    ok = ok and bool(
        jnp.allclose(jnp.linalg.norm(out["image_degra_features"], axis=-1), 1.0, atol=1e-4)
    )
    assert ok
    print("KERNEL_OK")
</pallas_src>

<mosaic_0001>
module attributes {stable_mosaic.version = 11 : i64} {
  func.func @_layernorm_kernel(%arg0: i32, %arg1: memref<16x32xf32, #tpu.memory_space<vmem>>, %arg2: memref<1x32xf32, #tpu.memory_space<vmem>>, %arg3: memref<1x32xf32, #tpu.memory_space<vmem>>, %arg4: memref<16x32xbf16, #tpu.memory_space<vmem>>) attributes {dimension_semantics = [#tpu.dimension_semantics<parallel>], iteration_bounds = array<i64: 1>, scalar_prefetch = 0 : i64, scratch_operands = 0 : i64, tpu.core_type = #tpu.core_type<tc>, window_params = [{transform_indices = @transform_0, window_bounds = array<i64: 16, 32>}, {pipeline_mode = #tpu.pipeline_mode<synchronous>, transform_indices = @transform_1, window_bounds = array<i64: 1, 32>}, {pipeline_mode = #tpu.pipeline_mode<synchronous>, transform_indices = @transform_2, window_bounds = array<i64: 1, 32>}, {transform_indices = @transform_3, window_bounds = array<i64: 16, 32>}]} {
    %c0 = arith.constant 0 : index
    %c0_0 = arith.constant 0 : index
    %0 = vector.load %arg1[%c0, %c0_0] : memref<16x32xf32, #tpu.memory_space<vmem>>, vector<16x32xf32>
    %cst = arith.constant dense<0.000000e+00> : vector<16xf32>
    %1 = vector.multi_reduction <add>, %0, %cst [1] : vector<16x32xf32> to vector<16xf32>
    %2 = vector.shape_cast %1 : vector<16xf32> to vector<16x1xf32>
    %cst_1 = arith.constant 3.200000e+01 : f32
    %3 = vector.broadcast %cst_1 : f32 to vector<16x1xf32>
    %4 = arith.divf %2, %3 : vector<16x1xf32>
    %5 = vector.broadcast %4 : vector<16x1xf32> to vector<16x32xf32>
    %6 = arith.subf %0, %5 : vector<16x32xf32>
    %7 = arith.mulf %6, %6 : vector<16x32xf32>
    %cst_2 = arith.constant dense<0.000000e+00> : vector<16xf32>
    %8 = vector.multi_reduction <add>, %7, %cst_2 [1] : vector<16x32xf32> to vector<16xf32>
    %9 = vector.shape_cast %8 : vector<16xf32> to vector<16x1xf32>
    %cst_3 = arith.constant 3.200000e+01 : f32
    %10 = vector.broadcast %cst_3 : f32 to vector<16x1xf32>
    %11 = arith.divf %9, %10 : vector<16x1xf32>
    %cst_4 = arith.constant 9.99999974E-6 : f32
    %12 = vector.broadcast %cst_4 : f32 to vector<16x1xf32>
    %13 = arith.addf %11, %12 : vector<16x1xf32>
    %14 = math.rsqrt %13 : vector<16x1xf32>
    %15 = vector.broadcast %14 : vector<16x1xf32> to vector<16x32xf32>
    %16 = arith.mulf %6, %15 : vector<16x32xf32>
    %c0_5 = arith.constant 0 : index
    %c0_6 = arith.constant 0 : index
    %17 = vector.load %arg2[%c0_5, %c0_6] : memref<1x32xf32, #tpu.memory_space<vmem>>, vector<1x32xf32>
    %18 = vector.broadcast %17 : vector<1x32xf32> to vector<16x32xf32>
    %19 = arith.mulf %16, %18 : vector<16x32xf32>
    %c0_7 = arith.constant 0 : index
    %c0_8 = arith.constant 0 : index
    %20 = vector.load %arg3[%c0_7, %c0_8] : memref<1x32xf32, #tpu.memory_space<vmem>>, vector<1x32xf32>
    %21 = vector.broadcast %20 : vector<1x32xf32> to vector<16x32xf32>
    %22 = arith.addf %19, %21 : vector<16x32xf32>
    %23 = arith.truncf %22 : vector<16x32xf32> to vector<16x32xbf16>
    %c0_9 = arith.constant 0 : index
    %c0_10 = arith.constant 0 : index
    %24 = vector.load %arg4[%c0_9, %c0_10] : memref<16x32xbf16, #tpu.memory_space<vmem>>, vector<16x32xbf16>
    tpu.vector_store %arg4[%c0_9, %c0_10], %23 {strides = array<i32>} : memref<16x32xbf16, #tpu.memory_space<vmem>>, vector<16x32xbf16>,
    return
  }
  func.func @transform_0(%arg0: i32) -> (i32, i32) {
    %c0_i32 = arith.constant 0 : i32
    %c0_i32_0 = arith.constant 0 : i32
    return %arg0, %c0_i32 : i32, i32
  }
  func.func @transform_1(%arg0: i32) -> (i32, i32) {
    %c0_i32 = arith.constant 0 : i32
    %c0_i32_0 = arith.constant 0 : i32
    %c0_i32_1 = arith.constant 0 : i32
    return %c0_i32, %c0_i32_0 : i32, i32
  }
  func.func @transform_2(%arg0: i32) -> (i32, i32) {
    %c0_i32 = arith.constant 0 : i32
    %c0_i32_0 = arith.constant 0 : i32
    %c0_i32_1 = arith.constant 0 : i32
    return %c0_i32, %c0_i32_0 : i32, i32
  }
  func.func @transform_3(%arg0: i32) -> (i32, i32) {
    %c0_i32 = arith.constant 0 : i32
    %c0_i32_0 = arith.constant 0 : i32
    return %arg0, %c0_i32 : i32, i32
  }
}

module attributes {stable_mosaic.version = 11 : i64} {
  func.func @_matmul_kernel(%arg0: i32, %arg1: i32, %arg2: i32, %arg3: memref<16x32xbf16, #tpu.memory_space<vmem>>, %arg4: memref<32x96xbf16, #tpu.memory_space<vmem>>, %arg5: memref<1x96xf32, #tpu.memory_space<vmem>>, %arg6: memref<16x96xbf16, #tpu.memory_space<vmem>>, %arg7: memref<16x96xf32, #tpu.memory_space<vmem>>) attributes {dimension_semantics = [#tpu.dimension_semantics<parallel>, #tpu.dimension_semantics<parallel>, #tpu.dimension_semantics<arbitrary>], iteration_bounds = array<i64: 1, 1, 1>, scalar_prefetch = 0 : i64, scratch_operands = 1 : i64, tpu.core_type = #tpu.core_type<tc>, window_params = [{transform_indices = @transform_0, window_bounds = array<i64: 16, 32>}, {transform_indices = @transform_1, window_bounds = array<i64: 32, 96>}, {transform_indices = @transform_2, window_bounds = array<i64: 1, 96>}, {transform_indices = @transform_3, window_bounds = array<i64: 16, 96>}]} {
    %c0_i32 = arith.constant 0 : i32
    %0 = arith.cmpi eq, %arg2, %c0_i32 : i32
    %1 = arith.extui %0 : i1 to i32
    %c0_i32_0 = arith.constant 0 : i32
    %2 = arith.cmpi ne, %1, %c0_i32_0 : i32
    scf.if %2 {
      %cst_10 = arith.constant 0.000000e+00 : f32
      %12 = vector.broadcast %cst_10 : f32 to vector<16x96xf32>
      %c0_11 = arith.constant 0 : index
      %c0_12 = arith.constant 0 : index
      %13 = vector.load %arg7[%c0_11, %c0_12] : memref<16x96xf32, #tpu.memory_space<vmem>>, vector<16x96xf32>
      tpu.vector_store %arg7[%c0_11, %c0_12], %12 {strides = array<i32>} : memref<16x96xf32, #tpu.memory_space<vmem>>, vector<16x96xf32>,
    } else {
    }
    %c0 = arith.constant 0 : index
    %c0_1 = arith.constant 0 : index
    %3 = vector.load %arg7[%c0, %c0_1] : memref<16x96xf32, #tpu.memory_space<vmem>>, vector<16x96xf32>
    %c0_2 = arith.constant 0 : index
    %c0_3 = arith.constant 0 : index
    %4 = vector.load %arg3[%c0_2, %c0_3] : memref<16x32xbf16, #tpu.memory_space<vmem>>, vector<16x32xbf16>
    %c0_4 = arith.constant 0 : index
    %c0_5 = arith.constant 0 : index
    %5 = vector.load %arg4[%c0_4, %c0_5] : memref<32x96xbf16, #tpu.memory_space<vmem>>, vector<32x96xbf16>
    %cst = arith.constant dense<0.000000e+00> : vector<16x96xf32>
    %6 = tpu.matmul %4, %5, %cst {dimension_numbers = #tpu.dot_dimension_numbers<[1], [0], [0], [1], [0, 0, 1, 1], [], []>} : vector<16x32xbf16>, vector<32x96xbf16>, vector<16x96xf32> -> vector<16x96xf32>
    %7 = arith.addf %3, %6 : vector<16x96xf32>
    %c0_6 = arith.constant 0 : index
    %c0_7 = arith.constant 0 : index
    %8 = vector.load %arg7[%c0_6, %c0_7] : memref<16x96xf32, #tpu.memory_space<vmem>>, vector<16x96xf32>
    tpu.vector_store %arg7[%c0_6, %c0_7], %7 {strides = array<i32>} : memref<16x96xf32, #tpu.memory_space<vmem>>, vector<16x96xf32>,
    %c0_i32_8 = arith.constant 0 : i32
    %9 = arith.cmpi eq, %arg2, %c0_i32_8 : i32
    %10 = arith.extui %9 : i1 to i32
    %c0_i32_9 = arith.constant 0 : i32
    %11 = arith.cmpi ne, %10, %c0_i32_9 : i32
    scf.if %11 {
      %c0_10 = arith.constant 0 : index
      %c0_11 = arith.constant 0 : index
      %12 = vector.load %arg7[%c0_10, %c0_11] : memref<16x96xf32, #tpu.memory_space<vmem>>, vector<16x96xf32>
      %c0_12 = arith.constant 0 : index
      %c0_13 = arith.constant 0 : index
      %13 = vector.load %arg5[%c0_12, %c0_13] : memref<1x96xf32, #tpu.memory_space<vmem>>, vector<1x96xf32>
      %14 = vector.broadcast %13 : vector<1x96xf32> to vector<16x96xf32>
      %15 = arith.addf %12, %14 : vector<16x96xf32>
      %16 = arith.truncf %15 : vector<16x96xf32> to vector<16x96xbf16>
      %c0_14 = arith.constant 0 : index
      %c0_15 = arith.constant 0 : index
      %17 = vector.load %arg6[%c0_14, %c0_15] : memref<16x96xbf16, #tpu.memory_space<vmem>>, vector<16x96xbf16>
      tpu.vector_store %arg6[%c0_14, %c0_15], %16 {strides = array<i32>} : memref<16x96xbf16, #tpu.memory_space<vmem>>, vector<16x96xbf16>,
    } else {
    }
    return
  }
  func.func @transform_0(%arg0: i32, %arg1: i32, %arg2: i32) -> (i32, i32) {
    %c0_i32 = arith.constant 0 : i32
    return %arg0, %arg2 : i32, i32
  }
  func.func @transform_1(%arg0: i32, %arg1: i32, %arg2: i32) -> (i32, i32) {
    %c0_i32 = arith.constant 0 : i32
    return %arg2, %arg1 : i32, i32
  }
  func.func @transform_2(%arg0: i32, %arg1: i32, %arg2: i32) -> (i32, i32) {
    %c0_i32 = arith.constant 0 : i32
    %c0_i32_0 = arith.constant 0 : i32
    return %c0_i32, %arg1 : i32, i32
  }
  func.func @transform_3(%arg0: i32, %arg1: i32, %arg2: i32) -> (i32, i32) {
    %c0_i32 = arith.constant 0 : i32
    return %arg0, %arg1 : i32, i32
  }
}

module attributes {stable_mosaic.version = 11 : i64} {
  func.func @_attention_kernel(%arg0: i32, %arg1: memref<1x8x8xbf16, #tpu.memory_space<vmem>>, %arg2: memref<1x8x8xbf16, #tpu.memory_space<vmem>>, %arg3: memref<1x8x8xbf16, #tpu.memory_space<vmem>>, %arg4: memref<1x8x8xbf16, #tpu.memory_space<vmem>>) attributes {dimension_semantics = [#tpu.dimension_semantics<parallel>], iteration_bounds = array<i64: 8>, scalar_prefetch = 0 : i64, scratch_operands = 0 : i64, tpu.core_type = #tpu.core_type<tc>, window_params = [{transform_indices = @transform_0, window_bounds = array<i64: 1, 8, 8>}, {transform_indices = @transform_1, window_bounds = array<i64: 1, 8, 8>}, {transform_indices = @transform_2, window_bounds = array<i64: 1, 8, 8>}, {transform_indices = @transform_3, window_bounds = array<i64: 1, 8, 8>}]} {
    %c0 = arith.constant 0 : index
    %c0_0 = arith.constant 0 : index
    %c0_1 = arith.constant 0 : index
    %0 = vector.load %arg1[%c0, %c0_0, %c0_1] : memref<1x8x8xbf16, #tpu.memory_space<vmem>>, vector<1x8x8xbf16>
    %1 = vector.shape_cast %0 : vector<1x8x8xbf16> to vector<8x8xbf16>
    %c0_2 = arith.constant 0 : index
    %c0_3 = arith.constant 0 : index
    %c0_4 = arith.constant 0 : index
    %2 = vector.load %arg2[%c0_2, %c0_3, %c0_4] : memref<1x8x8xbf16, #tpu.memory_space<vmem>>, vector<1x8x8xbf16>
    %3 = vector.shape_cast %2 : vector<1x8x8xbf16> to vector<8x8xbf16>
    %c0_5 = arith.constant 0 : index
    %c0_6 = arith.constant 0 : index
    %c0_7 = arith.constant 0 : index
    %4 = vector.load %arg3[%c0_5, %c0_6, %c0_7] : memref<1x8x8xbf16, #tpu.memory_space<vmem>>, vector<1x8x8xbf16>
    %5 = vector.shape_cast %4 : vector<1x8x8xbf16> to vector<8x8xbf16>
    %cst = arith.constant dense<0.000000e+00> : vector<8x8xf32>
    %6 = tpu.matmul %1, %3, %cst {dimension_numbers = #tpu.dot_dimension_numbers<[1], [1], [0], [0], [0, 0, 1, 0], [], []>} : vector<8x8xbf16>, vector<8x8xbf16>, vector<8x8xf32> -> vector<8x8xf32>
    %cst_8 = arith.constant 0.353553385 : f32
    %7 = vector.broadcast %cst_8 : f32 to vector<8x8xf32>
    %8 = arith.mulf %6, %7 : vector<8x8xf32>
    %9 = tpu.iota {dimensions = array<i32: 0>} : vector<8x8xi32>
    %10 = tpu.iota {dimensions = array<i32: 1>} : vector<8x8xi32>
    %11 = arith.cmpi sgt, %10, %9 : vector<8x8xi32>
    %cst_9 = arith.constant -1.000000e+30 : f32
    %12 = vector.broadcast %cst_9 : f32 to vector<8x8xf32>
    %13 = arith.select %11, %12, %8 : vector<8x8xi1>, vector<8x8xf32>
    %cst_10 = arith.constant dense<0xFF800000> : vector<8xf32>
    %14 = vector.multi_reduction <maximumf>, %13, %cst_10 [1] : vector<8x8xf32> to vector<8xf32>
    %15 = vector.shape_cast %14 : vector<8xf32> to vector<8x1xf32>
    %16 = vector.broadcast %15 : vector<8x1xf32> to vector<8x8xf32>
    %17 = arith.subf %13, %16 : vector<8x8xf32>
    %18 = math.exp %17 : vector<8x8xf32>
    %cst_11 = arith.constant dense<0.000000e+00> : vector<8xf32>
    %19 = vector.multi_reduction <add>, %18, %cst_11 [1] : vector<8x8xf32> to vector<8xf32>
    %20 = vector.shape_cast %19 : vector<8xf32> to vector<8x1xf32>
    %21 = tpu.reciprocal %20 {approx = true} : vector<8x1xf32> -> vector<8x1xf32>
    %22 = arith.truncf %18 : vector<8x8xf32> to vector<8x8xbf16>
    %cst_12 = arith.constant dense<0.000000e+00> : vector<8x8xf32>
    %23 = tpu.matmul %22, %5, %cst_12 {dimension_numbers = #tpu.dot_dimension_numbers<[1], [0], [0], [1], [0, 0, 1, 1], [], []>} : vector<8x8xbf16>, vector<8x8xbf16>, vector<8x8xf32> -> vector<8x8xf32>
    %24 = vector.broadcast %21 : vector<8x1xf32> to vector<8x8xf32>
    %25 = arith.mulf %23, %24 : vector<8x8xf32>
    %26 = arith.truncf %25 : vector<8x8xf32> to vector<8x8xbf16>
    %c0_13 = arith.constant 0 : index
    %c0_14 = arith.constant 0 : index
    %c0_15 = arith.constant 0 : index
    %27 = vector.load %arg4[%c0_13, %c0_14, %c0_15] : memref<1x8x8xbf16, #tpu.memory_space<vmem>>, vector<1x8x8xbf16>
    %28 = vector.shape_cast %27 : vector<1x8x8xbf16> to vector<8x8xbf16>
    %29 = vector.shape_cast %26 : vector<8x8xbf16> to vector<1x8x8xbf16>
    tpu.vector_store %arg4[%c0_13, %c0_14, %c0_15], %29 {strides = array<i32>} : memref<1x8x8xbf16, #tpu.memory_space<vmem>>, vector<1x8x8xbf16>,
    return
  }
  func.func @transform_0(%arg0: i32) -> (i32, i32, i32) {
    %c0_i32 = arith.constant 0 : i32
    %c0_i32_0 = arith.constant 0 : i32
    %c0_i32_1 = arith.constant 0 : i32
    return %arg0, %c0_i32, %c0_i32_0 : i32, i32, i32
  }
  func.func @transform_1(%arg0: i32) -> (i32, i32, i32) {
    %c0_i32 = arith.constant 0 : i32
    %c0_i32_0 = arith.constant 0 : i32
    %c0_i32_1 = arith.constant 0 : i32
    return %arg0, %c0_i32, %c0_i32_0 : i32, i32, i32
  }
  func.func @transform_2(%arg0: i32) -> (i32, i32, i32) {
    %c0_i32 = arith.constant 0 : i32
    %c0_i32_0 = arith.constant 0 : i32
    %c0_i32_1 = arith.constant 0 : i32
    return %arg0, %c0_i32, %c0_i32_0 : i32, i32, i32
  }
  func.func @transform_3(%arg0: i32) -> (i32, i32, i32) {
    %c0_i32 = arith.constant 0 : i32
    %c0_i32_0 = arith.constant 0 : i32
    %c0_i32_1 = arith.constant 0 : i32
    return %arg0, %c0_i32, %c0_i32_0 : i32, i32, i32
  }
}

module attributes {stable_mosaic.version = 11 : i64} {
  func.func @_matmul_kernel(%arg0: i32, %arg1: i32, %arg2: i32, %arg3: memref<16x32xbf16, #tpu.memory_space<vmem>>, %arg4: memref<32x32xbf16, #tpu.memory_space<vmem>>, %arg5: memref<1x32xf32, #tpu.memory_space<vmem>>, %arg6: memref<16x32xf32, #tpu.memory_space<vmem>>, %arg7: memref<16x32xf32, #tpu.memory_space<vmem>>, %arg8: memref<16x32xf32, #tpu.memory_space<vmem>>) attributes {dimension_semantics = [#tpu.dimension_semantics<parallel>, #tpu.dimension_semantics<parallel>, #tpu.dimension_semantics<arbitrary>], iteration_bounds = array<i64: 1, 1, 1>, scalar_prefetch = 0 : i64, scratch_operands = 1 : i64, tpu.core_type = #tpu.core_type<tc>, window_params = [{transform_indices = @transform_0, window_bounds = array<i64: 16, 32>}, {transform_indices = @transform_1, window_bounds = array<i64: 32, 32>}, {transform_indices = @transform_2, window_bounds = array<i64: 1, 32>}, {transform_indices = @transform_3, window_bounds = array<i64: 16, 32>}, {transform_indices = @transform_4, window_bounds = array<i64: 16, 32>}]} {
    %c0_i32 = arith.constant 0 : i32
    %0 = arith.cmpi eq, %arg2, %c0_i32 : i32
    %1 = arith.extui %0 : i1 to i32
    %c0_i32_0 = arith.constant 0 : i32
    %2 = arith.cmpi ne, %1, %c0_i32_0 : i32
    scf.if %2 {
      %cst_10 = arith.constant 0.000000e+00 : f32
      %12 = vector.broadcast %cst_10 : f32 to vector<16x32xf32>
      %c0_11 = arith.constant 0 : index
      %c0_12 = arith.constant 0 : index
      %13 = vector.load %arg8[%c0_11, %c0_12] : memref<16x32xf32, #tpu.memory_space<vmem>>, vector<16x32xf32>
      tpu.vector_store %arg8[%c0_11, %c0_12], %12 {strides = array<i32>} : memref<16x32xf32, #tpu.memory_space<vmem>>, vector<16x32xf32>,
    } else {
    }
    %c0 = arith.constant 0 : index
    %c0_1 = arith.constant 0 : index
    %3 = vector.load %arg8[%c0, %c0_1] : memref<16x32xf32, #tpu.memory_space<vmem>>, vector<16x32xf32>
    %c0_2 = arith.constant 0 : index
    %c0_3 = arith.constant 0 : index
    %4 = vector.load %arg3[%c0_2, %c0_3] : memref<16x32xbf16, #tpu.memory_space<vmem>>, vector<16x32xbf16>
    %c0_4 = arith.constant 0 : index
    %c0_5 = arith.constant 0 : index
    %5 = vector.load %arg4[%c0_4, %c0_5] : memref<32x32xbf16, #tpu.memory_space<vmem>>, vector<32x32xbf16>
    %cst = arith.constant dense<0.000000e+00> : vector<16x32xf32>
    %6 = tpu.matmul %4, %5, %cst {dimension_numbers = #tpu.dot_dimension_numbers<[1], [0], [0], [1], [0, 0, 1, 1], [], []>} : vector<16x32xbf16>, vector<32x32xbf16>, vector<16x32xf32> -> vector<16x32xf32>
    %7 = arith.addf %3, %6 : vector<16x32xf32>
    %c0_6 = arith.constant 0 : index
    %c0_7 = arith.constant 0 : index
    %8 = vector.load %arg8[%c0_6, %c0_7] : memref<16x32xf32, #tpu.memory_space<vmem>>, vector<16x32xf32>
    tpu.vector_store %arg8[%c0_6, %c0_7], %7 {strides = array<i32>} : memref<16x32xf32, #tpu.memory_space<vmem>>, vector<16x32xf32>,
    %c0_i32_8 = arith.constant 0 : i32
    %9 = arith.cmpi eq, %arg2, %c0_i32_8 : i32
    %10 = arith.extui %9 : i1 to i32
    %c0_i32_9 = arith.constant 0 : i32
    %11 = arith.cmpi ne, %10, %c0_i32_9 : i32
    scf.if %11 {
      %c0_10 = arith.constant 0 : index
      %c0_11 = arith.constant 0 : index
      %12 = vector.load %arg8[%c0_10, %c0_11] : memref<16x32xf32, #tpu.memory_space<vmem>>, vector<16x32xf32>
      %c0_12 = arith.constant 0 : index
      %c0_13 = arith.constant 0 : index
      %13 = vector.load %arg5[%c0_12, %c0_13] : memref<1x32xf32, #tpu.memory_space<vmem>>, vector<1x32xf32>
      %14 = vector.broadcast %13 : vector<1x32xf32> to vector<16x32xf32>
      %15 = arith.addf %12, %14 : vector<16x32xf32>
      %c0_14 = arith.constant 0 : index
      %c0_15 = arith.constant 0 : index
      %16 = vector.load %arg6[%c0_14, %c0_15] : memref<16x32xf32, #tpu.memory_space<vmem>>, vector<16x32xf32>
      %17 = arith.addf %15, %16 : vector<16x32xf32>
      %c0_16 = arith.constant 0 : index
      %c0_17 = arith.constant 0 : index
      %18 = vector.load %arg7[%c0_16, %c0_17] : memref<16x32xf32, #tpu.memory_space<vmem>>, vector<16x32xf32>
      tpu.vector_store %arg7[%c0_16, %c0_17], %17 {strides = array<i32>} : memref<16x32xf32, #tpu.memory_space<vmem>>, vector<16x32xf32>,
    } else {
    }
    return
  }
  func.func @transform_0(%arg0: i32, %arg1: i32, %arg2: i32) -> (i32, i32) {
    %c0_i32 = arith.constant 0 : i32
    return %arg0, %arg2 : i32, i32
  }
  func.func @transform_1(%arg0: i32, %arg1: i32, %arg2: i32) -> (i32, i32) {
    %c0_i32 = arith.constant 0 : i32
    return %arg2, %arg1 : i32, i32
  }
  func.func @transform_2(%arg0: i32, %arg1: i32, %arg2: i32) -> (i32, i32) {
    %c0_i32 = arith.constant 0 : i32
    %c0_i32_0 = arith.constant 0 : i32
    return %c0_i32, %arg1 : i32, i32
  }
  func.func @transform_3(%arg0: i32, %arg1: i32, %arg2: i32) -> (i32, i32) {
    %c0_i32 = arith.constant 0 : i32
    return %arg0, %arg1 : i32, i32
  }
  func.func @transform_4(%arg0: i32, %arg1: i32, %arg2: i32) -> (i32, i32) {
    %c0_i32 = arith.constant 0 : i32
    return %arg0, %arg1 : i32, i32
  }
}

module attributes {stable_mosaic.version = 11 : i64} {
  func.func @_matmul_kernel(%arg0: i32, %arg1: i32, %arg2: i32, %arg3: memref<16x32xbf16, #tpu.memory_space<vmem>>, %arg4: memref<32x128xbf16, #tpu.memory_space<vmem>>, %arg5: memref<1x128xf32, #tpu.memory_space<vmem>>, %arg6: memref<16x128xbf16, #tpu.memory_space<vmem>>, %arg7: memref<16x128xf32, #tpu.memory_space<vmem>>) attributes {dimension_semantics = [#tpu.dimension_semantics<parallel>, #tpu.dimension_semantics<parallel>, #tpu.dimension_semantics<arbitrary>], iteration_bounds = array<i64: 1, 1, 1>, scalar_prefetch = 0 : i64, scratch_operands = 1 : i64, tpu.core_type = #tpu.core_type<tc>, window_params = [{transform_indices = @transform_0, window_bounds = array<i64: 16, 32>}, {transform_indices = @transform_1, window_bounds = array<i64: 32, 128>}, {transform_indices = @transform_2, window_bounds = array<i64: 1, 128>}, {transform_indices = @transform_3, window_bounds = array<i64: 16, 128>}]} {
    %c0_i32 = arith.constant 0 : i32
    %0 = arith.cmpi eq, %arg2, %c0_i32 : i32
    %1 = arith.extui %0 : i1 to i32
    %c0_i32_0 = arith.constant 0 : i32
    %2 = arith.cmpi ne, %1, %c0_i32_0 : i32
    scf.if %2 {
      %cst_10 = arith.constant 0.000000e+00 : f32
      %12 = vector.broadcast %cst_10 : f32 to vector<16x128xf32>
      %c0_11 = arith.constant 0 : index
      %c0_12 = arith.constant 0 : index
      %13 = vector.load %arg7[%c0_11, %c0_12] : memref<16x128xf32, #tpu.memory_space<vmem>>, vector<16x128xf32>
      tpu.vector_store %arg7[%c0_11, %c0_12], %12 {strides = array<i32>} : memref<16x128xf32, #tpu.memory_space<vmem>>, vector<16x128xf32>,
    } else {
    }
    %c0 = arith.constant 0 : index
    %c0_1 = arith.constant 0 : index
    %3 = vector.load %arg7[%c0, %c0_1] : memref<16x128xf32, #tpu.memory_space<vmem>>, vector<16x128xf32>
    %c0_2 = arith.constant 0 : index
    %c0_3 = arith.constant 0 : index
    %4 = vector.load %arg3[%c0_2, %c0_3] : memref<16x32xbf16, #tpu.memory_space<vmem>>, vector<16x32xbf16>
    %c0_4 = arith.constant 0 : index
    %c0_5 = arith.constant 0 : index
    %5 = vector.load %arg4[%c0_4, %c0_5] : memref<32x128xbf16, #tpu.memory_space<vmem>>, vector<32x128xbf16>
    %cst = arith.constant dense<0.000000e+00> : vector<16x128xf32>
    %6 = tpu.matmul %4, %5, %cst {dimension_numbers = #tpu.dot_dimension_numbers<[1], [0], [0], [1], [0, 0, 1, 1], [], []>} : vector<16x32xbf16>, vector<32x128xbf16>, vector<16x128xf32> -> vector<16x128xf32>
    %7 = arith.addf %3, %6 : vector<16x128xf32>
    %c0_6 = arith.constant 0 : index
    %c0_7 = arith.constant 0 : index
    %8 = vector.load %arg7[%c0_6, %c0_7] : memref<16x128xf32, #tpu.memory_space<vmem>>, vector<16x128xf32>
    tpu.vector_store %arg7[%c0_6, %c0_7], %7 {strides = array<i32>} : memref<16x128xf32, #tpu.memory_space<vmem>>, vector<16x128xf32>,
    %c0_i32_8 = arith.constant 0 : i32
    %9 = arith.cmpi eq, %arg2, %c0_i32_8 : i32
    %10 = arith.extui %9 : i1 to i32
    %c0_i32_9 = arith.constant 0 : i32
    %11 = arith.cmpi ne, %10, %c0_i32_9 : i32
    scf.if %11 {
      %c0_10 = arith.constant 0 : index
      %c0_11 = arith.constant 0 : index
      %12 = vector.load %arg7[%c0_10, %c0_11] : memref<16x128xf32, #tpu.memory_space<vmem>>, vector<16x128xf32>
      %c0_12 = arith.constant 0 : index
      %c0_13 = arith.constant 0 : index
      %13 = vector.load %arg5[%c0_12, %c0_13] : memref<1x128xf32, #tpu.memory_space<vmem>>, vector<1x128xf32>
      %14 = vector.broadcast %13 : vector<1x128xf32> to vector<16x128xf32>
      %15 = arith.addf %12, %14 : vector<16x128xf32>
      %cst_14 = arith.constant 0.707106769 : f32
      %16 = vector.broadcast %cst_14 : f32 to vector<16x128xf32>
      %17 = arith.mulf %15, %16 : vector<16x128xf32>
      %18 = math.absf %17 : vector<16x128xf32>
      %cst_15 = arith.constant 0.327591091 : f32
      %19 = vector.broadcast %cst_15 : f32 to vector<16x128xf32>
      %20 = arith.mulf %19, %18 : vector<16x128xf32>
      %cst_16 = arith.constant 1.000000e+00 : f32
      %21 = vector.broadcast %cst_16 : f32 to vector<16x128xf32>
      %22 = arith.addf %21, %20 : vector<16x128xf32>
      %23 = tpu.reciprocal %22 {approx = true} : vector<16x128xf32> -> vector<16x128xf32>
      %cst_17 = arith.constant 1.06140542 : f32
      %24 = vector.broadcast %cst_17 : f32 to vector<16x128xf32>
      %25 = arith.mulf %24, %23 : vector<16x128xf32>
      %cst_18 = arith.constant -1.45315206 : f32
      %26 = vector.broadcast %cst_18 : f32 to vector<16x128xf32>
      %27 = arith.addf %25, %26 : vector<16x128xf32>
      %28 = arith.mulf %27, %23 : vector<16x128xf32>
      %cst_19 = arith.constant 1.42141378 : f32
      %29 = vector.broadcast %cst_19 : f32 to vector<16x128xf32>
      %30 = arith.addf %28, %29 : vector<16x128xf32>
      %31 = arith.mulf %30, %23 : vector<16x128xf32>
      %cst_20 = arith.constant -0.284496725 : f32
      %32 = vector.broadcast %cst_20 : f32 to vector<16x128xf32>
      %33 = arith.addf %31, %32 : vector<16x128xf32>
      %34 = arith.mulf %33, %23 : vector<16x128xf32>
      %cst_21 = arith.constant 0.254829586 : f32
      %35 = vector.broadcast %cst_21 : f32 to vector<16x128xf32>
      %36 = arith.addf %34, %35 : vector<16x128xf32>
      %37 = arith.mulf %36, %23 : vector<16x128xf32>
      %cst_22 = arith.constant 0.000000e+00 : f32
      %38 = vector.broadcast %cst_22 : f32 to vector<16x128xf32>
      %39 = arith.subf %38, %18 : vector<16x128xf32>
      %40 = arith.mulf %39, %18 : vector<16x128xf32>
      %41 = math.exp %40 : vector<16x128xf32>
      %42 = arith.mulf %37, %41 : vector<16x128xf32>
      %cst_23 = arith.constant 1.000000e+00 : f32
      %43 = vector.broadcast %cst_23 : f32 to vector<16x128xf32>
      %44 = arith.subf %43, %42 : vector<16x128xf32>
      %cst_24 = arith.constant 0.000000e+00 : f32
      %45 = vector.broadcast %cst_24 : f32 to vector<16x128xf32>
      %46 = arith.cmpf oge, %17, %45 : vector<16x128xf32>
      %cst_25 = arith.constant 0.000000e+00 : f32
      %47 = vector.broadcast %cst_25 : f32 to vector<16x128xf32>
      %48 = arith.subf %47, %44 : vector<16x128xf32>
      %49 = arith.select %46, %44, %48 : vector<16x128xi1>, vector<16x128xf32>
      %cst_26 = arith.constant 5.000000e-01 : f32
      %50 = vector.broadcast %cst_26 : f32 to vector<16x128xf32>
      %51 = arith.mulf %50, %15 : vector<16x128xf32>
      %cst_27 = arith.constant 1.000000e+00 : f32
      %52 = vector.broadcast %cst_27 : f32 to vector<16x128xf32>
      %53 = arith.addf %52, %49 : vector<16x128xf32>
      %54 = arith.mulf %51, %53 : vector<16x128xf32>
      %55 = arith.truncf %54 : vector<16x128xf32> to vector<16x128xbf16>
      %c0_28 = arith.constant 0 : index
      %c0_29 = arith.constant 0 : index
      %56 = vector.load %arg6[%c0_28, %c0_29] : memref<16x128xbf16, #tpu.memory_space<vmem>>, vector<16x128xbf16>
      tpu.vector_store %arg6[%c0_28, %c0_29], %55 {strides = array<i32>} : memref<16x128xbf16, #tpu.memory_space<vmem>>, vector<16x128xbf16>,
    } else {
    }
    return
  }
  func.func @transform_0(%arg0: i32, %arg1: i32, %arg2: i32) -> (i32, i32) {
    %c0_i32 = arith.constant 0 : i32
    return %arg0, %arg2 : i32, i32
  }
  func.func @transform_1(%arg0: i32, %arg1: i32, %arg2: i32) -> (i32, i32) {
    %c0_i32 = arith.constant 0 : i32
    return %arg2, %arg1 : i32, i32
  }
  func.func @transform_2(%arg0: i32, %arg1: i32, %arg2: i32) -> (i32, i32) {
    %c0_i32 = arith.constant 0 : i32
    %c0_i32_0 = arith.constant 0 : i32
    return %c0_i32, %arg1 : i32, i32
  }
  func.func @transform_3(%arg0: i32, %arg1: i32, %arg2: i32) -> (i32, i32) {
    %c0_i32 = arith.constant 0 : i32
    return %arg0, %arg1 : i32, i32
  }
}

module attributes {stable_mosaic.version = 11 : i64} {
  func.func @_matmul_kernel(%arg0: i32, %arg1: i32, %arg2: i32, %arg3: memref<16x128xbf16, #tpu.memory_space<vmem>>, %arg4: memref<128x32xbf16, #tpu.memory_space<vmem>>, %arg5: memref<1x32xf32, #tpu.memory_space<vmem>>, %arg6: memref<16x32xf32, #tpu.memory_space<vmem>>, %arg7: memref<16x32xf32, #tpu.memory_space<vmem>>, %arg8: memref<16x32xf32, #tpu.memory_space<vmem>>) attributes {dimension_semantics = [#tpu.dimension_semantics<parallel>, #tpu.dimension_semantics<parallel>, #tpu.dimension_semantics<arbitrary>], iteration_bounds = array<i64: 1, 1, 1>, scalar_prefetch = 0 : i64, scratch_operands = 1 : i64, tpu.core_type = #tpu.core_type<tc>, window_params = [{transform_indices = @transform_0, window_bounds = array<i64: 16, 128>}, {transform_indices = @transform_1, window_bounds = array<i64: 128, 32>}, {transform_indices = @transform_2, window_bounds = array<i64: 1, 32>}, {transform_indices = @transform_3, window_bounds = array<i64: 16, 32>}, {transform_indices = @transform_4, window_bounds = array<i64: 16, 32>}]} {
    %c0_i32 = arith.constant 0 : i32
    %0 = arith.cmpi eq, %arg2, %c0_i32 : i32
    %1 = arith.extui %0 : i1 to i32
    %c0_i32_0 = arith.constant 0 : i32
    %2 = arith.cmpi ne, %1, %c0_i32_0 : i32
    scf.if %2 {
      %cst_10 = arith.constant 0.000000e+00 : f32
      %12 = vector.broadcast %cst_10 : f32 to vector<16x32xf32>
      %c0_11 = arith.constant 0 : index
      %c0_12 = arith.constant 0 : index
      %13 = vector.load %arg8[%c0_11, %c0_12] : memref<16x32xf32, #tpu.memory_space<vmem>>, vector<16x32xf32>
      tpu.vector_store %arg8[%c0_11, %c0_12], %12 {strides = array<i32>} : memref<16x32xf32, #tpu.memory_space<vmem>>, vector<16x32xf32>,
    } else {
    }
    %c0 = arith.constant 0 : index
    %c0_1 = arith.constant 0 : index
    %3 = vector.load %arg8[%c0, %c0_1] : memref<16x32xf32, #tpu.memory_space<vmem>>, vector<16x32xf32>
    %c0_2 = arith.constant 0 : index
    %c0_3 = arith.constant 0 : index
    %4 = vector.load %arg3[%c0_2, %c0_3] : memref<16x128xbf16, #tpu.memory_space<vmem>>, vector<16x128xbf16>
    %c0_4 = arith.constant 0 : index
    %c0_5 = arith.constant 0 : index
    %5 = vector.load %arg4[%c0_4, %c0_5] : memref<128x32xbf16, #tpu.memory_space<vmem>>, vector<128x32xbf16>
    %cst = arith.constant dense<0.000000e+00> : vector<16x32xf32>
    %6 = tpu.matmul %4, %5, %cst {dimension_numbers = #tpu.dot_dimension_numbers<[1], [0], [0], [1], [0, 0, 1, 1], [], []>} : vector<16x128xbf16>, vector<128x32xbf16>, vector<16x32xf32> -> vector<16x32xf32>
    %7 = arith.addf %3, %6 : vector<16x32xf32>
    %c0_6 = arith.constant 0 : index
    %c0_7 = arith.constant 0 : index
    %8 = vector.load %arg8[%c0_6, %c0_7] : memref<16x32xf32, #tpu.memory_space<vmem>>, vector<16x32xf32>
    tpu.vector_store %arg8[%c0_6, %c0_7], %7 {strides = array<i32>} : memref<16x32xf32, #tpu.memory_space<vmem>>, vector<16x32xf32>,
    %c0_i32_8 = arith.constant 0 : i32
    %9 = arith.cmpi eq, %arg2, %c0_i32_8 : i32
    %10 = arith.extui %9 : i1 to i32
    %c0_i32_9 = arith.constant 0 : i32
    %11 = arith.cmpi ne, %10, %c0_i32_9 : i32
    scf.if %11 {
      %c0_10 = arith.constant 0 : index
      %c0_11 = arith.constant 0 : index
      %12 = vector.load %arg8[%c0_10, %c0_11] : memref<16x32xf32, #tpu.memory_space<vmem>>, vector<16x32xf32>
      %c0_12 = arith.constant 0 : index
      %c0_13 = arith.constant 0 : index
      %13 = vector.load %arg5[%c0_12, %c0_13] : memref<1x32xf32, #tpu.memory_space<vmem>>, vector<1x32xf32>
      %14 = vector.broadcast %13 : vector<1x32xf32> to vector<16x32xf32>
      %15 = arith.addf %12, %14 : vector<16x32xf32>
      %c0_14 = arith.constant 0 : index
      %c0_15 = arith.constant 0 : index
      %16 = vector.load %arg6[%c0_14, %c0_15] : memref<16x32xf32, #tpu.memory_space<vmem>>, vector<16x32xf32>
      %17 = arith.addf %15, %16 : vector<16x32xf32>
      %c0_16 = arith.constant 0 : index
      %c0_17 = arith.constant 0 : index
      %18 = vector.load %arg7[%c0_16, %c0_17] : memref<16x32xf32, #tpu.memory_space<vmem>>, vector<16x32xf32>
      tpu.vector_store %arg7[%c0_16, %c0_17], %17 {strides = array<i32>} : memref<16x32xf32, #tpu.memory_space<vmem>>, vector<16x32xf32>,
    } else {
    }
    return
  }
  func.func @transform_0(%arg0: i32, %arg1: i32, %arg2: i32) -> (i32, i32) {
    %c0_i32 = arith.constant 0 : i32
    return %arg0, %arg2 : i32, i32
  }
  func.func @transform_1(%arg0: i32, %arg1: i32, %arg2: i32) -> (i32, i32) {
    %c0_i32 = arith.constant 0 : i32
    return %arg2, %arg1 : i32, i32
  }
  func.func @transform_2(%arg0: i32, %arg1: i32, %arg2: i32) -> (i32, i32) {
    %c0_i32 = arith.constant 0 : i32
    %c0_i32_0 = arith.constant 0 : i32
    return %c0_i32, %arg1 : i32, i32
  }
  func.func @transform_3(%arg0: i32, %arg1: i32, %arg2: i32) -> (i32, i32) {
    %c0_i32 = arith.constant 0 : i32
    return %arg0, %arg1 : i32, i32
  }
  func.func @transform_4(%arg0: i32, %arg1: i32, %arg2: i32) -> (i32, i32) {
    %c0_i32 = arith.constant 0 : i32
    return %arg0, %arg1 : i32, i32
  }
}

module attributes {stable_mosaic.version = 11 : i64} {
  func.func @_matmul_kernel(%arg0: i32, %arg1: i32, %arg2: i32, %arg3: memref<2x32xbf16, #tpu.memory_space<vmem>>, %arg4: memref<32x32xbf16, #tpu.memory_space<vmem>>, %arg5: memref<1x32xf32, #tpu.memory_space<vmem>>, %arg6: memref<2x32xf32, #tpu.memory_space<vmem>>, %arg7: memref<2x32xf32, #tpu.memory_space<vmem>>) attributes {dimension_semantics = [#tpu.dimension_semantics<parallel>, #tpu.dimension_semantics<parallel>, #tpu.dimension_semantics<arbitrary>], iteration_bounds = array<i64: 1, 1, 1>, scalar_prefetch = 0 : i64, scratch_operands = 1 : i64, tpu.core_type = #tpu.core_type<tc>, window_params = [{transform_indices = @transform_0, window_bounds = array<i64: 2, 32>}, {transform_indices = @transform_1, window_bounds = array<i64: 32, 32>}, {transform_indices = @transform_2, window_bounds = array<i64: 1, 32>}, {transform_indices = @transform_3, window_bounds = array<i64: 2, 32>}]} {
    %c0_i32 = arith.constant 0 : i32
    %0 = arith.cmpi eq, %arg2, %c0_i32 : i32
    %1 = arith.extui %0 : i1 to i32
    %c0_i32_0 = arith.constant 0 : i32
    %2 = arith.cmpi ne, %1, %c0_i32_0 : i32
    scf.if %2 {
      %cst_10 = arith.constant 0.000000e+00 : f32
      %12 = vector.broadcast %cst_10 : f32 to vector<2x32xf32>
      %c0_11 = arith.constant 0 : index
      %c0_12 = arith.constant 0 : index
      %13 = vector.load %arg7[%c0_11, %c0_12] : memref<2x32xf32, #tpu.memory_space<vmem>>, vector<2x32xf32>
      tpu.vector_store %arg7[%c0_11, %c0_12], %12 {strides = array<i32>} : memref<2x32xf32, #tpu.memory_space<vmem>>, vector<2x32xf32>,
    } else {
    }
    %c0 = arith.constant 0 : index
    %c0_1 = arith.constant 0 : index
    %3 = vector.load %arg7[%c0, %c0_1] : memref<2x32xf32, #tpu.memory_space<vmem>>, vector<2x32xf32>
    %c0_2 = arith.constant 0 : index
    %c0_3 = arith.constant 0 : index
    %4 = vector.load %arg3[%c0_2, %c0_3] : memref<2x32xbf16, #tpu.memory_space<vmem>>, vector<2x32xbf16>
    %c0_4 = arith.constant 0 : index
    %c0_5 = arith.constant 0 : index
    %5 = vector.load %arg4[%c0_4, %c0_5] : memref<32x32xbf16, #tpu.memory_space<vmem>>, vector<32x32xbf16>
    %cst = arith.constant dense<0.000000e+00> : vector<2x32xf32>
    %6 = tpu.matmul %4, %5, %cst {dimension_numbers = #tpu.dot_dimension_numbers<[1], [0], [0], [1], [0, 0, 1, 1], [], []>} : vector<2x32xbf16>, vector<32x32xbf16>, vector<2x32xf32> -> vector<2x32xf32>
    %7 = arith.addf %3, %6 : vector<2x32xf32>
    %c0_6 = arith.constant 0 : index
    %c0_7 = arith.constant 0 : index
    %8 = vector.load %arg7[%c0_6, %c0_7] : memref<2x32xf32, #tpu.memory_space<vmem>>, vector<2x32xf32>
    tpu.vector_store %arg7[%c0_6, %c0_7], %7 {strides = array<i32>} : memref<2x32xf32, #tpu.memory_space<vmem>>, vector<2x32xf32>,
    %c0_i32_8 = arith.constant 0 : i32
    %9 = arith.cmpi eq, %arg2, %c0_i32_8 : i32
    %10 = arith.extui %9 : i1 to i32
    %c0_i32_9 = arith.constant 0 : i32
    %11 = arith.cmpi ne, %10, %c0_i32_9 : i32
    scf.if %11 {
      %c0_10 = arith.constant 0 : index
      %c0_11 = arith.constant 0 : index
      %12 = vector.load %arg7[%c0_10, %c0_11] : memref<2x32xf32, #tpu.memory_space<vmem>>, vector<2x32xf32>
      %c0_12 = arith.constant 0 : index
      %c0_13 = arith.constant 0 : index
      %13 = vector.load %arg5[%c0_12, %c0_13] : memref<1x32xf32, #tpu.memory_space<vmem>>, vector<1x32xf32>
      %14 = vector.broadcast %13 : vector<1x32xf32> to vector<2x32xf32>
      %15 = arith.addf %12, %14 : vector<2x32xf32>
      %c0_14 = arith.constant 0 : index
      %c0_15 = arith.constant 0 : index
      %16 = vector.load %arg6[%c0_14, %c0_15] : memref<2x32xf32, #tpu.memory_space<vmem>>, vector<2x32xf32>
      tpu.vector_store %arg6[%c0_14, %c0_15], %15 {strides = array<i32>} : memref<2x32xf32, #tpu.memory_space<vmem>>, vector<2x32xf32>,
    } else {
    }
    return
  }
  func.func @transform_0(%arg0: i32, %arg1: i32, %arg2: i32) -> (i32, i32) {
    %c0_i32 = arith.constant 0 : i32
    return %arg0, %arg2 : i32, i32
  }
  func.func @transform_1(%arg0: i32, %arg1: i32, %arg2: i32) -> (i32, i32) {
    %c0_i32 = arith.constant 0 : i32
    return %arg2, %arg1 : i32, i32
  }
  func.func @transform_2(%arg0: i32, %arg1: i32, %arg2: i32) -> (i32, i32) {
    %c0_i32 = arith.constant 0 : i32
    %c0_i32_0 = arith.constant 0 : i32
    return %c0_i32, %arg1 : i32, i32
  }
  func.func @transform_3(%arg0: i32, %arg1: i32, %arg2: i32) -> (i32, i32) {
    %c0_i32 = arith.constant 0 : i32
    return %arg0, %arg1 : i32, i32
  }
}

module attributes {stable_mosaic.version = 11 : i64} {
  func.func @_l2norm_kernel(%arg0: i32, %arg1: memref<2x32xf32, #tpu.memory_space<vmem>>, %arg2: memref<2x32xf32, #tpu.memory_space<vmem>>) attributes {dimension_semantics = [#tpu.dimension_semantics<arbitrary>], iteration_bounds = array<i64: 1>, scalar_prefetch = 0 : i64, scratch_operands = 0 : i64, tpu.core_type = #tpu.core_type<tc>, window_params = [{pipeline_mode = #tpu.pipeline_mode<synchronous>, transform_indices = @transform_0, window_bounds = array<i64: 2, 32>}, {pipeline_mode = #tpu.pipeline_mode<synchronous>, transform_indices = @transform_1, window_bounds = array<i64: 2, 32>}]} {
    %c0 = arith.constant 0 : index
    %c0_0 = arith.constant 0 : index
    %0 = vector.load %arg1[%c0, %c0_0] : memref<2x32xf32, #tpu.memory_space<vmem>>, vector<2x32xf32>
    %1 = arith.mulf %0, %0 : vector<2x32xf32>
    %cst = arith.constant dense<0.000000e+00> : vector<2xf32>
    %2 = vector.multi_reduction <add>, %1, %cst [1] : vector<2x32xf32> to vector<2xf32>
    %3 = vector.shape_cast %2 : vector<2xf32> to vector<2x1xf32>
    %4 = math.sqrt %3 : vector<2x1xf32>
    %cst_1 = arith.constant 9.99999996E-13 : f32
    %5 = vector.broadcast %cst_1 : f32 to vector<2x1xf32>
    %6 = arith.maximumf %4, %5 : vector<2x1xf32>
    %7 = vector.broadcast %6 : vector<2x1xf32> to vector<2x32xf32>
    %8 = arith.divf %0, %7 : vector<2x32xf32>
    %c0_2 = arith.constant 0 : index
    %c0_3 = arith.constant 0 : index
    %9 = vector.load %arg2[%c0_2, %c0_3] : memref<2x32xf32, #tpu.memory_space<vmem>>, vector<2x32xf32>
    tpu.vector_store %arg2[%c0_2, %c0_3], %8 {strides = array<i32>} : memref<2x32xf32, #tpu.memory_space<vmem>>, vector<2x32xf32>,
    return
  }
  func.func @transform_0(%arg0: i32) -> (i32, i32) {
    %c0_i32 = arith.constant 0 : i32
    %c0_i32_0 = arith.constant 0 : i32
    %c0_i32_1 = arith.constant 0 : i32
    return %c0_i32, %c0_i32_0 : i32, i32
  }
  func.func @transform_1(%arg0: i32) -> (i32, i32) {
    %c0_i32 = arith.constant 0 : i32
    %c0_i32_0 = arith.constant 0 : i32
    %c0_i32_1 = arith.constant 0 : i32
    return %c0_i32, %c0_i32_0 : i32, i32
  }
}

module attributes {stable_mosaic.version = 11 : i64} {
  func.func @_matmul_kernel(%arg0: i32, %arg1: i32, %arg2: i32, %arg3: memref<8x192xbf16, #tpu.memory_space<vmem>>, %arg4: memref<192x32xbf16, #tpu.memory_space<vmem>>, %arg5: memref<1x32xf32, #tpu.memory_space<vmem>>, %arg6: memref<8x32xf32, #tpu.memory_space<vmem>>, %arg7: memref<8x32xf32, #tpu.memory_space<vmem>>) attributes {dimension_semantics = [#tpu.dimension_semantics<parallel>, #tpu.dimension_semantics<parallel>, #tpu.dimension_semantics<arbitrary>], iteration_bounds = array<i64: 1, 1, 1>, scalar_prefetch = 0 : i64, scratch_operands = 1 : i64, tpu.core_type = #tpu.core_type<tc>, window_params = [{transform_indices = @transform_0, window_bounds = array<i64: 8, 192>}, {transform_indices = @transform_1, window_bounds = array<i64: 192, 32>}, {transform_indices = @transform_2, window_bounds = array<i64: 1, 32>}, {transform_indices = @transform_3, window_bounds = array<i64: 8, 32>}]} {
    %c0_i32 = arith.constant 0 : i32
    %0 = arith.cmpi eq, %arg2, %c0_i32 : i32
    %1 = arith.extui %0 : i1 to i32
    %c0_i32_0 = arith.constant 0 : i32
    %2 = arith.cmpi ne, %1, %c0_i32_0 : i32
    scf.if %2 {
      %cst_10 = arith.constant 0.000000e+00 : f32
      %12 = vector.broadcast %cst_10 : f32 to vector<8x32xf32>
      %c0_11 = arith.constant 0 : index
      %c0_12 = arith.constant 0 : index
      %13 = vector.load %arg7[%c0_11, %c0_12] : memref<8x32xf32, #tpu.memory_space<vmem>>, vector<8x32xf32>
      tpu.vector_store %arg7[%c0_11, %c0_12], %12 {strides = array<i32>} : memref<8x32xf32, #tpu.memory_space<vmem>>, vector<8x32xf32>,
    } else {
    }
    %c0 = arith.constant 0 : index
    %c0_1 = arith.constant 0 : index
    %3 = vector.load %arg7[%c0, %c0_1] : memref<8x32xf32, #tpu.memory_space<vmem>>, vector<8x32xf32>
    %c0_2 = arith.constant 0 : index
    %c0_3 = arith.constant 0 : index
    %4 = vector.load %arg3[%c0_2, %c0_3] : memref<8x192xbf16, #tpu.memory_space<vmem>>, vector<8x192xbf16>
    %c0_4 = arith.constant 0 : index
    %c0_5 = arith.constant 0 : index
    %5 = vector.load %arg4[%c0_4, %c0_5] : memref<192x32xbf16, #tpu.memory_space<vmem>>, vector<192x32xbf16>
    %cst = arith.constant dense<0.000000e+00> : vector<8x32xf32>
    %6 = tpu.matmul %4, %5, %cst {dimension_numbers = #tpu.dot_dimension_numbers<[1], [0], [0], [1], [0, 0, 1, 1], [], []>} : vector<8x192xbf16>, vector<192x32xbf16>, vector<8x32xf32> -> vector<8x32xf32>
    %7 = arith.addf %3, %6 : vector<8x32xf32>
    %c0_6 = arith.constant 0 : index
    %c0_7 = arith.constant 0 : index
    %8 = vector.load %arg7[%c0_6, %c0_7] : memref<8x32xf32, #tpu.memory_space<vmem>>, vector<8x32xf32>
    tpu.vector_store %arg7[%c0_6, %c0_7], %7 {strides = array<i32>} : memref<8x32xf32, #tpu.memory_space<vmem>>, vector<8x32xf32>,
    %c0_i32_8 = arith.constant 0 : i32
    %9 = arith.cmpi eq, %arg2, %c0_i32_8 : i32
    %10 = arith.extui %9 : i1 to i32
    %c0_i32_9 = arith.constant 0 : i32
    %11 = arith.cmpi ne, %10, %c0_i32_9 : i32
    scf.if %11 {
      %c0_10 = arith.constant 0 : index
      %c0_11 = arith.constant 0 : index
      %12 = vector.load %arg7[%c0_10, %c0_11] : memref<8x32xf32, #tpu.memory_space<vmem>>, vector<8x32xf32>
      %c0_12 = arith.constant 0 : index
      %c0_13 = arith.constant 0 : index
      %13 = vector.load %arg5[%c0_12, %c0_13] : memref<1x32xf32, #tpu.memory_space<vmem>>, vector<1x32xf32>
      %14 = vector.broadcast %13 : vector<1x32xf32> to vector<8x32xf32>
      %15 = arith.addf %12, %14 : vector<8x32xf32>
      %c0_14 = arith.constant 0 : index
      %c0_15 = arith.constant 0 : index
      %16 = vector.load %arg6[%c0_14, %c0_15] : memref<8x32xf32, #tpu.memory_space<vmem>>, vector<8x32xf32>
      tpu.vector_store %arg6[%c0_14, %c0_15], %15 {strides = array<i32>} : memref<8x32xf32, #tpu.memory_space<vmem>>, vector<8x32xf32>,
    } else {
    }
    return
  }
  func.func @transform_0(%arg0: i32, %arg1: i32, %arg2: i32) -> (i32, i32) {
    %c0_i32 = arith.constant 0 : i32
    return %arg0, %arg2 : i32, i32
  }
  func.func @transform_1(%arg0: i32, %arg1: i32, %arg2: i32) -> (i32, i32) {
    %c0_i32 = arith.constant 0 : i32
    return %arg2, %arg1 : i32, i32
  }
  func.func @transform_2(%arg0: i32, %arg1: i32, %arg2: i32) -> (i32, i32) {
    %c0_i32 = arith.constant 0 : i32
    %c0_i32_0 = arith.constant 0 : i32
    return %c0_i32, %arg1 : i32, i32
  }
  func.func @transform_3(%arg0: i32, %arg1: i32, %arg2: i32) -> (i32, i32) {
    %c0_i32 = arith.constant 0 : i32
    return %arg0, %arg1 : i32, i32
  }
}

module attributes {stable_mosaic.version = 11 : i64} {
  func.func @_layernorm_kernel(%arg0: i32, %arg1: memref<10x32xf32, #tpu.memory_space<vmem>>, %arg2: memref<1x32xf32, #tpu.memory_space<vmem>>, %arg3: memref<1x32xf32, #tpu.memory_space<vmem>>, %arg4: memref<10x32xf32, #tpu.memory_space<vmem>>) attributes {dimension_semantics = [#tpu.dimension_semantics<parallel>], iteration_bounds = array<i64: 1>, scalar_prefetch = 0 : i64, scratch_operands = 0 : i64, tpu.core_type = #tpu.core_type<tc>, window_params = [{transform_indices = @transform_0, window_bounds = array<i64: 10, 32>}, {pipeline_mode = #tpu.pipeline_mode<synchronous>, transform_indices = @transform_1, window_bounds = array<i64: 1, 32>}, {pipeline_mode = #tpu.pipeline_mode<synchronous>, transform_indices = @transform_2, window_bounds = array<i64: 1, 32>}, {transform_indices = @transform_3, window_bounds = array<i64: 10, 32>}]} {
    %c0 = arith.constant 0 : index
    %c0_0 = arith.constant 0 : index
    %0 = vector.load %arg1[%c0, %c0_0] : memref<10x32xf32, #tpu.memory_space<vmem>>, vector<10x32xf32>
    %cst = arith.constant dense<0.000000e+00> : vector<10xf32>
    %1 = vector.multi_reduction <add>, %0, %cst [1] : vector<10x32xf32> to vector<10xf32>
    %2 = vector.shape_cast %1 : vector<10xf32> to vector<10x1xf32>
    %cst_1 = arith.constant 3.200000e+01 : f32
    %3 = vector.broadcast %cst_1 : f32 to vector<10x1xf32>
    %4 = arith.divf %2, %3 : vector<10x1xf32>
    %5 = vector.broadcast %4 : vector<10x1xf32> to vector<10x32xf32>
    %6 = arith.subf %0, %5 : vector<10x32xf32>
    %7 = arith.mulf %6, %6 : vector<10x32xf32>
    %cst_2 = arith.constant dense<0.000000e+00> : vector<10xf32>
    %8 = vector.multi_reduction <add>, %7, %cst_2 [1] : vector<10x32xf32> to vector<10xf32>
    %9 = vector.shape_cast %8 : vector<10xf32> to vector<10x1xf32>
    %cst_3 = arith.constant 3.200000e+01 : f32
    %10 = vector.broadcast %cst_3 : f32 to vector<10x1xf32>
    %11 = arith.divf %9, %10 : vector<10x1xf32>
    %cst_4 = arith.constant 9.99999974E-6 : f32
    %12 = vector.broadcast %cst_4 : f32 to vector<10x1xf32>
    %13 = arith.addf %11, %12 : vector<10x1xf32>
    %14 = math.rsqrt %13 : vector<10x1xf32>
    %15 = vector.broadcast %14 : vector<10x1xf32> to vector<10x32xf32>
    %16 = arith.mulf %6, %15 : vector<10x32xf32>
    %c0_5 = arith.constant 0 : index
    %c0_6 = arith.constant 0 : index
    %17 = vector.load %arg2[%c0_5, %c0_6] : memref<1x32xf32, #tpu.memory_space<vmem>>, vector<1x32xf32>
    %18 = vector.broadcast %17 : vector<1x32xf32> to vector<10x32xf32>
    %19 = arith.mulf %16, %18 : vector<10x32xf32>
    %c0_7 = arith.constant 0 : index
    %c0_8 = arith.constant 0 : index
    %20 = vector.load %arg3[%c0_7, %c0_8] : memref<1x32xf32, #tpu.memory_space<vmem>>, vector<1x32xf32>
    %21 = vector.broadcast %20 : vector<1x32xf32> to vector<10x32xf32>
    %22 = arith.addf %19, %21 : vector<10x32xf32>
    %c0_9 = arith.constant 0 : index
    %c0_10 = arith.constant 0 : index
    %23 = vector.load %arg4[%c0_9, %c0_10] : memref<10x32xf32, #tpu.memory_space<vmem>>, vector<10x32xf32>
    tpu.vector_store %arg4[%c0_9, %c0_10], %22 {strides = array<i32>} : memref<10x32xf32, #tpu.memory_space<vmem>>, vector<10x32xf32>,
    return
  }
  func.func @transform_0(%arg0: i32) -> (i32, i32) {
    %c0_i32 = arith.constant 0 : i32
    %c0_i32_0 = arith.constant 0 : i32
    return %arg0, %c0_i32 : i32, i32
  }
  func.func @transform_1(%arg0: i32) -> (i32, i32) {
    %c0_i32 = arith.constant 0 : i32
    %c0_i32_0 = arith.constant 0 : i32
    %c0_i32_1 = arith.constant 0 : i32
    return %c0_i32, %c0_i32_0 : i32, i32
  }
  func.func @transform_2(%arg0: i32) -> (i32, i32) {
    %c0_i32 = arith.constant 0 : i32
    %c0_i32_0 = arith.constant 0 : i32
    %c0_i32_1 = arith.constant 0 : i32
    return %c0_i32, %c0_i32_0 : i32, i32
  }
  func.func @transform_3(%arg0: i32) -> (i32, i32) {
    %c0_i32 = arith.constant 0 : i32
    %c0_i32_0 = arith.constant 0 : i32
    return %arg0, %c0_i32 : i32, i32
  }
}

module attributes {stable_mosaic.version = 11 : i64} {
  func.func @_layernorm_kernel(%arg0: i32, %arg1: memref<10x32xf32, #tpu.memory_space<vmem>>, %arg2: memref<1x32xf32, #tpu.memory_space<vmem>>, %arg3: memref<1x32xf32, #tpu.memory_space<vmem>>, %arg4: memref<10x32xbf16, #tpu.memory_space<vmem>>) attributes {dimension_semantics = [#tpu.dimension_semantics<parallel>], iteration_bounds = array<i64: 1>, scalar_prefetch = 0 : i64, scratch_operands = 0 : i64, tpu.core_type = #tpu.core_type<tc>, window_params = [{transform_indices = @transform_0, window_bounds = array<i64: 10, 32>}, {pipeline_mode = #tpu.pipeline_mode<synchronous>, transform_indices = @transform_1, window_bounds = array<i64: 1, 32>}, {pipeline_mode = #tpu.pipeline_mode<synchronous>, transform_indices = @transform_2, window_bounds = array<i64: 1, 32>}, {transform_indices = @transform_3, window_bounds = array<i64: 10, 32>}]} {
    %c0 = arith.constant 0 : index
    %c0_0 = arith.constant 0 : index
    %0 = vector.load %arg1[%c0, %c0_0] : memref<10x32xf32, #tpu.memory_space<vmem>>, vector<10x32xf32>
    %cst = arith.constant dense<0.000000e+00> : vector<10xf32>
    %1 = vector.multi_reduction <add>, %0, %cst [1] : vector<10x32xf32> to vector<10xf32>
    %2 = vector.shape_cast %1 : vector<10xf32> to vector<10x1xf32>
    %cst_1 = arith.constant 3.200000e+01 : f32
    %3 = vector.broadcast %cst_1 : f32 to vector<10x1xf32>
    %4 = arith.divf %2, %3 : vector<10x1xf32>
    %5 = vector.broadcast %4 : vector<10x1xf32> to vector<10x32xf32>
    %6 = arith.subf %0, %5 : vector<10x32xf32>
    %7 = arith.mulf %6, %6 : vector<10x32xf32>
    %cst_2 = arith.constant dense<0.000000e+00> : vector<10xf32>
    %8 = vector.multi_reduction <add>, %7, %cst_2 [1] : vector<10x32xf32> to vector<10xf32>
    %9 = vector.shape_cast %8 : vector<10xf32> to vector<10x1xf32>
    %cst_3 = arith.constant 3.200000e+01 : f32
    %10 = vector.broadcast %cst_3 : f32 to vector<10x1xf32>
    %11 = arith.divf %9, %10 : vector<10x1xf32>
    %cst_4 = arith.constant 9.99999974E-6 : f32
    %12 = vector.broadcast %cst_4 : f32 to vector<10x1xf32>
    %13 = arith.addf %11, %12 : vector<10x1xf32>
    %14 = math.rsqrt %13 : vector<10x1xf32>
    %15 = vector.broadcast %14 : vector<10x1xf32> to vector<10x32xf32>
    %16 = arith.mulf %6, %15 : vector<10x32xf32>
    %c0_5 = arith.constant 0 : index
    %c0_6 = arith.constant 0 : index
    %17 = vector.load %arg2[%c0_5, %c0_6] : memref<1x32xf32, #tpu.memory_space<vmem>>, vector<1x32xf32>
    %18 = vector.broadcast %17 : vector<1x32xf32> to vector<10x32xf32>
    %19 = arith.mulf %16, %18 : vector<10x32xf32>
    %c0_7 = arith.constant 0 : index
    %c0_8 = arith.constant 0 : index
    %20 = vector.load %arg3[%c0_7, %c0_8] : memref<1x32xf32, #tpu.memory_space<vmem>>, vector<1x32xf32>
    %21 = vector.broadcast %20 : vector<1x32xf32> to vector<10x32xf32>
    %22 = arith.addf %19, %21 : vector<10x32xf32>
    %23 = arith.truncf %22 : vector<10x32xf32> to vector<10x32xbf16>
    %c0_9 = arith.constant 0 : index
    %c0_10 = arith.constant 0 : index
    %24 = vector.load %arg4[%c0_9, %c0_10] : memref<10x32xbf16, #tpu.memory_space<vmem>>, vector<10x32xbf16>
    tpu.vector_store %arg4[%c0_9, %c0_10], %23 {strides = array<i32>} : memref<10x32xbf16, #tpu.memory_space<vmem>>, vector<10x32xbf16>,
    return
  }
  func.func @transform_0(%arg0: i32) -> (i32, i32) {
    %c0_i32 = arith.constant 0 : i32
    %c0_i32_0 = arith.constant 0 : i32
    return %arg0, %c0_i32 : i32, i32
  }
  func.func @transform_1(%arg0: i32) -> (i32, i32) {
    %c0_i32 = arith.constant 0 : i32
    %c0_i32_0 = arith.constant 0 : i32
    %c0_i32_1 = arith.constant 0 : i32
    return %c0_i32, %c0_i32_0 : i32, i32
  }
  func.func @transform_2(%arg0: i32) -> (i32, i32) {
    %c0_i32 = arith.constant 0 : i32
    %c0_i32_0 = arith.constant 0 : i32
    %c0_i32_1 = arith.constant 0 : i32
    return %c0_i32, %c0_i32_0 : i32, i32
  }
  func.func @transform_3(%arg0: i32) -> (i32, i32) {
    %c0_i32 = arith.constant 0 : i32
    %c0_i32_0 = arith.constant 0 : i32
    return %arg0, %c0_i32 : i32, i32
  }
}

module attributes {stable_mosaic.version = 11 : i64} {
  func.func @_matmul_kernel(%arg0: i32, %arg1: i32, %arg2: i32, %arg3: memref<10x32xbf16, #tpu.memory_space<vmem>>, %arg4: memref<32x96xbf16, #tpu.memory_space<vmem>>, %arg5: memref<1x96xf32, #tpu.memory_space<vmem>>, %arg6: memref<10x96xbf16, #tpu.memory_space<vmem>>, %arg7: memref<10x96xf32, #tpu.memory_space<vmem>>) attributes {dimension_semantics = [#tpu.dimension_semantics<parallel>, #tpu.dimension_semantics<parallel>, #tpu.dimension_semantics<arbitrary>], iteration_bounds = array<i64: 1, 1, 1>, scalar_prefetch = 0 : i64, scratch_operands = 1 : i64, tpu.core_type = #tpu.core_type<tc>, window_params = [{transform_indices = @transform_0, window_bounds = array<i64: 10, 32>}, {transform_indices = @transform_1, window_bounds = array<i64: 32, 96>}, {transform_indices = @transform_2, window_bounds = array<i64: 1, 96>}, {transform_indices = @transform_3, window_bounds = array<i64: 10, 96>}]} {
    %c0_i32 = arith.constant 0 : i32
    %0 = arith.cmpi eq, %arg2, %c0_i32 : i32
    %1 = arith.extui %0 : i1 to i32
    %c0_i32_0 = arith.constant 0 : i32
    %2 = arith.cmpi ne, %1, %c0_i32_0 : i32
    scf.if %2 {
      %cst_10 = arith.constant 0.000000e+00 : f32
      %12 = vector.broadcast %cst_10 : f32 to vector<10x96xf32>
      %c0_11 = arith.constant 0 : index
      %c0_12 = arith.constant 0 : index
      %13 = vector.load %arg7[%c0_11, %c0_12] : memref<10x96xf32, #tpu.memory_space<vmem>>, vector<10x96xf32>
      tpu.vector_store %arg7[%c0_11, %c0_12], %12 {strides = array<i32>} : memref<10x96xf32, #tpu.memory_space<vmem>>, vector<10x96xf32>,
    } else {
    }
    %c0 = arith.constant 0 : index
    %c0_1 = arith.constant 0 : index
    %3 = vector.load %arg7[%c0, %c0_1] : memref<10x96xf32, #tpu.memory_space<vmem>>, vector<10x96xf32>
    %c0_2 = arith.constant 0 : index
    %c0_3 = arith.constant 0 : index
    %4 = vector.load %arg3[%c0_2, %c0_3] : memref<10x32xbf16, #tpu.memory_space<vmem>>, vector<10x32xbf16>
    %c0_4 = arith.constant 0 : index
    %c0_5 = arith.constant 0 : index
    %5 = vector.load %arg4[%c0_4, %c0_5] : memref<32x96xbf16, #tpu.memory_space<vmem>>, vector<32x96xbf16>
    %cst = arith.constant dense<0.000000e+00> : vector<10x96xf32>
    %6 = tpu.matmul %4, %5, %cst {dimension_numbers = #tpu.dot_dimension_numbers<[1], [0], [0], [1], [0, 0, 1, 1], [], []>} : vector<10x32xbf16>, vector<32x96xbf16>, vector<10x96xf32> -> vector<10x96xf32>
    %7 = arith.addf %3, %6 : vector<10x96xf32>
    %c0_6 = arith.constant 0 : index
    %c0_7 = arith.constant 0 : index
    %8 = vector.load %arg7[%c0_6, %c0_7] : memref<10x96xf32, #tpu.memory_space<vmem>>, vector<10x96xf32>
    tpu.vector_store %arg7[%c0_6, %c0_7], %7 {strides = array<i32>} : memref<10x96xf32, #tpu.memory_space<vmem>>, vector<10x96xf32>,
    %c0_i32_8 = arith.constant 0 : i32
    %9 = arith.cmpi eq, %arg2, %c0_i32_8 : i32
    %10 = arith.extui %9 : i1 to i32
    %c0_i32_9 = arith.constant 0 : i32
    %11 = arith.cmpi ne, %10, %c0_i32_9 : i32
    scf.if %11 {
      %c0_10 = arith.constant 0 : index
      %c0_11 = arith.constant 0 : index
      %12 = vector.load %arg7[%c0_10, %c0_11] : memref<10x96xf32, #tpu.memory_space<vmem>>, vector<10x96xf32>
      %c0_12 = arith.constant 0 : index
      %c0_13 = arith.constant 0 : index
      %13 = vector.load %arg5[%c0_12, %c0_13] : memref<1x96xf32, #tpu.memory_space<vmem>>, vector<1x96xf32>
      %14 = vector.broadcast %13 : vector<1x96xf32> to vector<10x96xf32>
      %15 = arith.addf %12, %14 : vector<10x96xf32>
      %16 = arith.truncf %15 : vector<10x96xf32> to vector<10x96xbf16>
      %c0_14 = arith.constant 0 : index
      %c0_15 = arith.constant 0 : index
      %17 = vector.load %arg6[%c0_14, %c0_15] : memref<10x96xbf16, #tpu.memory_space<vmem>>, vector<10x96xbf16>
      tpu.vector_store %arg6[%c0_14, %c0_15], %16 {strides = array<i32>} : memref<10x96xbf16, #tpu.memory_space<vmem>>, vector<10x96xbf16>,
    } else {
    }
    return
  }
  func.func @transform_0(%arg0: i32, %arg1: i32, %arg2: i32) -> (i32, i32) {
    %c0_i32 = arith.constant 0 : i32
    return %arg0, %arg2 : i32, i32
  }
  func.func @transform_1(%arg0: i32, %arg1: i32, %arg2: i32) -> (i32, i32) {
    %c0_i32 = arith.constant 0 : i32
    return %arg2, %arg1 : i32, i32
  }
  func.func @transform_2(%arg0: i32, %arg1: i32, %arg2: i32) -> (i32, i32) {
    %c0_i32 = arith.constant 0 : i32
    %c0_i32_0 = arith.constant 0 : i32
    return %c0_i32, %arg1 : i32, i32
  }
  func.func @transform_3(%arg0: i32, %arg1: i32, %arg2: i32) -> (i32, i32) {
    %c0_i32 = arith.constant 0 : i32
    return %arg0, %arg1 : i32, i32
  }
}

module attributes {stable_mosaic.version = 11 : i64} {
  func.func @_attention_kernel(%arg0: i32, %arg1: memref<1x5x8xbf16, #tpu.memory_space<vmem>>, %arg2: memref<1x5x8xbf16, #tpu.memory_space<vmem>>, %arg3: memref<1x5x8xbf16, #tpu.memory_space<vmem>>, %arg4: memref<1x5x8xbf16, #tpu.memory_space<vmem>>) attributes {dimension_semantics = [#tpu.dimension_semantics<parallel>], iteration_bounds = array<i64: 8>, scalar_prefetch = 0 : i64, scratch_operands = 0 : i64, tpu.core_type = #tpu.core_type<tc>, window_params = [{transform_indices = @transform_0, window_bounds = array<i64: 1, 5, 8>}, {transform_indices = @transform_1, window_bounds = array<i64: 1, 5, 8>}, {transform_indices = @transform_2, window_bounds = array<i64: 1, 5, 8>}, {transform_indices = @transform_3, window_bounds = array<i64: 1, 5, 8>}]} {
    %c0 = arith.constant 0 : index
    %c0_0 = arith.constant 0 : index
    %c0_1 = arith.constant 0 : index
    %0 = vector.load %arg1[%c0, %c0_0, %c0_1] : memref<1x5x8xbf16, #tpu.memory_space<vmem>>, vector<1x5x8xbf16>
    %1 = vector.shape_cast %0 : vector<1x5x8xbf16> to vector<5x8xbf16>
    %c0_2 = arith.constant 0 : index
    %c0_3 = arith.constant 0 : index
    %c0_4 = arith.constant 0 : index
    %2 = vector.load %arg2[%c0_2, %c0_3, %c0_4] : memref<1x5x8xbf16, #tpu.memory_space<vmem>>, vector<1x5x8xbf16>
    %3 = vector.shape_cast %2 : vector<1x5x8xbf16> to vector<5x8xbf16>
    %c0_5 = arith.constant 0 : index
    %c0_6 = arith.constant 0 : index
    %c0_7 = arith.constant 0 : index
    %4 = vector.load %arg3[%c0_5, %c0_6, %c0_7] : memref<1x5x8xbf16, #tpu.memory_space<vmem>>, vector<1x5x8xbf16>
    %5 = vector.shape_cast %4 : vector<1x5x8xbf16> to vector<5x8xbf16>
    %cst = arith.constant dense<0.000000e+00> : vector<5x5xf32>
    %6 = tpu.matmul %1, %3, %cst {dimension_numbers = #tpu.dot_dimension_numbers<[1], [1], [0], [0], [0, 0, 1, 0], [], []>} : vector<5x8xbf16>, vector<5x8xbf16>, vector<5x5xf32> -> vector<5x5xf32>
    %cst_8 = arith.constant 0.353553385 : f32
    %7 = vector.broadcast %cst_8 : f32 to vector<5x5xf32>
    %8 = arith.mulf %6, %7 : vector<5x5xf32>
    %cst_9 = arith.constant dense<0xFF800000> : vector<5xf32>
    %9 = vector.multi_reduction <maximumf>, %8, %cst_9 [1] : vector<5x5xf32> to vector<5xf32>
    %10 = vector.shape_cast %9 : vector<5xf32> to vector<5x1xf32>
    %11 = vector.broadcast %10 : vector<5x1xf32> to vector<5x5xf32>
    %12 = arith.subf %8, %11 : vector<5x5xf32>
    %13 = math.exp %12 : vector<5x5xf32>
    %cst_10 = arith.constant dense<0.000000e+00> : vector<5xf32>
    %14 = vector.multi_reduction <add>, %13, %cst_10 [1] : vector<5x5xf32> to vector<5xf32>
    %15 = vector.shape_cast %14 : vector<5xf32> to vector<5x1xf32>
    %16 = tpu.reciprocal %15 {approx = true} : vector<5x1xf32> -> vector<5x1xf32>
    %17 = arith.truncf %13 : vector<5x5xf32> to vector<5x5xbf16>
    %cst_11 = arith.constant dense<0.000000e+00> : vector<5x8xf32>
    %18 = tpu.matmul %17, %5, %cst_11 {dimension_numbers = #tpu.dot_dimension_numbers<[1], [0], [0], [1], [0, 0, 1, 1], [], []>} : vector<5x5xbf16>, vector<5x8xbf16>, vector<5x8xf32> -> vector<5x8xf32>
    %19 = vector.broadcast %16 : vector<5x1xf32> to vector<5x8xf32>
    %20 = arith.mulf %18, %19 : vector<5x8xf32>
    %21 = arith.truncf %20 : vector<5x8xf32> to vector<5x8xbf16>
    %c0_12 = arith.constant 0 : index
    %c0_13 = arith.constant 0 : index
    %c0_14 = arith.constant 0 : index
    %22 = vector.load %arg4[%c0_12, %c0_13, %c0_14] : memref<1x5x8xbf16, #tpu.memory_space<vmem>>, vector<1x5x8xbf16>
    %23 = vector.shape_cast %22 : vector<1x5x8xbf16> to vector<5x8xbf16>
    %24 = vector.shape_cast %21 : vector<5x8xbf16> to vector<1x5x8xbf16>
    tpu.vector_store %arg4[%c0_12, %c0_13, %c0_14], %24 {strides = array<i32>} : memref<1x5x8xbf16, #tpu.memory_space<vmem>>, vector<1x5x8xbf16>,
    return
  }
  func.func @transform_0(%arg0: i32) -> (i32, i32, i32) {
    %c0_i32 = arith.constant 0 : i32
    %c0_i32_0 = arith.constant 0 : i32
    %c0_i32_1 = arith.constant 0 : i32
    return %arg0, %c0_i32, %c0_i32_0 : i32, i32, i32
  }
  func.func @transform_1(%arg0: i32) -> (i32, i32, i32) {
    %c0_i32 = arith.constant 0 : i32
    %c0_i32_0 = arith.constant 0 : i32
    %c0_i32_1 = arith.constant 0 : i32
    return %arg0, %c0_i32, %c0_i32_0 : i32, i32, i32
  }
  func.func @transform_2(%arg0: i32) -> (i32, i32, i32) {
    %c0_i32 = arith.constant 0 : i32
    %c0_i32_0 = arith.constant 0 : i32
    %c0_i32_1 = arith.constant 0 : i32
    return %arg0, %c0_i32, %c0_i32_0 : i32, i32, i32
  }
  func.func @transform_3(%arg0: i32) -> (i32, i32, i32) {
    %c0_i32 = arith.constant 0 : i32
    %c0_i32_0 = arith.constant 0 : i32
    %c0_i32_1 = arith.constant 0 : i32
    return %arg0, %c0_i32, %c0_i32_0 : i32, i32, i32
  }
}

module attributes {stable_mosaic.version = 11 : i64} {
  func.func @_matmul_kernel(%arg0: i32, %arg1: i32, %arg2: i32, %arg3: memref<10x32xbf16, #tpu.memory_space<vmem>>, %arg4: memref<32x32xbf16, #tpu.memory_space<vmem>>, %arg5: memref<1x32xf32, #tpu.memory_space<vmem>>, %arg6: memref<10x32xf32, #tpu.memory_space<vmem>>, %arg7: memref<10x32xf32, #tpu.memory_space<vmem>>, %arg8: memref<10x32xf32, #tpu.memory_space<vmem>>) attributes {dimension_semantics = [#tpu.dimension_semantics<parallel>, #tpu.dimension_semantics<parallel>, #tpu.dimension_semantics<arbitrary>], iteration_bounds = array<i64: 1, 1, 1>, scalar_prefetch = 0 : i64, scratch_operands = 1 : i64, tpu.core_type = #tpu.core_type<tc>, window_params = [{transform_indices = @transform_0, window_bounds = array<i64: 10, 32>}, {transform_indices = @transform_1, window_bounds = array<i64: 32, 32>}, {transform_indices = @transform_2, window_bounds = array<i64: 1, 32>}, {transform_indices = @transform_3, window_bounds = array<i64: 10, 32>}, {transform_indices = @transform_4, window_bounds = array<i64: 10, 32>}]} {
    %c0_i32 = arith.constant 0 : i32
    %0 = arith.cmpi eq, %arg2, %c0_i32 : i32
    %1 = arith.extui %0 : i1 to i32
    %c0_i32_0 = arith.constant 0 : i32
    %2 = arith.cmpi ne, %1, %c0_i32_0 : i32
    scf.if %2 {
      %cst_10 = arith.constant 0.000000e+00 : f32
      %12 = vector.broadcast %cst_10 : f32 to vector<10x32xf32>
      %c0_11 = arith.constant 0 : index
      %c0_12 = arith.constant 0 : index
      %13 = vector.load %arg8[%c0_11, %c0_12] : memref<10x32xf32, #tpu.memory_space<vmem>>, vector<10x32xf32>
      tpu.vector_store %arg8[%c0_11, %c0_12], %12 {strides = array<i32>} : memref<10x32xf32, #tpu.memory_space<vmem>>, vector<10x32xf32>,
    } else {
    }
    %c0 = arith.constant 0 : index
    %c0_1 = arith.constant 0 : index
    %3 = vector.load %arg8[%c0, %c0_1] : memref<10x32xf32, #tpu.memory_space<vmem>>, vector<10x32xf32>
    %c0_2 = arith.constant 0 : index
    %c0_3 = arith.constant 0 : index
    %4 = vector.load %arg3[%c0_2, %c0_3] : memref<10x32xbf16, #tpu.memory_space<vmem>>, vector<10x32xbf16>
    %c0_4 = arith.constant 0 : index
    %c0_5 = arith.constant 0 : index
    %5 = vector.load %arg4[%c0_4, %c0_5] : memref<32x32xbf16, #tpu.memory_space<vmem>>, vector<32x32xbf16>
    %cst = arith.constant dense<0.000000e+00> : vector<10x32xf32>
    %6 = tpu.matmul %4, %5, %cst {dimension_numbers = #tpu.dot_dimension_numbers<[1], [0], [0], [1], [0, 0, 1, 1], [], []>} : vector<10x32xbf16>, vector<32x32xbf16>, vector<10x32xf32> -> vector<10x32xf32>
    %7 = arith.addf %3, %6 : vector<10x32xf32>
    %c0_6 = arith.constant 0 : index
    %c0_7 = arith.constant 0 : index
    %8 = vector.load %arg8[%c0_6, %c0_7] : memref<10x32xf32, #tpu.memory_space<vmem>>, vector<10x32xf32>
    tpu.vector_store %arg8[%c0_6, %c0_7], %7 {strides = array<i32>} : memref<10x32xf32, #tpu.memory_space<vmem>>, vector<10x32xf32>,
    %c0_i32_8 = arith.constant 0 : i32
    %9 = arith.cmpi eq, %arg2, %c0_i32_8 : i32
    %10 = arith.extui %9 : i1 to i32
    %c0_i32_9 = arith.constant 0 : i32
    %11 = arith.cmpi ne, %10, %c0_i32_9 : i32
    scf.if %11 {
      %c0_10 = arith.constant 0 : index
      %c0_11 = arith.constant 0 : index
      %12 = vector.load %arg8[%c0_10, %c0_11] : memref<10x32xf32, #tpu.memory_space<vmem>>, vector<10x32xf32>
      %c0_12 = arith.constant 0 : index
      %c0_13 = arith.constant 0 : index
      %13 = vector.load %arg5[%c0_12, %c0_13] : memref<1x32xf32, #tpu.memory_space<vmem>>, vector<1x32xf32>
      %14 = vector.broadcast %13 : vector<1x32xf32> to vector<10x32xf32>
      %15 = arith.addf %12, %14 : vector<10x32xf32>
      %c0_14 = arith.constant 0 : index
      %c0_15 = arith.constant 0 : index
      %16 = vector.load %arg6[%c0_14, %c0_15] : memref<10x32xf32, #tpu.memory_space<vmem>>, vector<10x32xf32>
      %17 = arith.addf %15, %16 : vector<10x32xf32>
      %c0_16 = arith.constant 0 : index
      %c0_17 = arith.constant 0 : index
      %18 = vector.load %arg7[%c0_16, %c0_17] : memref<10x32xf32, #tpu.memory_space<vmem>>, vector<10x32xf32>
      tpu.vector_store %arg7[%c0_16, %c0_17], %17 {strides = array<i32>} : memref<10x32xf32, #tpu.memory_space<vmem>>, vector<10x32xf32>,
    } else {
    }
    return
  }
  func.func @transform_0(%arg0: i32, %arg1: i32, %arg2: i32) -> (i32, i32) {
    %c0_i32 = arith.constant 0 : i32
    return %arg0, %arg2 : i32, i32
  }
  func.func @transform_1(%arg0: i32, %arg1: i32, %arg2: i32) -> (i32, i32) {
    %c0_i32 = arith.constant 0 : i32
    return %arg2, %arg1 : i32, i32
  }
  func.func @transform_2(%arg0: i32, %arg1: i32, %arg2: i32) -> (i32, i32) {
    %c0_i32 = arith.constant 0 : i32
    %c0_i32_0 = arith.constant 0 : i32
    return %c0_i32, %arg1 : i32, i32
  }
  func.func @transform_3(%arg0: i32, %arg1: i32, %arg2: i32) -> (i32, i32) {
    %c0_i32 = arith.constant 0 : i32
    return %arg0, %arg1 : i32, i32
  }
  func.func @transform_4(%arg0: i32, %arg1: i32, %arg2: i32) -> (i32, i32) {
    %c0_i32 = arith.constant 0 : i32
    return %arg0, %arg1 : i32, i32
  }
}

module attributes {stable_mosaic.version = 11 : i64} {
  func.func @_matmul_kernel(%arg0: i32, %arg1: i32, %arg2: i32, %arg3: memref<10x128xbf16, #tpu.memory_space<vmem>>, %arg4: memref<128x32xbf16, #tpu.memory_space<vmem>>, %arg5: memref<1x32xf32, #tpu.memory_space<vmem>>, %arg6: memref<10x32xf32, #tpu.memory_space<vmem>>, %arg7: memref<10x32xf32, #tpu.memory_space<vmem>>, %arg8: memref<10x32xf32, #tpu.memory_space<vmem>>) attributes {dimension_semantics = [#tpu.dimension_semantics<parallel>, #tpu.dimension_semantics<parallel>, #tpu.dimension_semantics<arbitrary>], iteration_bounds = array<i64: 1, 1, 1>, scalar_prefetch = 0 : i64, scratch_operands = 1 : i64, tpu.core_type = #tpu.core_type<tc>, window_params = [{transform_indices = @transform_0, window_bounds = array<i64: 10, 128>}, {transform_indices = @transform_1, window_bounds = array<i64: 128, 32>}, {transform_indices = @transform_2, window_bounds = array<i64: 1, 32>}, {transform_indices = @transform_3, window_bounds = array<i64: 10, 32>}, {transform_indices = @transform_4, window_bounds = array<i64: 10, 32>}]} {
    %c0_i32 = arith.constant 0 : i32
    %0 = arith.cmpi eq, %arg2, %c0_i32 : i32
    %1 = arith.extui %0 : i1 to i32
    %c0_i32_0 = arith.constant 0 : i32
    %2 = arith.cmpi ne, %1, %c0_i32_0 : i32
    scf.if %2 {
      %cst_10 = arith.constant 0.000000e+00 : f32
      %12 = vector.broadcast %cst_10 : f32 to vector<10x32xf32>
      %c0_11 = arith.constant 0 : index
      %c0_12 = arith.constant 0 : index
      %13 = vector.load %arg8[%c0_11, %c0_12] : memref<10x32xf32, #tpu.memory_space<vmem>>, vector<10x32xf32>
      tpu.vector_store %arg8[%c0_11, %c0_12], %12 {strides = array<i32>} : memref<10x32xf32, #tpu.memory_space<vmem>>, vector<10x32xf32>,
    } else {
    }
    %c0 = arith.constant 0 : index
    %c0_1 = arith.constant 0 : index
    %3 = vector.load %arg8[%c0, %c0_1] : memref<10x32xf32, #tpu.memory_space<vmem>>, vector<10x32xf32>
    %c0_2 = arith.constant 0 : index
    %c0_3 = arith.constant 0 : index
    %4 = vector.load %arg3[%c0_2, %c0_3] : memref<10x128xbf16, #tpu.memory_space<vmem>>, vector<10x128xbf16>
    %c0_4 = arith.constant 0 : index
    %c0_5 = arith.constant 0 : index
    %5 = vector.load %arg4[%c0_4, %c0_5] : memref<128x32xbf16, #tpu.memory_space<vmem>>, vector<128x32xbf16>
    %cst = arith.constant dense<0.000000e+00> : vector<10x32xf32>
    %6 = tpu.matmul %4, %5, %cst {dimension_numbers = #tpu.dot_dimension_numbers<[1], [0], [0], [1], [0, 0, 1, 1], [], []>} : vector<10x128xbf16>, vector<128x32xbf16>, vector<10x32xf32> -> vector<10x32xf32>
    %7 = arith.addf %3, %6 : vector<10x32xf32>
    %c0_6 = arith.constant 0 : index
    %c0_7 = arith.constant 0 : index
    %8 = vector.load %arg8[%c0_6, %c0_7] : memref<10x32xf32, #tpu.memory_space<vmem>>, vector<10x32xf32>
    tpu.vector_store %arg8[%c0_6, %c0_7], %7 {strides = array<i32>} : memref<10x32xf32, #tpu.memory_space<vmem>>, vector<10x32xf32>,
    %c0_i32_8 = arith.constant 0 : i32
    %9 = arith.cmpi eq, %arg2, %c0_i32_8 : i32
    %10 = arith.extui %9 : i1 to i32
    %c0_i32_9 = arith.constant 0 : i32
    %11 = arith.cmpi ne, %10, %c0_i32_9 : i32
    scf.if %11 {
      %c0_10 = arith.constant 0 : index
      %c0_11 = arith.constant 0 : index
      %12 = vector.load %arg8[%c0_10, %c0_11] : memref<10x32xf32, #tpu.memory_space<vmem>>, vector<10x32xf32>
      %c0_12 = arith.constant 0 : index
      %c0_13 = arith.constant 0 : index
      %13 = vector.load %arg5[%c0_12, %c0_13] : memref<1x32xf32, #tpu.memory_space<vmem>>, vector<1x32xf32>
      %14 = vector.broadcast %13 : vector<1x32xf32> to vector<10x32xf32>
      %15 = arith.addf %12, %14 : vector<10x32xf32>
      %c0_14 = arith.constant 0 : index
      %c0_15 = arith.constant 0 : index
      %16 = vector.load %arg6[%c0_14, %c0_15] : memref<10x32xf32, #tpu.memory_space<vmem>>, vector<10x32xf32>
      %17 = arith.addf %15, %16 : vector<10x32xf32>
      %c0_16 = arith.constant 0 : index
      %c0_17 = arith.constant 0 : index
      %18 = vector.load %arg7[%c0_16, %c0_17] : memref<10x32xf32, #tpu.memory_space<vmem>>, vector<10x32xf32>
      tpu.vector_store %arg7[%c0_16, %c0_17], %17 {strides = array<i32>} : memref<10x32xf32, #tpu.memory_space<vmem>>, vector<10x32xf32>,
    } else {
    }
    return
  }
  func.func @transform_0(%arg0: i32, %arg1: i32, %arg2: i32) -> (i32, i32) {
    %c0_i32 = arith.constant 0 : i32
    return %arg0, %arg2 : i32, i32
  }
  func.func @transform_1(%arg0: i32, %arg1: i32, %arg2: i32) -> (i32, i32) {
    %c0_i32 = arith.constant 0 : i32
    return %arg2, %arg1 : i32, i32
  }
  func.func @transform_2(%arg0: i32, %arg1: i32, %arg2: i32) -> (i32, i32) {
    %c0_i32 = arith.constant 0 : i32
    %c0_i32_0 = arith.constant 0 : i32
    return %c0_i32, %arg1 : i32, i32
  }
  func.func @transform_3(%arg0: i32, %arg1: i32, %arg2: i32) -> (i32, i32) {
    %c0_i32 = arith.constant 0 : i32
    return %arg0, %arg1 : i32, i32
  }
  func.func @transform_4(%arg0: i32, %arg1: i32, %arg2: i32) -> (i32, i32) {
    %c0_i32 = arith.constant 0 : i32
    return %arg0, %arg1 : i32, i32
  }
}

module attributes {stable_mosaic.version = 11 : i64} {
  func.func @_matmul_kernel(%arg0: i32, %arg1: i32, %arg2: i32, %arg3: memref<10x32xbf16, #tpu.memory_space<vmem>>, %arg4: memref<32x128xbf16, #tpu.memory_space<vmem>>, %arg5: memref<1x128xf32, #tpu.memory_space<vmem>>, %arg6: memref<10x128xbf16, #tpu.memory_space<vmem>>, %arg7: memref<10x128xf32, #tpu.memory_space<vmem>>) attributes {dimension_semantics = [#tpu.dimension_semantics<parallel>, #tpu.dimension_semantics<parallel>, #tpu.dimension_semantics<arbitrary>], iteration_bounds = array<i64: 1, 1, 1>, scalar_prefetch = 0 : i64, scratch_operands = 1 : i64, tpu.core_type = #tpu.core_type<tc>, window_params = [{transform_indices = @transform_0, window_bounds = array<i64: 10, 32>}, {transform_indices = @transform_1, window_bounds = array<i64: 32, 128>}, {transform_indices = @transform_2, window_bounds = array<i64: 1, 128>}, {transform_indices = @transform_3, window_bounds = array<i64: 10, 128>}]} {
    %c0_i32 = arith.constant 0 : i32
    %0 = arith.cmpi eq, %arg2, %c0_i32 : i32
    %1 = arith.extui %0 : i1 to i32
    %c0_i32_0 = arith.constant 0 : i32
    %2 = arith.cmpi ne, %1, %c0_i32_0 : i32
    scf.if %2 {
      %cst_10 = arith.constant 0.000000e+00 : f32
      %12 = vector.broadcast %cst_10 : f32 to vector<10x128xf32>
      %c0_11 = arith.constant 0 : index
      %c0_12 = arith.constant 0 : index
      %13 = vector.load %arg7[%c0_11, %c0_12] : memref<10x128xf32, #tpu.memory_space<vmem>>, vector<10x128xf32>
      tpu.vector_store %arg7[%c0_11, %c0_12], %12 {strides = array<i32>} : memref<10x128xf32, #tpu.memory_space<vmem>>, vector<10x128xf32>,
    } else {
    }
    %c0 = arith.constant 0 : index
    %c0_1 = arith.constant 0 : index
    %3 = vector.load %arg7[%c0, %c0_1] : memref<10x128xf32, #tpu.memory_space<vmem>>, vector<10x128xf32>
    %c0_2 = arith.constant 0 : index
    %c0_3 = arith.constant 0 : index
    %4 = vector.load %arg3[%c0_2, %c0_3] : memref<10x32xbf16, #tpu.memory_space<vmem>>, vector<10x32xbf16>
    %c0_4 = arith.constant 0 : index
    %c0_5 = arith.constant 0 : index
    %5 = vector.load %arg4[%c0_4, %c0_5] : memref<32x128xbf16, #tpu.memory_space<vmem>>, vector<32x128xbf16>
    %cst = arith.constant dense<0.000000e+00> : vector<10x128xf32>
    %6 = tpu.matmul %4, %5, %cst {dimension_numbers = #tpu.dot_dimension_numbers<[1], [0], [0], [1], [0, 0, 1, 1], [], []>} : vector<10x32xbf16>, vector<32x128xbf16>, vector<10x128xf32> -> vector<10x128xf32>
    %7 = arith.addf %3, %6 : vector<10x128xf32>
    %c0_6 = arith.constant 0 : index
    %c0_7 = arith.constant 0 : index
    %8 = vector.load %arg7[%c0_6, %c0_7] : memref<10x128xf32, #tpu.memory_space<vmem>>, vector<10x128xf32>
    tpu.vector_store %arg7[%c0_6, %c0_7], %7 {strides = array<i32>} : memref<10x128xf32, #tpu.memory_space<vmem>>, vector<10x128xf32>,
    %c0_i32_8 = arith.constant 0 : i32
    %9 = arith.cmpi eq, %arg2, %c0_i32_8 : i32
    %10 = arith.extui %9 : i1 to i32
    %c0_i32_9 = arith.constant 0 : i32
    %11 = arith.cmpi ne, %10, %c0_i32_9 : i32
    scf.if %11 {
      %c0_10 = arith.constant 0 : index
      %c0_11 = arith.constant 0 : index
      %12 = vector.load %arg7[%c0_10, %c0_11] : memref<10x128xf32, #tpu.memory_space<vmem>>, vector<10x128xf32>
      %c0_12 = arith.constant 0 : index
      %c0_13 = arith.constant 0 : index
      %13 = vector.load %arg5[%c0_12, %c0_13] : memref<1x128xf32, #tpu.memory_space<vmem>>, vector<1x128xf32>
      %14 = vector.broadcast %13 : vector<1x128xf32> to vector<10x128xf32>
      %15 = arith.addf %12, %14 : vector<10x128xf32>
      %cst_14 = arith.constant 0.707106769 : f32
      %16 = vector.broadcast %cst_14 : f32 to vector<10x128xf32>
      %17 = arith.mulf %15, %16 : vector<10x128xf32>
      %18 = math.absf %17 : vector<10x128xf32>
      %cst_15 = arith.constant 0.327591091 : f32
      %19 = vector.broadcast %cst_15 : f32 to vector<10x128xf32>
      %20 = arith.mulf %19, %18 : vector<10x128xf32>
      %cst_16 = arith.constant 1.000000e+00 : f32
      %21 = vector.broadcast %cst_16 : f32 to vector<10x128xf32>
      %22 = arith.addf %21, %20 : vector<10x128xf32>
      %23 = tpu.reciprocal %22 {approx = true} : vector<10x128xf32> -> vector<10x128xf32>
      %cst_17 = arith.constant 1.06140542 : f32
      %24 = vector.broadcast %cst_17 : f32 to vector<10x128xf32>
      %25 = arith.mulf %24, %23 : vector<10x128xf32>
      %cst_18 = arith.constant -1.45315206 : f32
      %26 = vector.broadcast %cst_18 : f32 to vector<10x128xf32>
      %27 = arith.addf %25, %26 : vector<10x128xf32>
      %28 = arith.mulf %27, %23 : vector<10x128xf32>
      %cst_19 = arith.constant 1.42141378 : f32
      %29 = vector.broadcast %cst_19 : f32 to vector<10x128xf32>
      %30 = arith.addf %28, %29 : vector<10x128xf32>
      %31 = arith.mulf %30, %23 : vector<10x128xf32>
      %cst_20 = arith.constant -0.284496725 : f32
      %32 = vector.broadcast %cst_20 : f32 to vector<10x128xf32>
      %33 = arith.addf %31, %32 : vector<10x128xf32>
      %34 = arith.mulf %33, %23 : vector<10x128xf32>
      %cst_21 = arith.constant 0.254829586 : f32
      %35 = vector.broadcast %cst_21 : f32 to vector<10x128xf32>
      %36 = arith.addf %34, %35 : vector<10x128xf32>
      %37 = arith.mulf %36, %23 : vector<10x128xf32>
      %cst_22 = arith.constant 0.000000e+00 : f32
      %38 = vector.broadcast %cst_22 : f32 to vector<10x128xf32>
      %39 = arith.subf %38, %18 : vector<10x128xf32>
      %40 = arith.mulf %39, %18 : vector<10x128xf32>
      %41 = math.exp %40 : vector<10x128xf32>
      %42 = arith.mulf %37, %41 : vector<10x128xf32>
      %cst_23 = arith.constant 1.000000e+00 : f32
      %43 = vector.broadcast %cst_23 : f32 to vector<10x128xf32>
      %44 = arith.subf %43, %42 : vector<10x128xf32>
      %cst_24 = arith.constant 0.000000e+00 : f32
      %45 = vector.broadcast %cst_24 : f32 to vector<10x128xf32>
      %46 = arith.cmpf oge, %17, %45 : vector<10x128xf32>
      %cst_25 = arith.constant 0.000000e+00 : f32
      %47 = vector.broadcast %cst_25 : f32 to vector<10x128xf32>
      %48 = arith.subf %47, %44 : vector<10x128xf32>
      %49 = arith.select %46, %44, %48 : vector<10x128xi1>, vector<10x128xf32>
      %cst_26 = arith.constant 5.000000e-01 : f32
      %50 = vector.broadcast %cst_26 : f32 to vector<10x128xf32>
      %51 = arith.mulf %50, %15 : vector<10x128xf32>
      %cst_27 = arith.constant 1.000000e+00 : f32
      %52 = vector.broadcast %cst_27 : f32 to vector<10x128xf32>
      %53 = arith.addf %52, %49 : vector<10x128xf32>
      %54 = arith.mulf %51, %53 : vector<10x128xf32>
      %55 = arith.truncf %54 : vector<10x128xf32> to vector<10x128xbf16>
      %c0_28 = arith.constant 0 : index
      %c0_29 = arith.constant 0 : index
      %56 = vector.load %arg6[%c0_28, %c0_29] : memref<10x128xbf16, #tpu.memory_space<vmem>>, vector<10x128xbf16>
      tpu.vector_store %arg6[%c0_28, %c0_29], %55 {strides = array<i32>} : memref<10x128xbf16, #tpu.memory_space<vmem>>, vector<10x128xbf16>,
    } else {
    }
    return
  }
  func.func @transform_0(%arg0: i32, %arg1: i32, %arg2: i32) -> (i32, i32) {
    %c0_i32 = arith.constant 0 : i32
    return %arg0, %arg2 : i32, i32
  }
  func.func @transform_1(%arg0: i32, %arg1: i32, %arg2: i32) -> (i32, i32) {
    %c0_i32 = arith.constant 0 : i32
    return %arg2, %arg1 : i32, i32
  }
  func.func @transform_2(%arg0: i32, %arg1: i32, %arg2: i32) -> (i32, i32) {
    %c0_i32 = arith.constant 0 : i32
    %c0_i32_0 = arith.constant 0 : i32
    return %c0_i32, %arg1 : i32, i32
  }
  func.func @transform_3(%arg0: i32, %arg1: i32, %arg2: i32) -> (i32, i32) {
    %c0_i32 = arith.constant 0 : i32
    return %arg0, %arg1 : i32, i32
  }
}

module attributes {stable_mosaic.version = 11 : i64} {
  func.func @_matmul_kernel(%arg0: i32, %arg1: i32, %arg2: i32, %arg3: memref<10x32xbf16, #tpu.memory_space<vmem>>, %arg4: memref<32x32xbf16, #tpu.memory_space<vmem>>, %arg5: memref<1x32xf32, #tpu.memory_space<vmem>>, %arg6: memref<10x32xbf16, #tpu.memory_space<vmem>>, %arg7: memref<10x32xf32, #tpu.memory_space<vmem>>) attributes {dimension_semantics = [#tpu.dimension_semantics<parallel>, #tpu.dimension_semantics<parallel>, #tpu.dimension_semantics<arbitrary>], iteration_bounds = array<i64: 1, 1, 1>, scalar_prefetch = 0 : i64, scratch_operands = 1 : i64, tpu.core_type = #tpu.core_type<tc>, window_params = [{transform_indices = @transform_0, window_bounds = array<i64: 10, 32>}, {transform_indices = @transform_1, window_bounds = array<i64: 32, 32>}, {transform_indices = @transform_2, window_bounds = array<i64: 1, 32>}, {transform_indices = @transform_3, window_bounds = array<i64: 10, 32>}]} {
    %c0_i32 = arith.constant 0 : i32
    %0 = arith.cmpi eq, %arg2, %c0_i32 : i32
    %1 = arith.extui %0 : i1 to i32
    %c0_i32_0 = arith.constant 0 : i32
    %2 = arith.cmpi ne, %1, %c0_i32_0 : i32
    scf.if %2 {
      %cst_10 = arith.constant 0.000000e+00 : f32
      %12 = vector.broadcast %cst_10 : f32 to vector<10x32xf32>
      %c0_11 = arith.constant 0 : index
      %c0_12 = arith.constant 0 : index
      %13 = vector.load %arg7[%c0_11, %c0_12] : memref<10x32xf32, #tpu.memory_space<vmem>>, vector<10x32xf32>
      tpu.vector_store %arg7[%c0_11, %c0_12], %12 {strides = array<i32>} : memref<10x32xf32, #tpu.memory_space<vmem>>, vector<10x32xf32>,
    } else {
    }
    %c0 = arith.constant 0 : index
    %c0_1 = arith.constant 0 : index
    %3 = vector.load %arg7[%c0, %c0_1] : memref<10x32xf32, #tpu.memory_space<vmem>>, vector<10x32xf32>
    %c0_2 = arith.constant 0 : index
    %c0_3 = arith.constant 0 : index
    %4 = vector.load %arg3[%c0_2, %c0_3] : memref<10x32xbf16, #tpu.memory_space<vmem>>, vector<10x32xbf16>
    %c0_4 = arith.constant 0 : index
    %c0_5 = arith.constant 0 : index
    %5 = vector.load %arg4[%c0_4, %c0_5] : memref<32x32xbf16, #tpu.memory_space<vmem>>, vector<32x32xbf16>
    %cst = arith.constant dense<0.000000e+00> : vector<10x32xf32>
    %6 = tpu.matmul %4, %5, %cst {dimension_numbers = #tpu.dot_dimension_numbers<[1], [0], [0], [1], [0, 0, 1, 1], [], []>} : vector<10x32xbf16>, vector<32x32xbf16>, vector<10x32xf32> -> vector<10x32xf32>
    %7 = arith.addf %3, %6 : vector<10x32xf32>
    %c0_6 = arith.constant 0 : index
    %c0_7 = arith.constant 0 : index
    %8 = vector.load %arg7[%c0_6, %c0_7] : memref<10x32xf32, #tpu.memory_space<vmem>>, vector<10x32xf32>
    tpu.vector_store %arg7[%c0_6, %c0_7], %7 {strides = array<i32>} : memref<10x32xf32, #tpu.memory_space<vmem>>, vector<10x32xf32>,
    %c0_i32_8 = arith.constant 0 : i32
    %9 = arith.cmpi eq, %arg2, %c0_i32_8 : i32
    %10 = arith.extui %9 : i1 to i32
    %c0_i32_9 = arith.constant 0 : i32
    %11 = arith.cmpi ne, %10, %c0_i32_9 : i32
    scf.if %11 {
      %c0_10 = arith.constant 0 : index
      %c0_11 = arith.constant 0 : index
      %12 = vector.load %arg7[%c0_10, %c0_11] : memref<10x32xf32, #tpu.memory_space<vmem>>, vector<10x32xf32>
      %c0_12 = arith.constant 0 : index
      %c0_13 = arith.constant 0 : index
      %13 = vector.load %arg5[%c0_12, %c0_13] : memref<1x32xf32, #tpu.memory_space<vmem>>, vector<1x32xf32>
      %14 = vector.broadcast %13 : vector<1x32xf32> to vector<10x32xf32>
      %15 = arith.addf %12, %14 : vector<10x32xf32>
      %16 = arith.truncf %15 : vector<10x32xf32> to vector<10x32xbf16>
      %c0_14 = arith.constant 0 : index
      %c0_15 = arith.constant 0 : index
      %17 = vector.load %arg6[%c0_14, %c0_15] : memref<10x32xbf16, #tpu.memory_space<vmem>>, vector<10x32xbf16>
      tpu.vector_store %arg6[%c0_14, %c0_15], %16 {strides = array<i32>} : memref<10x32xbf16, #tpu.memory_space<vmem>>, vector<10x32xbf16>,
    } else {
    }
    return
  }
  func.func @transform_0(%arg0: i32, %arg1: i32, %arg2: i32) -> (i32, i32) {
    %c0_i32 = arith.constant 0 : i32
    return %arg0, %arg2 : i32, i32
  }
  func.func @transform_1(%arg0: i32, %arg1: i32, %arg2: i32) -> (i32, i32) {
    %c0_i32 = arith.constant 0 : i32
    return %arg2, %arg1 : i32, i32
  }
  func.func @transform_2(%arg0: i32, %arg1: i32, %arg2: i32) -> (i32, i32) {
    %c0_i32 = arith.constant 0 : i32
    %c0_i32_0 = arith.constant 0 : i32
    return %c0_i32, %arg1 : i32, i32
  }
  func.func @transform_3(%arg0: i32, %arg1: i32, %arg2: i32) -> (i32, i32) {
    %c0_i32 = arith.constant 0 : i32
    return %arg0, %arg1 : i32, i32
  }
}

module attributes {stable_mosaic.version = 11 : i64} {
  func.func @_matmul_kernel(%arg0: i32, %arg1: i32, %arg2: i32, %arg3: memref<10x128xbf16, #tpu.memory_space<vmem>>, %arg4: memref<128x32xbf16, #tpu.memory_space<vmem>>, %arg5: memref<1x32xf32, #tpu.memory_space<vmem>>, %arg6: memref<10x32xf32, #tpu.memory_space<vmem>>, %arg7: memref<10x32xbf16, #tpu.memory_space<vmem>>, %arg8: memref<10x32xf32, #tpu.memory_space<vmem>>, %arg9: memref<10x32xf32, #tpu.memory_space<vmem>>) attributes {dimension_semantics = [#tpu.dimension_semantics<parallel>, #tpu.dimension_semantics<parallel>, #tpu.dimension_semantics<arbitrary>], iteration_bounds = array<i64: 1, 1, 1>, scalar_prefetch = 0 : i64, scratch_operands = 1 : i64, tpu.core_type = #tpu.core_type<tc>, window_params = [{transform_indices = @transform_0, window_bounds = array<i64: 10, 128>}, {transform_indices = @transform_1, window_bounds = array<i64: 128, 32>}, {transform_indices = @transform_2, window_bounds = array<i64: 1, 32>}, {transform_indices = @transform_3, window_bounds = array<i64: 10, 32>}, {transform_indices = @transform_4, window_bounds = array<i64: 10, 32>}, {transform_indices = @transform_5, window_bounds = array<i64: 10, 32>}]} {
    %c0_i32 = arith.constant 0 : i32
    %0 = arith.cmpi eq, %arg2, %c0_i32 : i32
    %1 = arith.extui %0 : i1 to i32
    %c0_i32_0 = arith.constant 0 : i32
    %2 = arith.cmpi ne, %1, %c0_i32_0 : i32
    scf.if %2 {
      %cst_10 = arith.constant 0.000000e+00 : f32
      %12 = vector.broadcast %cst_10 : f32 to vector<10x32xf32>
      %c0_11 = arith.constant 0 : index
      %c0_12 = arith.constant 0 : index
      %13 = vector.load %arg9[%c0_11, %c0_12] : memref<10x32xf32, #tpu.memory_space<vmem>>, vector<10x32xf32>
      tpu.vector_store %arg9[%c0_11, %c0_12], %12 {strides = array<i32>} : memref<10x32xf32, #tpu.memory_space<vmem>>, vector<10x32xf32>,
    } else {
    }
    %c0 = arith.constant 0 : index
    %c0_1 = arith.constant 0 : index
    %3 = vector.load %arg9[%c0, %c0_1] : memref<10x32xf32, #tpu.memory_space<vmem>>, vector<10x32xf32>
    %c0_2 = arith.constant 0 : index
    %c0_3 = arith.constant 0 : index
    %4 = vector.load %arg3[%c0_2, %c0_3] : memref<10x128xbf16, #tpu.memory_space<vmem>>, vector<10x128xbf16>
    %c0_4 = arith.constant 0 : index
    %c0_5 = arith.constant 0 : index
    %5 = vector.load %arg4[%c0_4, %c0_5] : memref<128x32xbf16, #tpu.memory_space<vmem>>, vector<128x32xbf16>
    %cst = arith.constant dense<0.000000e+00> : vector<10x32xf32>
    %6 = tpu.matmul %4, %5, %cst {dimension_numbers = #tpu.dot_dimension_numbers<[1], [0], [0], [1], [0, 0, 1, 1], [], []>} : vector<10x128xbf16>, vector<128x32xbf16>, vector<10x32xf32> -> vector<10x32xf32>
    %7 = arith.addf %3, %6 : vector<10x32xf32>
    %c0_6 = arith.constant 0 : index
    %c0_7 = arith.constant 0 : index
    %8 = vector.load %arg9[%c0_6, %c0_7] : memref<10x32xf32, #tpu.memory_space<vmem>>, vector<10x32xf32>
    tpu.vector_store %arg9[%c0_6, %c0_7], %7 {strides = array<i32>} : memref<10x32xf32, #tpu.memory_space<vmem>>, vector<10x32xf32>,
    %c0_i32_8 = arith.constant 0 : i32
    %9 = arith.cmpi eq, %arg2, %c0_i32_8 : i32
    %10 = arith.extui %9 : i1 to i32
    %c0_i32_9 = arith.constant 0 : i32
    %11 = arith.cmpi ne, %10, %c0_i32_9 : i32
    scf.if %11 {
      %c0_10 = arith.constant 0 : index
      %c0_11 = arith.constant 0 : index
      %12 = vector.load %arg9[%c0_10, %c0_11] : memref<10x32xf32, #tpu.memory_space<vmem>>, vector<10x32xf32>
      %c0_12 = arith.constant 0 : index
      %c0_13 = arith.constant 0 : index
      %13 = vector.load %arg5[%c0_12, %c0_13] : memref<1x32xf32, #tpu.memory_space<vmem>>, vector<1x32xf32>
      %14 = vector.broadcast %13 : vector<1x32xf32> to vector<10x32xf32>
      %15 = arith.addf %12, %14 : vector<10x32xf32>
      %c0_14 = arith.constant 0 : index
      %c0_15 = arith.constant 0 : index
      %16 = vector.load %arg6[%c0_14, %c0_15] : memref<10x32xf32, #tpu.memory_space<vmem>>, vector<10x32xf32>
      %17 = arith.addf %15, %16 : vector<10x32xf32>
      %c0_16 = arith.constant 0 : index
      %c0_17 = arith.constant 0 : index
      %18 = vector.load %arg7[%c0_16, %c0_17] : memref<10x32xbf16, #tpu.memory_space<vmem>>, vector<10x32xbf16>
      %19 = arith.extf %18 : vector<10x32xbf16> to vector<10x32xf32>
      %20 = arith.addf %17, %19 : vector<10x32xf32>
      %c0_18 = arith.constant 0 : index
      %c0_19 = arith.constant 0 : index
      %21 = vector.load %arg8[%c0_18, %c0_19] : memref<10x32xf32, #tpu.memory_space<vmem>>, vector<10x32xf32>
      tpu.vector_store %arg8[%c0_18, %c0_19], %20 {strides = array<i32>} : memref<10x32xf32, #tpu.memory_space<vmem>>, vector<10x32xf32>,
    } else {
    }
    return
  }
  func.func @transform_0(%arg0: i32, %arg1: i32, %arg2: i32) -> (i32, i32) {
    %c0_i32 = arith.constant 0 : i32
    return %arg0, %arg2 : i32, i32
  }
  func.func @transform_1(%arg0: i32, %arg1: i32, %arg2: i32) -> (i32, i32) {
    %c0_i32 = arith.constant 0 : i32
    return %arg2, %arg1 : i32, i32
  }
  func.func @transform_2(%arg0: i32, %arg1: i32, %arg2: i32) -> (i32, i32) {
    %c0_i32 = arith.constant 0 : i32
    %c0_i32_0 = arith.constant 0 : i32
    return %c0_i32, %arg1 : i32, i32
  }
  func.func @transform_3(%arg0: i32, %arg1: i32, %arg2: i32) -> (i32, i32) {
    %c0_i32 = arith.constant 0 : i32
    return %arg0, %arg1 : i32, i32
  }
  func.func @transform_4(%arg0: i32, %arg1: i32, %arg2: i32) -> (i32, i32) {
    %c0_i32 = arith.constant 0 : i32
    return %arg0, %arg1 : i32, i32
  }
  func.func @transform_5(%arg0: i32, %arg1: i32, %arg2: i32) -> (i32, i32) {
    %c0_i32 = arith.constant 0 : i32
    return %arg0, %arg1 : i32, i32
  }
}

module attributes {stable_mosaic.version = 11 : i64} {
  func.func @_layernorm_kernel(%arg0: i32, %arg1: memref<2x32xf32, #tpu.memory_space<vmem>>, %arg2: memref<1x32xf32, #tpu.memory_space<vmem>>, %arg3: memref<1x32xf32, #tpu.memory_space<vmem>>, %arg4: memref<2x32xbf16, #tpu.memory_space<vmem>>) attributes {dimension_semantics = [#tpu.dimension_semantics<parallel>], iteration_bounds = array<i64: 1>, scalar_prefetch = 0 : i64, scratch_operands = 0 : i64, tpu.core_type = #tpu.core_type<tc>, window_params = [{transform_indices = @transform_0, window_bounds = array<i64: 2, 32>}, {pipeline_mode = #tpu.pipeline_mode<synchronous>, transform_indices = @transform_1, window_bounds = array<i64: 1, 32>}, {pipeline_mode = #tpu.pipeline_mode<synchronous>, transform_indices = @transform_2, window_bounds = array<i64: 1, 32>}, {transform_indices = @transform_3, window_bounds = array<i64: 2, 32>}]} {
    %c0 = arith.constant 0 : index
    %c0_0 = arith.constant 0 : index
    %0 = vector.load %arg1[%c0, %c0_0] : memref<2x32xf32, #tpu.memory_space<vmem>>, vector<2x32xf32>
    %cst = arith.constant dense<0.000000e+00> : vector<2xf32>
    %1 = vector.multi_reduction <add>, %0, %cst [1] : vector<2x32xf32> to vector<2xf32>
    %2 = vector.shape_cast %1 : vector<2xf32> to vector<2x1xf32>
    %cst_1 = arith.constant 3.200000e+01 : f32
    %3 = vector.broadcast %cst_1 : f32 to vector<2x1xf32>
    %4 = arith.divf %2, %3 : vector<2x1xf32>
    %5 = vector.broadcast %4 : vector<2x1xf32> to vector<2x32xf32>
    %6 = arith.subf %0, %5 : vector<2x32xf32>
    %7 = arith.mulf %6, %6 : vector<2x32xf32>
    %cst_2 = arith.constant dense<0.000000e+00> : vector<2xf32>
    %8 = vector.multi_reduction <add>, %7, %cst_2 [1] : vector<2x32xf32> to vector<2xf32>
    %9 = vector.shape_cast %8 : vector<2xf32> to vector<2x1xf32>
    %cst_3 = arith.constant 3.200000e+01 : f32
    %10 = vector.broadcast %cst_3 : f32 to vector<2x1xf32>
    %11 = arith.divf %9, %10 : vector<2x1xf32>
    %cst_4 = arith.constant 9.99999974E-6 : f32
    %12 = vector.broadcast %cst_4 : f32 to vector<2x1xf32>
    %13 = arith.addf %11, %12 : vector<2x1xf32>
    %14 = math.rsqrt %13 : vector<2x1xf32>
    %15 = vector.broadcast %14 : vector<2x1xf32> to vector<2x32xf32>
    %16 = arith.mulf %6, %15 : vector<2x32xf32>
    %c0_5 = arith.constant 0 : index
    %c0_6 = arith.constant 0 : index
    %17 = vector.load %arg2[%c0_5, %c0_6] : memref<1x32xf32, #tpu.memory_space<vmem>>, vector<1x32xf32>
    %18 = vector.broadcast %17 : vector<1x32xf32> to vector<2x32xf32>
    %19 = arith.mulf %16, %18 : vector<2x32xf32>
    %c0_7 = arith.constant 0 : index
    %c0_8 = arith.constant 0 : index
    %20 = vector.load %arg3[%c0_7, %c0_8] : memref<1x32xf32, #tpu.memory_space<vmem>>, vector<1x32xf32>
    %21 = vector.broadcast %20 : vector<1x32xf32> to vector<2x32xf32>
    %22 = arith.addf %19, %21 : vector<2x32xf32>
    %23 = arith.truncf %22 : vector<2x32xf32> to vector<2x32xbf16>
    %c0_9 = arith.constant 0 : index
    %c0_10 = arith.constant 0 : index
    %24 = vector.load %arg4[%c0_9, %c0_10] : memref<2x32xbf16, #tpu.memory_space<vmem>>, vector<2x32xbf16>
    tpu.vector_store %arg4[%c0_9, %c0_10], %23 {strides = array<i32>} : memref<2x32xbf16, #tpu.memory_space<vmem>>, vector<2x32xbf16>,
    return
  }
  func.func @transform_0(%arg0: i32) -> (i32, i32) {
    %c0_i32 = arith.constant 0 : i32
    %c0_i32_0 = arith.constant 0 : i32
    return %arg0, %c0_i32 : i32, i32
  }
  func.func @transform_1(%arg0: i32) -> (i32, i32) {
    %c0_i32 = arith.constant 0 : i32
    %c0_i32_0 = arith.constant 0 : i32
    %c0_i32_1 = arith.constant 0 : i32
    return %c0_i32, %c0_i32_0 : i32, i32
  }
  func.func @transform_2(%arg0: i32) -> (i32, i32) {
    %c0_i32 = arith.constant 0 : i32
    %c0_i32_0 = arith.constant 0 : i32
    %c0_i32_1 = arith.constant 0 : i32
    return %c0_i32, %c0_i32_0 : i32, i32
  }
  func.func @transform_3(%arg0: i32) -> (i32, i32) {
    %c0_i32 = arith.constant 0 : i32
    %c0_i32_0 = arith.constant 0 : i32
    return %arg0, %c0_i32 : i32, i32
  }
}

</mosaic_0001>

<llo_original>
// kernel: srclip_forward.114
$region0: #{srclip_forward.114}
  #allocation0 [shape = 'u32[]', space=smem, size = 0x4, offset = 0x4, fixed_abs, tag = 'smem constant byte address 0x4 - core index']
  #allocation1 [shape = 'u32[144,128]{1,0:T(1,128)}', space=vmem, size = 0x12000, scoped, tag = 'internal scratch']
  %s0 = inlined_call_operand.vmem [shape: f32[16,32], index: 0, kind: input, shape index: {}]
  %s1 = inlined_call_operand.vmem [shape: f32[1,32], index: 1, kind: input, shape index: {}]
  %s2 = inlined_call_operand.vmem [shape: f32[1,32], index: 2, kind: input, shape index: {}]
  %s3 = inlined_call_operand.vmem [shape: bf16[16,32], index: 3, kind: output, shape index: {}]
  %s4 = sld [smem:[#allocation0]]
  $region22: #{srclip_forward.114} parent=0
    _
  %s6 = ssub.s32 1, %s4
  %s7 = scalar_select 0, %s6, %s4
  // Predicated region
  $region2: #{srclip_forward.114} parent=0 // pred_check
    _
  $region3: #{srclip_forward.114} parent=0 // pred_check_branch
    %9 = sbr.rel (0) target = $region5
  $region4: #{srclip_forward.114} parent=0 // pred_region
    _
  $region5: #{srclip_forward.114} parent=0 // pred_fallthru
    _
  // Predicated region
  $region6: #{srclip_forward.114} parent=0 // pred_check
    _
  $region7: #{srclip_forward.114} parent=0 // pred_check_branch
    %11 = sbr.rel (0) target = $region9
  $region8: #{srclip_forward.114} parent=0 // pred_region
    _
  $region9: #{srclip_forward.114} parent=0 // pred_fallthru
    _
  // Predicated region
  $region10: #{srclip_forward.114} parent=0 // pred_check
    _
  $region11: #{srclip_forward.114} parent=0 // pred_check_branch
    %13 = sbr.rel (0) target = $region13
  $region12: #{srclip_forward.114} parent=0 // pred_region
    _
  $region13: #{srclip_forward.114} parent=0 // pred_fallthru
    _
  %v14 = vld [vmem:[%s0] sm:$0xff]
  %v15 = vld [vmem:[%s0 + $0x8] sm:$0xff]
  %vm16 = vcmask 261120
  %v17 = vsel %vm16, %v14, 0.0
  %18 = vadd.xlane.f32.xlu0 %v17
  %v19 = vpop.xlane.xlu0 %18
  %v20 = vsel %vm16, %v15, 0.0
  %21 = vadd.xlane.f32.xlu0 %v20
  %v22 = vpop.xlane.xlu0 %21
  %v23 = vrcp.pop 32.0
  %v24 = vmul.f32 %v19, %v23
  %v25 = vmul.f32 %v22, %v23
  %v26 = vsub.f32 %v14, %v24
  %v27 = vsub.f32 %v15, %v25
  %v28 = vmul.f32 %v26, %v26
  %v29 = vmul.f32 %v27, %v27
  %v30 = vsel %vm16, %v28, 0.0
  %31 = vadd.xlane.f32.xlu0 %v30
  %v32 = vpop.xlane.xlu0 %31
  %v33 = vsel %vm16, %v29, 0.0
  %34 = vadd.xlane.f32.xlu0 %v33
  %v35 = vpop.xlane.xlu0 %34
  %v36 = vmul.f32 %v32, %v23
  %v37 = vmul.f32 %v35, %v23
  %v38 = vadd.f32 %v36, 1e-05
  %v39 = vadd.f32 %v37, 1e-05
  %v40 = vrsqrt.pop %v38
  %v41 = vrsqrt.pop %v39
  %v42 = vmul.f32 %v26, %v40
  %v43 = vmul.f32 %v27, %v41
  %v44 = vld [vmem:[%s1] sm:$0x1]
  %v46 = vlaneseq
  %v47 = vshrl.u32 %v46, 7
  %v48 = vsub.s32 0, %v47
  %v49 = vrot.slane %v44, %v48
  %v51 = vmul.f32 %v42, %v49
  %v52 = vmul.f32 %v43, %v49
  %v53 = vld [vmem:[%s2] sm:$0x1]
  %v55 = vlaneseq
  %v56 = vshrl.u32 %v55, 7
  %v57 = vsub.s32 0, %v56
  %v58 = vrot.slane %v53, %v57
  %v60 = vadd.f32 %v51, %v58
  %v61 = vadd.f32 %v52, %v58
  %v62 = vpack.c.bf16 %v61, %v60
  %v64 = vunpack.c.l.b16 %v62
  %v65 = vunpack.c.h.b16 %v62
  %v66 = vpack.c.b16 %v64, %v64
  %v67 = vpack.c.b16 %v65, %v65
  %vm70 = vcmask 257024
  %71 = vst.msk [vmem:[%s3] sm:$0xf] %vm70, %v66
  %72 = vst.msk [vmem:[%s3 + $0x4] sm:$0xf] %vm70, %v67
  // Predicated region
  $region14: #{srclip_forward.114} parent=0 // pred_check
    _
  $region15: #{srclip_forward.114} parent=0 // pred_check_branch
    %74 = sbr.rel (0) target = $region17
  $region16: #{srclip_forward.114} parent=0 // pred_region
    _
  $region17: #{srclip_forward.114} parent=0 // pred_fallthru
    _
  // Predicated region
  $region18: #{srclip_forward.114} parent=0 // pred_check
    _
  $region19: #{srclip_forward.114} parent=0 // pred_check_branch
    %76 = sbr.rel (0) target = $region21
  $region20: #{srclip_forward.114} parent=0 // pred_region
    _
  $region21: #{srclip_forward.114} parent=0 // pred_fallthru
    _

// kernel: srclip_forward.115
$region0: #{srclip_forward.115}
  #allocation0 [shape = 'u32[]', space=smem, size = 0x4, offset = 0x4, fixed_abs, tag = 'smem constant byte address 0x4 - core index']
  #allocation1 [shape = 'u32[144,128]{1,0:T(1,128)}', space=vmem, size = 0x12000, scoped, tag = 'internal scratch']
  #allocation2 [shape = 'f32[16,96]{1,0:T(8,128)}', space=vmem, size = 0x2000, scoped, tag = 'scratch operand']
  %s0 = inlined_call_operand.vmem [shape: bf16[16,32], index: 0, kind: input, shape index: {}]
  %s1 = inlined_call_operand.vmem [shape: bf16[32,96], index: 1, kind: input, shape index: {}]
  %s2 = inlined_call_operand.vmem [shape: f32[1,96], index: 2, kind: input, shape index: {}]
  %s3 = inlined_call_operand.vmem [shape: bf16[16,96], index: 3, kind: output, shape index: {}]
  %s4 = sld [smem:[#allocation0]]
  $region30: #{srclip_forward.115} parent=0
    _
  %s6 = ssub.s32 1, %s4
  %s7 = scalar_select 0, %s6, %s4
  // Predicated region
  $region2: #{srclip_forward.115} parent=0 // pred_check
    _
  $region3: #{srclip_forward.115} parent=0 // pred_check_branch
    %9 = sbr.rel (0) target = $region5
  $region4: #{srclip_forward.115} parent=0 // pred_region
    _
  $region5: #{srclip_forward.115} parent=0 // pred_fallthru
    _
  // Predicated region
  $region6: #{srclip_forward.115} parent=0 // pred_check
    _
  $region7: #{srclip_forward.115} parent=0 // pred_check_branch
    %11 = sbr.rel (0) target = $region9
  $region8: #{srclip_forward.115} parent=0 // pred_region
    _
  $region9: #{srclip_forward.115} parent=0 // pred_fallthru
    _
  // Predicated region
  $region10: #{srclip_forward.115} parent=0 // pred_check
    _
  $region11: #{srclip_forward.115} parent=0 // pred_check_branch
    %13 = sbr.rel (0) target = $region13
  $region12: #{srclip_forward.115} parent=0 // pred_region
    _
  $region13: #{srclip_forward.115} parent=0 // pred_fallthru
    _
  %p15 = scmp.eq.s32.totalorder 0, 0
  // Predicated region
  $region14: #{srclip_forward.115} parent=0 // pred_check
    %p16 = pneg %p15
  $region15: #{srclip_forward.115} parent=0 // pred_check_branch
    %18 = sbr.rel (%p16) target = $region17
  $region16: #{srclip_forward.115} parent=0 // pred_region
    %vm19 = vcmask 785408
    %20 = vst.msk [vmem:[#allocation2] sm:$0xff] %vm19, 0.0
    %21 = vst.msk [vmem:[#allocation2 + $0x8] sm:$0xff] %vm19, 0.0
  $region17: #{srclip_forward.115} parent=0 // pred_fallthru
    _
  %v22 = vld [vmem:[#allocation2] sm:$0xff]
  %v23 = vld [vmem:[#allocation2 + $0x8] sm:$0xff]
  %v24 = vld [vmem:[%s0] sm:$0xf]
  %v25 = vld [vmem:[%s0 + $0x4] sm:$0xf]
  %v26 = vld [vmem:[%s1] sm:$0xf]
  %v27 = vld [vmem:[%s1 + $0x4] sm:$0xf]
  %v28 = vld [vmem:[%s1 + $0x8] sm:$0xf]
  %v29 = vld [vmem:[%s1 + $0xc] sm:$0xf]
  %v32 = vunpack.c.l.b16 %v24
  %v33 = vunpack.c.l.b16 %v25
  %v34 = vpack.c.b16 %v33, %v32
  %v39 = vunpack.c.l.b16 %v26
  %v40 = vunpack.c.l.b16 %v27
  %v41 = vunpack.c.l.b16 %v28
  %v42 = vunpack.c.l.b16 %v29
  %v43 = vpack.c.b16 %v40, %v39
  %v44 = vpack.c.b16 %v42, %v41
  %vm47 = vcmask 261120
  %v49 = vsel %vm47, %v34, 0
  %51 = vmatprep.subr.bf16.mxu0 0
  %52 = vmatpush1.bf16.msra.mxu0 0
  %53 = vmatprep.subr.bf16.mxu0 0
  %54 = vmatpush1.bf16.msra.mxu0 0
  %55 = vmatprep.subr.bf16.mxu0 0
  %56 = vmatpush1.bf16.msra.mxu0 0
  %57 = vmatprep.subr.bf16.mxu0 0
  %58 = vmatpush1.bf16.msra.mxu0 0
  %59 = vmatprep.subr.bf16.mxu0 0
  %60 = vmatpush1.bf16.msra.mxu0 0
  %61 = vmatprep.subr.bf16.mxu0 0
  %62 = vmatpush1.bf16.msra.mxu0 0
  %63 = vmatprep.subr.bf16.mxu0 0
  %64 = vmatpush1.bf16.msra.mxu0 %v44
  %65 = vmatprep.subr.bf16.mxu0 0
  %66 = vmatpush1.bf16.msra.mxu0 %v43
  %67 = vmatprep.subr.bf16.mxu0 0
  %68 = vmatpush2.bf16.msra.mxu0 0
  %69 = vmatprep.subr.bf16.mxu0 0
  %70 = vmatpush2.bf16.msra.mxu0 0
  %71 = vmatprep.subr.bf16.mxu0 0
  %72 = vmatpush2.bf16.msra.mxu0 0
  %73 = vmatprep.subr.bf16.mxu0 0
  %74 = vmatpush2.bf16.msra.mxu0 0
  %75 = vmatprep.subr.bf16.mxu0 0
  %76 = vmatpush2.bf16.msra.mxu0 0
  %77 = vmatprep.subr.bf16.mxu0 0
  %78 = vmatpush2.bf16.msra.mxu0 0
  %79 = vmatprep.subr.bf16.mxu0 0
  %80 = vmatpush2.bf16.msra.mxu0 0
  %81 = vmatprep.subr.bf16.mxu0 0
  %82 = vmatpush2.bf16.msra.mxu0 0
  %83 = vmatprep.mubr.bf16.mxu0 0
  %84 = vmatmul.mubr.bf16.gmra.mxu0 %v49
  %v85 = vpop.f32.mrf.mxu0
  %v86 = vadd.f32 0.0, %v85
  %v87 = vpop.f32.mrf.mxu0
  %v88 = vpop.f32.mrf.mxu0
  %v89 = vadd.f32 0.0, %v88
  %v90 = vpop.f32.mrf.mxu0
  %91 = vdwg.mxu0
  %v92 = vadd.f32 %v22, %v86
  %v93 = vadd.f32 %v23, %v89
  %vm94 = vcmask 785408
  %95 = vst.msk [vmem:[#allocation2] sm:$0xff] %vm94, %v92
  %96 = vst.msk [vmem:[#allocation2 + $0x8] sm:$0xff] %vm94, %v93
  // Predicated region
  $region18: #{srclip_forward.115} parent=0 // pred_check
    %p97 = pneg %p15
  $region19: #{srclip_forward.115} parent=0 // pred_check_branch
    %99 = sbr.rel (%p97) target = $region21
  $region20: #{srclip_forward.115} parent=0 // pred_region
    %v100 = vld [vmem:[#allocation2] sm:$0xff]
    %v101 = vld [vmem:[#allocation2 + $0x8] sm:$0xff]
    %v102 = vld [vmem:[%s2] sm:$0x1]
    %v104 = vlaneseq
    %v105 = vshrl.u32 %v104, 7
    %v106 = vsub.s32 0, %v105
    %v107 = vrot.slane %v102, %v106
    %v109 = vadd.f32 %v100, %v107
    %v110 = vadd.f32 %v101, %v107
    %v111 = vpack.c.bf16 %v110, %v109
    %v113 = vunpack.c.l.b16 %v111
    %v114 = vunpack.c.h.b16 %v111
    %v115 = vpack.c.b16 %v113, %v113
    %v116 = vpack.c.b16 %v114, %v114
    %vm119 = vcmask 781312
    %120 = vst.msk [vmem:[%s3] sm:$0xf] %vm119, %v115
    %121 = vst.msk [vmem:[%s3 + $0x4] sm:$0xf] %vm119, %v116
  $region21: #{srclip_forward.115} parent=0 // pred_fallthru
    _
  // Predicated region
  $region22: #{srclip_forward.115} parent=0 // pred_check
    _
  $region23: #{srclip_forward.115} parent=0 // pred_check_branch
    %123 = sbr.rel (0) target = $region25
  $region24: #{srclip_forward.115} parent=0 // pred_region
    _
  $region25: #{srclip_forward.115} parent=0 // pred_fallthru
    _
  // Predicated region
  $region26: #{srclip_forward.115} parent=0 // pred_check
    _
  $region27: #{srclip_forward.115} parent=0 // pred_check_branch
    %125 = sbr.rel (0) target = $region29
  $region28: #{srclip_forward.115} parent=0 // pred_region
    _
  $region29: #{srclip_forward.115} parent=0 // pred_fallthru
    _

// kernel: srclip_forward.116
$region0: #{srclip_forward.116}
  #allocation0 [shape = 'u32[]', space=smem, size = 0x4, offset = 0x4, fixed_abs, tag = 'smem constant byte address 0x4 - core index']
  #allocation1 [shape = 'u32[144,128]{1,0:T(1,128)}', space=vmem, size = 0x12000, scoped, tag = 'internal scratch']
  %s0 = inlined_call_operand.vmem [shape: bf16[8,8,8], index: 0, kind: input, shape index: {}]
  %s1 = inlined_call_operand.vmem [shape: bf16[8,8,8], index: 1, kind: input, shape index: {}]
  %s2 = inlined_call_operand.vmem [shape: bf16[8,8,8], index: 2, kind: input, shape index: {}]
  %s3 = inlined_call_operand.vmem [shape: bf16[8,8,8], index: 3, kind: output, shape index: {}]
  %s4 = sld [smem:[#allocation0]]
  $region45: #{srclip_forward.116} parent=0
    _
  %s6 = ssub.s32 1, %s4
  %s7 = scalar_select 0, %s6, %s4
  loop: start=0, step=1, limit=10
  $region2: #{srclip_forward.116} parent=0 // loop_pre_header
    _
  $region3: #{srclip_forward.116} parent=0 // loop_header
    %s9 = sphi 0, %s13
    %p10 = scmp.ge.s32.totalorder %s9, 10
    %s19 = sphi 0, %s21
    %s22 = sphi 0, %s19
    %s23 = sphi 0, %s22
    %s39 = sphi 0, %s23
    %s45 = sphi 0, %s47
    %s48 = sphi 0, %s45
    %s49 = sphi 0, %s48
    %s65 = sphi 0, %s49
    %s71 = sphi 0, %s73
    %s74 = sphi 0, %s71
    %s75 = sphi 0, %s74
    %s91 = sphi 0, %s75
    %s97 = sphi 0, %s99
    %s100 = sphi 0, %s97
    %s101 = sphi 0, %s100
    %s117 = sphi 0, %s101
  $region4: #{srclip_forward.116} parent=0 // loop_header_branch
    %12 = sbr.rel (%p10) target = $region8
  $region5: #{srclip_forward.116} parent=0 // loop_body
    %s14 = ssub.s32 %s9, 1
    %s15 = ssub.s32 %s9, 2
    %s16 = sadd.s32 %s9, 1
    %s17 = ssub.s32 %s9, %s16
    %p18 = scmp.eq.s32.totalorder %s17, 0
    %s20 = sadd.s32 %s19, 1
    %s21 = scalar_select %p18, %s19, %s20
    %p24 = pneg %p18
    %p25 = scmp.eq.s32.totalorder %s9, 7
    %p26 = por %p24, %p25
    %p27 = scmp.ne.s32.totalorder %s19, %s22
    %p28 = scmp.eq.s32.totalorder %s9, 0
    %p29 = por %p27, %p28
    %p30 = scmp.ne.s32.totalorder %s19, %s22
    %p31 = scmp.eq.s32.totalorder %s14, 7
    %p32 = por %p30, %p31
    %p33 = scmp.ne.s32.totalorder %s22, %s23
    %p34 = scmp.eq.s32.totalorder %s14, 0
    %p35 = por %p33, %p34
    %p36 = scmp.ne.s32.totalorder %s22, %s23
    %p37 = scmp.eq.s32.totalorder %s15, 7
    %p38 = por %p36, %p37
    %p40 = scmp.ne.s32.totalorder %s23, %s39
    %p41 = scmp.eq.s32.totalorder %s15, 0
    %p42 = por %p40, %p41
    %s43 = ssub.s32 %s9, %s16
    %p44 = scmp.eq.s32.totalorder %s43, 0
    %s46 = sadd.s32 %s45, 1
    %s47 = scalar_select %p44, %s45, %s46
    %p50 = pneg %p44
    %p51 = scmp.eq.s32.totalorder %s9, 7
    %p52 = por %p50, %p51
    %p53 = scmp.ne.s32.totalorder %s45, %s48
    %p54 = scmp.eq.s32.totalorder %s9, 0
    %p55 = por %p53, %p54
    %p56 = scmp.ne.s32.totalorder %s45, %s48
    %p57 = scmp.eq.s32.totalorder %s14, 7
    %p58 = por %p56, %p57
    %p59 = scmp.ne.s32.totalorder %s48, %s49
    %p60 = scmp.eq.s32.totalorder %s14, 0
    %p61 = por %p59, %p60
    %p62 = scmp.ne.s32.totalorder %s48, %s49
    %p63 = scmp.eq.s32.totalorder %s15, 7
    %p64 = por %p62, %p63
    %p66 = scmp.ne.s32.totalorder %s49, %s65
    %p67 = scmp.eq.s32.totalorder %s15, 0
    %p68 = por %p66, %p67
    %s69 = ssub.s32 %s9, %s16
    %p70 = scmp.eq.s32.totalorder %s69, 0
    %s72 = sadd.s32 %s71, 1
    %s73 = scalar_select %p70, %s71, %s72
    %p76 = pneg %p70
    %p77 = scmp.eq.s32.totalorder %s9, 7
    %p78 = por %p76, %p77
    %p79 = scmp.ne.s32.totalorder %s71, %s74
    %p80 = scmp.eq.s32.totalorder %s9, 0
    %p81 = por %p79, %p80
    %p82 = scmp.ne.s32.totalorder %s71, %s74
    %p83 = scmp.eq.s32.totalorder %s14, 7
    %p84 = por %p82, %p83
    %p85 = scmp.ne.s32.totalorder %s74, %s75
    %p86 = scmp.eq.s32.totalorder %s14, 0
    %p87 = por %p85, %p86
    %p88 = scmp.ne.s32.totalorder %s74, %s75
    %p89 = scmp.eq.s32.totalorder %s15, 7
    %p90 = por %p88, %p89
    %p92 = scmp.ne.s32.totalorder %s75, %s91
    %p93 = scmp.eq.s32.totalorder %s15, 0
    %p94 = por %p92, %p93
    %s95 = ssub.s32 %s9, %s16
    %p96 = scmp.eq.s32.totalorder %s95, 0
    %s98 = sadd.s32 %s97, 1
    %s99 = scalar_select %p96, %s97, %s98
    %p102 = pneg %p96
    %p103 = scmp.eq.s32.totalorder %s9, 7
    %p104 = por %p102, %p103
    %p105 = scmp.ne.s32.totalorder %s97, %s100
    %p106 = scmp.eq.s32.totalorder %s9, 0
    %p107 = por %p105, %p106
    %p108 = scmp.ne.s32.totalorder %s97, %s100
    %p109 = scmp.eq.s32.totalorder %s14, 7
    %p110 = por %p108, %p109
    %p111 = scmp.ne.s32.totalorder %s100, %s101
    %p112 = scmp.eq.s32.totalorder %s14, 0
    %p113 = por %p111, %p112
    %p114 = scmp.ne.s32.totalorder %s100, %s101
    %p115 = scmp.eq.s32.totalorder %s15, 7
    %p116 = por %p114, %p115
    %p118 = scmp.ne.s32.totalorder %s101, %s117
    %p119 = scmp.eq.s32.totalorder %s15, 0
    %p120 = por %p118, %p119
    %p121 = scmp.le.s32.totalorder 1, %s9
    %p122 = scmp.lt.s32.totalorder %s9, 9
    %p123 = pnand %p121, %p122
    %p124 = pneg %p123
    // Predicated region
    $region9: #{srclip_forward.116} parent=5 // pred_check
      _
    $region10: #{srclip_forward.116} parent=5 // pred_check_branch
      %126 = sbr.rel (%p123) target = $region12
    $region11: #{srclip_forward.116} parent=5 // pred_region
      %s127 = ssub.s32 %s9, 1
    $region12: #{srclip_forward.116} parent=5 // pred_fallthru
      _
    %p128 = scmp.lt.s32.totalorder %s9, 8
    // Predicated region
    $region13: #{srclip_forward.116} parent=5 // pred_check
      %p129 = pneg %p128
    $region14: #{srclip_forward.116} parent=5 // pred_check_branch
      %131 = sbr.rel (%p129) target = $region16
    $region15: #{srclip_forward.116} parent=5 // pred_region
      // Predicated region
      $region17: #{srclip_forward.116} parent=15 // pred_check
        %p132 = pneg %p29
      $region18: #{srclip_forward.116} parent=15 // pred_check_branch
        %134 = sbr.rel (%p132) target = $region20
      $region19: #{srclip_forward.116} parent=15 // pred_region
        %p135 = scmp.lt.s32.totalorder %s9, 7
        %s136 = scalar_select %p135, %s9, 7
        %s137 = smul.addr %s136, 4
        %s138 = scalar_lea.vmem %s0, %s137
      $region20: #{srclip_forward.116} parent=15 // pred_fallthru
        _
      // Predicated region
      $region21: #{srclip_forward.116} parent=15 // pred_check
        %p139 = pneg %p55
      $region22: #{srclip_forward.116} parent=15 // pred_check_branch
        %141 = sbr.rel (%p139) target = $region24
      $region23: #{srclip_forward.116} parent=15 // pred_region
        %p142 = scmp.lt.s32.totalorder %s9, 7
        %s143 = scalar_select %p142, %s9, 7
        %s144 = smul.addr %s143, 4
        %s145 = scalar_lea.vmem %s1, %s144
      $region24: #{srclip_forward.116} parent=15 // pred_fallthru
        _
      // Predicated region
      $region25: #{srclip_forward.116} parent=15 // pred_check
        %p146 = pneg %p81
      $region26: #{srclip_forward.116} parent=15 // pred_check_branch
        %148 = sbr.rel (%p146) target = $region28
      $region27: #{srclip_forward.116} parent=15 // pred_region
        %p149 = scmp.lt.s32.totalorder %s9, 7
        %s150 = scalar_select %p149, %s9, 7
        %s151 = smul.addr %s150, 4
        %s152 = scalar_lea.vmem %s2, %s151
      $region28: #{srclip_forward.116} parent=15 // pred_fallthru
        _
    $region16: #{srclip_forward.116} parent=5 // pred_fallthru
      _
    %p153 = scmp.le.s32.totalorder 1, %s9
    %p154 = scmp.lt.s32.totalorder %s9, 9
    %p155 = pnand %p153, %p154
    %p156 = pneg %p155
    // Predicated region
    $region29: #{srclip_forward.116} parent=5 // pred_check
      _
    $region30: #{srclip_forward.116} parent=5 // pred_check_branch
      %158 = sbr.rel (%p155) target = $region32
    $region31: #{srclip_forward.116} parent=5 // pred_region
      %s159 = ssub.s32 %s9, 1
      %p160 = scmp.lt.s32.totalorder %s14, 7
      %s161 = scalar_select %p160, %s14, 7
      %s162 = smul.addr %s161, 4
      %s163 = scalar_lea.vmem %s0, %s162
      %p164 = pneg %p35
      %p165 = pneg %p32
      %p166 = scmp.lt.s32.totalorder %s14, 7
      %s167 = scalar_select %p166, %s14, 7
      %s168 = smul.addr %s167, 4
      %s169 = scalar_lea.vmem %s1, %s168
      %p170 = pneg %p61
      %p171 = pneg %p58
      %p172 = scmp.lt.s32.totalorder %s14, 7
      %s173 = scalar_select %p172, %s14, 7
      %s174 = smul.addr %s173, 4
      %s175 = scalar_lea.vmem %s2, %s174
      %p176 = pneg %p87
      %p177 = pneg %p84
      %p178 = pneg %p113
      %p179 = pneg %p110
      %p180 = scmp.lt.s32.totalorder %s14, 7
      %s181 = scalar_select %p180, %s14, 7
      %s182 = smul.addr %s181, 4
      %s183 = scalar_lea.vmem %s3, %s182
      %p184 = scmp.lt.s32.totalorder %s14, 7
      %s185 = scalar_select %p184, %s14, 7
      %s186 = smul.addr %s185, 4
      %s187 = scalar_lea.vmem %s0, %s186
      %p188 = scmp.lt.s32.totalorder %s14, 7
      %s189 = scalar_select %p188, %s14, 7
      %s190 = smul.addr %s189, 4
      %s191 = scalar_lea.vmem %s1, %s190
      %p192 = scmp.lt.s32.totalorder %s14, 7
      %s193 = scalar_select %p192, %s14, 7
      %s194 = smul.addr %s193, 4
      %s195 = scalar_lea.vmem %s2, %s194
      %p196 = scmp.lt.s32.totalorder %s14, 7
      %s197 = scalar_select %p196, %s14, 7
      %s198 = smul.addr %s197, 4
      %s199 = scalar_lea.vmem %s3, %s198
      %v201 = vld [vmem:[%s187] sm:$0xf]
      %v202 = vld [vmem:[%s191] sm:$0xf]
      %v203 = vld [vmem:[%s195] sm:$0xf]
      %vm204 = vcmask 64512
      %v206 = vsel %vm204, %v201, 0
      %v209 = vsel %vm204, %v202, 0
      %211 = vmatprep.subr.bf16.mxu0 0
      %212 = vmatpush1.bf16.xpose.msra.mxu0 0
      %213 = vmatprep.subr.bf16.mxu0 0
      %214 = vmatpush1.bf16.xpose.msra.mxu0 0
      %215 = vmatprep.subr.bf16.mxu0 0
      %216 = vmatpush1.bf16.xpose.msra.mxu0 0
      %217 = vmatprep.subr.bf16.mxu0 0
      %218 = vmatpush1.bf16.xpose.msra.mxu0 0
      %219 = vmatprep.subr.bf16.mxu0 0
      %220 = vmatpush1.bf16.xpose.msra.mxu0 0
      %221 = vmatprep.subr.bf16.mxu0 0
      %222 = vmatpush1.bf16.xpose.msra.mxu0 0
      %223 = vmatprep.subr.bf16.mxu0 0
      %224 = vmatpush1.bf16.xpose.msra.mxu0 0
      %225 = vmatprep.subr.bf16.mxu0 0
      %226 = vmatpush1.bf16.xpose.msra.mxu0 %v209
      %227 = vmatprep.subr.bf16.mxu0 0
      %228 = vmatpush2.bf16.xpose.msra.mxu0 0
      %229 = vmatprep.subr.bf16.mxu0 0
      %230 = vmatpush2.bf16.xpose.msra.mxu0 0
      %231 = vmatprep.subr.bf16.mxu0 0
      %232 = vmatpush2.bf16.xpose.msra.mxu0 0
      %233 = vmatprep.subr.bf16.mxu0 0
      %234 = vmatpush2.bf16.xpose.msra.mxu0 0
      %235 = vmatprep.subr.bf16.mxu0 0
      %236 = vmatpush2.bf16.xpose.msra.mxu0 0
      %237 = vmatprep.subr.bf16.mxu0 0
      %238 = vmatpush2.bf16.xpose.msra.mxu0 0
      %239 = vmatprep.subr.bf16.mxu0 0
      %240 = vmatpush2.bf16.xpose.msra.mxu0 0
      %241 = vmatprep.subr.bf16.mxu0 0
      %242 = vmatpush2.bf16.xpose.msra.mxu0 0
      %243 = vmatprep.mubr.bf16.mxu0 0
      %244 = vmatmul.mubr.bf16.gmra.mxu0 %v206
      %v245 = vpop.f32.mrf.mxu0
      %v246 = vadd.f32 0.0, %v245
      %v247 = vpop.f32.mrf.mxu0
      %v248 = vpop.f32.mrf.mxu0
      %v249 = vpop.f32.mrf.mxu0
      %250 = vdwg.mxu0
      %v251 = vmul.f32 %v246, 0.35355338
      %v252 = vlaneseq
      %v253 = vshrl.u32 %v252, 7
      %v254 = vlaneseq
      %v255 = vand.u32 %v254, 127
      %vm256 = vcmp.gt.s32.totalorder %v255, %v253
      %v257 = vsel %vm256, -1e+30, %v251
      %v258 = vsel %vm204, %v257, -inf
      %259 = vmax.xlane.f32.xlu0 %v258
      %v260 = vpop.xlane.xlu0 %259
      %v261 = vsub.f32 %v257, %v260
      %v262 = vmul.f32 %v261, 1.442695
      %v263 = vpow.pop %v262
      %v264 = vsel %vm204, %v263, 0.0
      %265 = vadd.xlane.f32.xlu0 %v264
      %v266 = vpop.xlane.xlu0 %265
      %v267 = vrcp.pop %v266
      %v268 = vpack.c.bf16 %v263, %v263
      %v270 = vsel %vm204, %v268, 0
      %vm272 = vcmask 1043456
      %v274 = vsel %vm272, %v203, 0
      %276 = vmatprep.subr.bf16.mxu0 0
      %277 = vmatpush1.bf16.msra.mxu0 0
      %278 = vmatprep.subr.bf16.mxu0 0
      %279 = vmatpush1.bf16.msra.mxu0 0
      %280 = vmatprep.subr.bf16.mxu0 0
      %281 = vmatpush1.bf16.msra.mxu0 0
      %282 = vmatprep.subr.bf16.mxu0 0
      %283 = vmatpush1.bf16.msra.mxu0 0
      %284 = vmatprep.subr.bf16.mxu0 0
      %285 = vmatpush1.bf16.msra.mxu0 0
      %286 = vmatprep.subr.bf16.mxu0 0
      %287 = vmatpush1.bf16.msra.mxu0 0
      %288 = vmatprep.subr.bf16.mxu0 0
      %289 = vmatpush1.bf16.msra.mxu0 0
      %290 = vmatprep.subr.bf16.mxu0 0
      %291 = vmatpush1.bf16.msra.mxu0 %v274
      %292 = vmatprep.subr.bf16.mxu0 0
      %293 = vmatpush2.bf16.msra.mxu0 0
      %294 = vmatprep.subr.bf16.mxu0 0
      %295 = vmatpush2.bf16.msra.mxu0 0
      %296 = vmatprep.subr.bf16.mxu0 0
      %297 = vmatpush2.bf16.msra.mxu0 0
      %298 = vmatprep.subr.bf16.mxu0 0
      %299 = vmatpush2.bf16.msra.mxu0 0
      %300 = vmatprep.subr.bf16.mxu0 0
      %301 = vmatpush2.bf16.msra.mxu0 0
      %302 = vmatprep.subr.bf16.mxu0 0
      %303 = vmatpush2.bf16.msra.mxu0 0
      %304 = vmatprep.subr.bf16.mxu0 0
      %305 = vmatpush2.bf16.msra.mxu0 0
      %306 = vmatprep.subr.bf16.mxu0 0
      %307 = vmatpush2.bf16.msra.mxu0 0
      %308 = vmatprep.mubr.bf16.mxu0 0
      %309 = vmatmul.mubr.bf16.gmra.mxu0 %v270
      %v310 = vpop.f32.mrf.mxu0
      %v311 = vadd.f32 0.0, %v310
      %v312 = vpop.f32.mrf.mxu0
      %v313 = vpop.f32.mrf.mxu0
      %v314 = vpop.f32.mrf.mxu0
      %315 = vdwg.mxu0
      %v316 = vmul.f32 %v311, %v267
      %v317 = vpack.c.bf16 %v316, %v316
      %vm318 = vcmask 60416
      %319 = vst.msk [vmem:[%s199] sm:$0xf] %vm318, %v317
      %p320 = scmp.lt.s32.totalorder %s14, 7
      %s321 = scalar_select %p320, %s14, 7
      %s322 = smul.addr %s321, 4
      %s323 = scalar_lea.vmem %s3, %s322
      // Predicated region
      $region33: #{srclip_forward.116} parent=31 // pred_check
        %p324 = pneg %p110
      $region34: #{srclip_forward.116} parent=31 // pred_check_branch
        %326 = sbr.rel (%p324) target = $region36
      $region35: #{srclip_forward.116} parent=31 // pred_region
        _
      $region36: #{srclip_forward.116} parent=31 // pred_fallthru
        _
    $region32: #{srclip_forward.116} parent=5 // pred_fallthru
      _
    %p327 = scmp.le.s32.totalorder 2, %s9
    // Predicated region
    $region37: #{srclip_forward.116} parent=5 // pred_check
      %p328 = pneg %p327
    $region38: #{srclip_forward.116} parent=5 // pred_check_branch
      %330 = sbr.rel (%p328) target = $region40
    $region39: #{srclip_forward.116} parent=5 // pred_region
      %s331 = ssub.s32 %s9, 2
      // Predicated region
      $region41: #{srclip_forward.116} parent=39 // pred_check
        %p332 = pneg %p116
      $region42: #{srclip_forward.116} parent=39 // pred_check_branch
        %334 = sbr.rel (%p332) target = $region44
      $region43: #{srclip_forward.116} parent=39 // pred_region
        %p335 = scmp.lt.s32.totalorder %s15, 7
        %s336 = scalar_select %p335, %s15, 7
        %s337 = smul.addr %s336, 4
        %s338 = scalar_lea.vmem %s3, %s337
      $region44: #{srclip_forward.116} parent=39 // pred_fallthru
        _
    $region40: #{srclip_forward.116} parent=5 // pred_fallthru
      _
  $region6: #{srclip_forward.116} parent=0 // loop_footer
    %s13 = sadd.s32 1, %s9
  $region7: #{srclip_forward.116} parent=0 // loop_footer_branch
    %8 = sbr.rel target = $region3
  $region8: #{srclip_forward.116} parent=0 // loop_exit
    _

// kernel: srclip_forward.117
$region0: #{srclip_forward.117}
  #allocation0 [shape = 'u32[]', space=smem, size = 0x4, offset = 0x4, fixed_abs, tag = 'smem constant byte address 0x4 - core index']
  #allocation1 [shape = 'u32[144,128]{1,0:T(1,128)}', space=vmem, size = 0x12000, scoped, tag = 'internal scratch']
  #allocation2 [shape = 'f32[16,32]{1,0:T(8,128)}', space=vmem, size = 0x2000, scoped, tag = 'scratch operand']
  %s0 = inlined_call_operand.vmem [shape: bf16[16,32], index: 0, kind: input, shape index: {}]
  %s1 = inlined_call_operand.vmem [shape: bf16[32,32], index: 1, kind: input, shape index: {}]
  %s2 = inlined_call_operand.vmem [shape: f32[1,32], index: 2, kind: input, shape index: {}]
  %s3 = inlined_call_operand.vmem [shape: f32[16,32], index: 3, kind: input, shape index: {}]
  %s4 = inlined_call_operand.vmem [shape: f32[16,32], index: 4, kind: output, shape index: {}]
  %s5 = sld [smem:[#allocation0]]
  $region34: #{srclip_forward.117} parent=0
    _
  %s7 = ssub.s32 1, %s5
  %s8 = scalar_select 0, %s7, %s5
  // Predicated region
  $region2: #{srclip_forward.117} parent=0 // pred_check
    _
  $region3: #{srclip_forward.117} parent=0 // pred_check_branch
    %10 = sbr.rel (0) target = $region5
  $region4: #{srclip_forward.117} parent=0 // pred_region
    _
  $region5: #{srclip_forward.117} parent=0 // pred_fallthru
    _
  // Predicated region
  $region6: #{srclip_forward.117} parent=0 // pred_check
    _
  $region7: #{srclip_forward.117} parent=0 // pred_check_branch
    %12 = sbr.rel (0) target = $region9
  $region8: #{srclip_forward.117} parent=0 // pred_region
    _
  $region9: #{srclip_forward.117} parent=0 // pred_fallthru
    _
  // Predicated region
  $region10: #{srclip_forward.117} parent=0 // pred_check
    _
  $region11: #{srclip_forward.117} parent=0 // pred_check_branch
    %14 = sbr.rel (0) target = $region13
  $region12: #{srclip_forward.117} parent=0 // pred_region
    _
  $region13: #{srclip_forward.117} parent=0 // pred_fallthru
    _
  // Predicated region
  $region14: #{srclip_forward.117} parent=0 // pred_check
    _
  $region15: #{srclip_forward.117} parent=0 // pred_check_branch
    %16 = sbr.rel (0) target = $region17
  $region16: #{srclip_forward.117} parent=0 // pred_region
    _
  $region17: #{srclip_forward.117} parent=0 // pred_fallthru
    _
  %p18 = scmp.eq.s32.totalorder 0, 0
  // Predicated region
  $region18: #{srclip_forward.117} parent=0 // pred_check
    %p19 = pneg %p18
  $region19: #{srclip_forward.117} parent=0 // pred_check_branch
    %21 = sbr.rel (%p19) target = $region21
  $region20: #{srclip_forward.117} parent=0 // pred_region
    %vm22 = vcmask 261120
    %23 = vst.msk [vmem:[#allocation2] sm:$0xff] %vm22, 0.0
    %24 = vst.msk [vmem:[#allocation2 + $0x8] sm:$0xff] %vm22, 0.0
  $region21: #{srclip_forward.117} parent=0 // pred_fallthru
    _
  %v25 = vld [vmem:[#allocation2] sm:$0xff]
  %v26 = vld [vmem:[#allocation2 + $0x8] sm:$0xff]
  %v27 = vld [vmem:[%s0] sm:$0xf]
  %v28 = vld [vmem:[%s0 + $0x4] sm:$0xf]
  %v29 = vld [vmem:[%s1] sm:$0xf]
  %v30 = vld [vmem:[%s1 + $0x4] sm:$0xf]
  %v31 = vld [vmem:[%s1 + $0x8] sm:$0xf]
  %v32 = vld [vmem:[%s1 + $0xc] sm:$0xf]
  %v35 = vunpack.c.l.b16 %v27
  %v36 = vunpack.c.l.b16 %v28
  %v37 = vpack.c.b16 %v36, %v35
  %v42 = vunpack.c.l.b16 %v29
  %v43 = vunpack.c.l.b16 %v30
  %v44 = vunpack.c.l.b16 %v31
  %v45 = vunpack.c.l.b16 %v32
  %v46 = vpack.c.b16 %v43, %v42
  %v47 = vpack.c.b16 %v45, %v44
  %vm50 = vcmask 261120
  %v52 = vsel %vm50, %v37, 0
  %54 = vmatprep.subr.bf16.mxu0 0
  %55 = vmatpush1.bf16.msra.mxu0 0
  %56 = vmatprep.subr.bf16.mxu0 0
  %57 = vmatpush1.bf16.msra.mxu0 0
  %58 = vmatprep.subr.bf16.mxu0 0
  %59 = vmatpush1.bf16.msra.mxu0 0
  %60 = vmatprep.subr.bf16.mxu0 0
  %61 = vmatpush1.bf16.msra.mxu0 0
  %62 = vmatprep.subr.bf16.mxu0 0
  %63 = vmatpush1.bf16.msra.mxu0 0
  %64 = vmatprep.subr.bf16.mxu0 0
  %65 = vmatpush1.bf16.msra.mxu0 0
  %66 = vmatprep.subr.bf16.mxu0 0
  %67 = vmatpush1.bf16.msra.mxu0 %v47
  %68 = vmatprep.subr.bf16.mxu0 0
  %69 = vmatpush1.bf16.msra.mxu0 %v46
  %70 = vmatprep.subr.bf16.mxu0 0
  %71 = vmatpush2.bf16.msra.mxu0 0
  %72 = vmatprep.subr.bf16.mxu0 0
  %73 = vmatpush2.bf16.msra.mxu0 0
  %74 = vmatprep.subr.bf16.mxu0 0
  %75 = vmatpush2.bf16.msra.mxu0 0
  %76 = vmatprep.subr.bf16.mxu0 0
  %77 = vmatpush2.bf16.msra.mxu0 0
  %78 = vmatprep.subr.bf16.mxu0 0
  %79 = vmatpush2.bf16.msra.mxu0 0
  %80 = vmatprep.subr.bf16.mxu0 0
  %81 = vmatpush2.bf16.msra.mxu0 0
  %82 = vmatprep.subr.bf16.mxu0 0
  %83 = vmatpush2.bf16.msra.mxu0 0
  %84 = vmatprep.subr.bf16.mxu0 0
  %85 = vmatpush2.bf16.msra.mxu0 0
  %86 = vmatprep.mubr.bf16.mxu0 0
  %87 = vmatmul.mubr.bf16.gmra.mxu0 %v52
  %v88 = vpop.f32.mrf.mxu0
  %v89 = vadd.f32 0.0, %v88
  %v90 = vpop.f32.mrf.mxu0
  %v91 = vpop.f32.mrf.mxu0
  %v92 = vadd.f32 0.0, %v91
  %v93 = vpop.f32.mrf.mxu0
  %94 = vdwg.mxu0
  %v95 = vadd.f32 %v25, %v89
  %v96 = vadd.f32 %v26, %v92
  %97 = vst.msk [vmem:[#allocation2] sm:$0xff] %vm50, %v95
  %98 = vst.msk [vmem:[#allocation2 + $0x8] sm:$0xff] %vm50, %v96
  // Predicated region
  $region22: #{srclip_forward.117} parent=0 // pred_check
    %p99 = pneg %p18
  $region23: #{srclip_forward.117} parent=0 // pred_check_branch
    %101 = sbr.rel (%p99) target = $region25
  $region24: #{srclip_forward.117} parent=0 // pred_region
    %v102 = vld [vmem:[#allocation2] sm:$0xff]
    %v103 = vld [vmem:[#allocation2 + $0x8] sm:$0xff]
    %v104 = vld [vmem:[%s2] sm:$0x1]
    %v106 = vlaneseq
    %v107 = vshrl.u32 %v106, 7
    %v108 = vsub.s32 0, %v107
    %v109 = vrot.slane %v104, %v108
    %v111 = vadd.f32 %v102, %v109
    %v112 = vadd.f32 %v103, %v109
    %v113 = vld [vmem:[%s3] sm:$0xff]
    %v114 = vld [vmem:[%s3 + $0x8] sm:$0xff]
    %v115 = vadd.f32 %v111, %v113
    %v116 = vadd.f32 %v112, %v114
    %117 = vst.msk [vmem:[%s4] sm:$0xff] %vm50, %v115
    %118 = vst.msk [vmem:[%s4 + $0x8] sm:$0xff] %vm50, %v116
  $region25: #{srclip_forward.117} parent=0 // pred_fallthru
    _
  // Predicated region
  $region26: #{srclip_forward.117} parent=0 // pred_check
    _
  $region27: #{srclip_forward.117} parent=0 // pred_check_branch
    %120 = sbr.rel (0) target = $region29
  $region28: #{srclip_forward.117} parent=0 // pred_region
    _
  $region29: #{srclip_forward.117} parent=0 // pred_fallthru
    _
  // Predicated region
  $region30: #{srclip_forward.117} parent=0 // pred_check
    _
  $region31: #{srclip_forward.117} parent=0 // pred_check_branch
    %122 = sbr.rel (0) target = $region33
  $region32: #{srclip_forward.117} parent=0 // pred_region
    _
  $region33: #{srclip_forward.117} parent=0 // pred_fallthru
    _

// kernel: srclip_forward.119
$region0: #{srclip_forward.119}
  #allocation0 [shape = 'u32[]', space=smem, size = 0x4, offset = 0x4, fixed_abs, tag = 'smem constant byte address 0x4 - core index']
  #allocation1 [shape = 'u32[144,128]{1,0:T(1,128)}', space=vmem, size = 0x12000, scoped, tag = 'internal scratch']
  #allocation2 [shape = 'f32[16,128]{1,0:T(8,128)}', space=vmem, size = 0x2000, scoped, tag = 'scratch operand']
  %s0 = inlined_call_operand.vmem [shape: bf16[16,32], index: 0, kind: input, shape index: {}]
  %s1 = inlined_call_operand.vmem [shape: bf16[32,128], index: 1, kind: input, shape index: {}]
  %s2 = inlined_call_operand.vmem [shape: f32[1,128], index: 2, kind: input, shape index: {}]
  %s3 = inlined_call_operand.vmem [shape: bf16[16,128], index: 3, kind: output, shape index: {}]
  %s4 = sld [smem:[#allocation0]]
  $region30: #{srclip_forward.119} parent=0
    _
  %s6 = ssub.s32 1, %s4
  %s7 = scalar_select 0, %s6, %s4
  // Predicated region
  $region2: #{srclip_forward.119} parent=0 // pred_check
    _
  $region3: #{srclip_forward.119} parent=0 // pred_check_branch
    %9 = sbr.rel (0) target = $region5
  $region4: #{srclip_forward.119} parent=0 // pred_region
    _
  $region5: #{srclip_forward.119} parent=0 // pred_fallthru
    _
  // Predicated region
  $region6: #{srclip_forward.119} parent=0 // pred_check
    _
  $region7: #{srclip_forward.119} parent=0 // pred_check_branch
    %11 = sbr.rel (0) target = $region9
  $region8: #{srclip_forward.119} parent=0 // pred_region
    _
  $region9: #{srclip_forward.119} parent=0 // pred_fallthru
    _
  // Predicated region
  $region10: #{srclip_forward.119} parent=0 // pred_check
    _
  $region11: #{srclip_forward.119} parent=0 // pred_check_branch
    %13 = sbr.rel (0) target = $region13
  $region12: #{srclip_forward.119} parent=0 // pred_region
    _
  $region13: #{srclip_forward.119} parent=0 // pred_fallthru
    _
  %p15 = scmp.eq.s32.totalorder 0, 0
  // Predicated region
  $region14: #{srclip_forward.119} parent=0 // pred_check
    %p16 = pneg %p15
  $region15: #{srclip_forward.119} parent=0 // pred_check_branch
    %18 = sbr.rel (%p16) target = $region17
  $region16: #{srclip_forward.119} parent=0 // pred_region
    %19 = vst [vmem:[#allocation2] sm:$0xff] 0.0
    %20 = vst [vmem:[#allocation2 + $0x8] sm:$0xff] 0.0
  $region17: #{srclip_forward.119} parent=0 // pred_fallthru
    _
  %v21 = vld [vmem:[#allocation2] sm:$0xff]
  %v22 = vld [vmem:[#allocation2 + $0x8] sm:$0xff]
  %v23 = vld [vmem:[%s0] sm:$0xf]
  %v24 = vld [vmem:[%s0 + $0x4] sm:$0xf]
  %v25 = vld [vmem:[%s1] sm:$0xf]
  %v26 = vld [vmem:[%s1 + $0x4] sm:$0xf]
  %v27 = vld [vmem:[%s1 + $0x8] sm:$0xf]
  %v28 = vld [vmem:[%s1 + $0xc] sm:$0xf]
  %v31 = vunpack.c.l.b16 %v23
  %v32 = vunpack.c.l.b16 %v24
  %v33 = vpack.c.b16 %v32, %v31
  %v38 = vunpack.c.l.b16 %v25
  %v39 = vunpack.c.l.b16 %v26
  %v40 = vunpack.c.l.b16 %v27
  %v41 = vunpack.c.l.b16 %v28
  %v42 = vpack.c.b16 %v39, %v38
  %v43 = vpack.c.b16 %v41, %v40
  %vm46 = vcmask 261120
  %v48 = vsel %vm46, %v33, 0
  %50 = vmatprep.subr.bf16.mxu0 0
  %51 = vmatpush1.bf16.msra.mxu0 0
  %52 = vmatprep.subr.bf16.mxu0 0
  %53 = vmatpush1.bf16.msra.mxu0 0
  %54 = vmatprep.subr.bf16.mxu0 0
  %55 = vmatpush1.bf16.msra.mxu0 0
  %56 = vmatprep.subr.bf16.mxu0 0
  %57 = vmatpush1.bf16.msra.mxu0 0
  %58 = vmatprep.subr.bf16.mxu0 0
  %59 = vmatpush1.bf16.msra.mxu0 0
  %60 = vmatprep.subr.bf16.mxu0 0
  %61 = vmatpush1.bf16.msra.mxu0 0
  %62 = vmatprep.subr.bf16.mxu0 0
  %63 = vmatpush1.bf16.msra.mxu0 %v43
  %64 = vmatprep.subr.bf16.mxu0 0
  %65 = vmatpush1.bf16.msra.mxu0 %v42
  %66 = vmatprep.subr.bf16.mxu0 0
  %67 = vmatpush2.bf16.msra.mxu0 0
  %68 = vmatprep.subr.bf16.mxu0 0
  %69 = vmatpush2.bf16.msra.mxu0 0
  %70 = vmatprep.subr.bf16.mxu0 0
  %71 = vmatpush2.bf16.msra.mxu0 0
  %72 = vmatprep.subr.bf16.mxu0 0
  %73 = vmatpush2.bf16.msra.mxu0 0
  %74 = vmatprep.subr.bf16.mxu0 0
  %75 = vmatpush2.bf16.msra.mxu0 0
  %76 = vmatprep.subr.bf16.mxu0 0
  %77 = vmatpush2.bf16.msra.mxu0 0
  %78 = vmatprep.subr.bf16.mxu0 0
  %79 = vmatpush2.bf16.msra.mxu0 0
  %80 = vmatprep.subr.bf16.mxu0 0
  %81 = vmatpush2.bf16.msra.mxu0 0
  %82 = vmatprep.mubr.bf16.mxu0 0
  %83 = vmatmul.mubr.bf16.gmra.mxu0 %v48
  %v84 = vpop.f32.mrf.mxu0
  %v85 = vadd.f32 0.0, %v84
  %v86 = vpop.f32.mrf.mxu0
  %v87 = vpop.f32.mrf.mxu0
  %v88 = vadd.f32 0.0, %v87
  %v89 = vpop.f32.mrf.mxu0
  %90 = vdwg.mxu0
  %v91 = vadd.f32 %v21, %v85
  %v92 = vadd.f32 %v22, %v88
  %93 = vst [vmem:[#allocation2] sm:$0xff] %v91
  %94 = vst [vmem:[#allocation2 + $0x8] sm:$0xff] %v92
  // Predicated region
  $region18: #{srclip_forward.119} parent=0 // pred_check
    %p95 = pneg %p15
  $region19: #{srclip_forward.119} parent=0 // pred_check_branch
    %97 = sbr.rel (%p95) target = $region21
  $region20: #{srclip_forward.119} parent=0 // pred_region
    %v98 = vld [vmem:[#allocation2] sm:$0xff]
    %v99 = vld [vmem:[#allocation2 + $0x8] sm:$0xff]
    %v100 = vld [vmem:[%s2] sm:$0x1]
    %v102 = vlaneseq
    %v103 = vshrl.u32 %v102, 7
    %v104 = vsub.s32 0, %v103
    %v105 = vrot.slane %v100, %v104
    %v107 = vadd.f32 %v98, %v105
    %v108 = vadd.f32 %v99, %v105
    %v109 = vmul.f32 %v107, 0.70710677
    %v110 = vmul.f32 %v108, 0.70710677
    %v111 = vand.u32 2147483647, %v109
    %v112 = vand.u32 2147483647, %v110
    %v113 = vmul.f32 %v111, 0.3275911
    %v114 = vmul.f32 %v112, 0.3275911
    %v115 = vadd.f32 %v113, 1.0
    %v116 = vadd.f32 %v114, 1.0
    %v117 = vrcp.pop %v115
    %v118 = vrcp.pop %v116
    %v119 = vmul.f32 %v117, 1.0614054
    %v120 = vmul.f32 %v118, 1.0614054
    %v121 = vadd.f32 %v119, -1.4531521
    %v122 = vadd.f32 %v120, -1.4531521
    %v123 = vmul.f32 %v121, %v117
    %v124 = vmul.f32 %v122, %v118
    %v125 = vadd.f32 %v123, 1.4214138
    %v126 = vadd.f32 %v124, 1.4214138
    %v127 = vmul.f32 %v125, %v117
    %v128 = vmul.f32 %v126, %v118
    %v129 = vadd.f32 %v127, -0.28449672
    %v130 = vadd.f32 %v128, -0.28449672
    %v131 = vmul.f32 %v129, %v117
    %v132 = vmul.f32 %v130, %v118
    %v133 = vadd.f32 %v131, 0.2548296
    %v134 = vadd.f32 %v132, 0.2548296
    %v135 = vmul.f32 %v133, %v117
    %v136 = vmul.f32 %v134, %v118
    %v137 = vsub.f32 0.0, %v111
    %v138 = vsub.f32 0.0, %v112
    %v139 = vmul.f32 %v137, %v111
    %v140 = vmul.f32 %v138, %v112
    %v141 = vmul.f32 %v139, 1.442695
    %v142 = vpow.pop %v141
    %v143 = vmul.f32 %v140, 1.442695
    %v144 = vpow.pop %v143
    %v145 = vmul.f32 %v135, %v142
    %v146 = vmul.f32 %v136, %v144
    %v147 = vsub.f32 1.0, %v145
    %v148 = vsub.f32 1.0, %v146
    %vm149 = vcmp.ge.f32.partialorder %v109, 0.0
    %vm150 = vcmp.ge.f32.partialorder %v110, 0.0
    %v151 = vsub.f32 0.0, %v147
    %v152 = vsub.f32 0.0, %v148
    %v153 = vsel %vm149, %v147, %v151
    %v154 = vsel %vm150, %v148, %v152
    %v155 = vmul.f32 %v107, 0.5
    %v156 = vmul.f32 %v108, 0.5
    %v157 = vadd.f32 %v153, 1.0
    %v158 = vadd.f32 %v154, 1.0
    %v159 = vmul.f32 %v155, %v157
    %v160 = vmul.f32 %v156, %v158
    %v161 = vpack.c.bf16 %v160, %v159
    %v163 = vunpack.c.l.b16 %v161
    %v164 = vunpack.c.h.b16 %v161
    %v165 = vpack.c.b16 %v163, %v163
    %v166 = vpack.c.b16 %v164, %v164
    %169 = vst [vmem:[%s3] sm:$0xf] %v165
    %170 = vst [vmem:[%s3 + $0x4] sm:$0xf] %v166
  $region21: #{srclip_forward.119} parent=0 // pred_fallthru
    _
  // Predicated region
  $region22: #{srclip_forward.119} parent=0 // pred_check
    _
  $region23: #{srclip_forward.119} parent=0 // pred_check_branch
    %172 = sbr.rel (0) target = $region25
  $region24: #{srclip_forward.119} parent=0 // pred_region
    _
  $region25: #{srclip_forward.119} parent=0 // pred_fallthru
    _
  // Predicated region
  $region26: #{srclip_forward.119} parent=0 // pred_check
    _
  $region27: #{srclip_forward.119} parent=0 // pred_check_branch
    %174 = sbr.rel (0) target = $region29
  $region28: #{srclip_forward.119} parent=0 // pred_region
    _
  $region29: #{srclip_forward.119} parent=0 // pred_fallthru
    _

// kernel: srclip_forward.120
$region0: #{srclip_forward.120}
  #allocation0 [shape = 'u32[]', space=smem, size = 0x4, offset = 0x4, fixed_abs, tag = 'smem constant byte address 0x4 - core index']
  #allocation1 [shape = 'u32[144,128]{1,0:T(1,128)}', space=vmem, size = 0x12000, scoped, tag = 'internal scratch']
  #allocation2 [shape = 'f32[16,32]{1,0:T(8,128)}', space=vmem, size = 0x2000, scoped, tag = 'scratch operand']
  %s0 = inlined_call_operand.vmem [shape: bf16[16,128], index: 0, kind: input, shape index: {}]
  %s1 = inlined_call_operand.vmem [shape: bf16[128,32], index: 1, kind: input, shape index: {}]
  %s2 = inlined_call_operand.vmem [shape: f32[1,32], index: 2, kind: input, shape index: {}]
  %s3 = inlined_call_operand.vmem [shape: f32[16,32], index: 3, kind: input, shape index: {}]
  %s4 = inlined_call_operand.vmem [shape: f32[16,32], index: 4, kind: output, shape index: {}]
  %s5 = sld [smem:[#allocation0]]
  $region34: #{srclip_forward.120} parent=0
    _
  %s7 = ssub.s32 1, %s5
  %s8 = scalar_select 0, %s7, %s5
  // Predicated region
  $region2: #{srclip_forward.120} parent=0 // pred_check
    _
  $region3: #{srclip_forward.120} parent=0 // pred_check_branch
    %10 = sbr.rel (0) target = $region5
  $region4: #{srclip_forward.120} parent=0 // pred_region
    _
  $region5: #{srclip_forward.120} parent=0 // pred_fallthru
    _
  // Predicated region
  $region6: #{srclip_forward.120} parent=0 // pred_check
    _
  $region7: #{srclip_forward.120} parent=0 // pred_check_branch
    %12 = sbr.rel (0) target = $region9
  $region8: #{srclip_forward.120} parent=0 // pred_region
    _
  $region9: #{srclip_forward.120} parent=0 // pred_fallthru
    _
  // Predicated region
  $region10: #{srclip_forward.120} parent=0 // pred_check
    _
  $region11: #{srclip_forward.120} parent=0 // pred_check_branch
    %14 = sbr.rel (0) target = $region13
  $region12: #{srclip_forward.120} parent=0 // pred_region
    _
  $region13: #{srclip_forward.120} parent=0 // pred_fallthru
    _
  // Predicated region
  $region14: #{srclip_forward.120} parent=0 // pred_check
    _
  $region15: #{srclip_forward.120} parent=0 // pred_check_branch
    %16 = sbr.rel (0) target = $region17
  $region16: #{srclip_forward.120} parent=0 // pred_region
    _
  $region17: #{srclip_forward.120} parent=0 // pred_fallthru
    _
  %p18 = scmp.eq.s32.totalorder 0, 0
  // Predicated region
  $region18: #{srclip_forward.120} parent=0 // pred_check
    %p19 = pneg %p18
  $region19: #{srclip_forward.120} parent=0 // pred_check_branch
    %21 = sbr.rel (%p19) target = $region21
  $region20: #{srclip_forward.120} parent=0 // pred_region
    %vm22 = vcmask 261120
    %23 = vst.msk [vmem:[#allocation2] sm:$0xff] %vm22, 0.0
    %24 = vst.msk [vmem:[#allocation2 + $0x8] sm:$0xff] %vm22, 0.0
  $region21: #{srclip_forward.120} parent=0 // pred_fallthru
    _
  %v25 = vld [vmem:[#allocation2] sm:$0xff]
  %v26 = vld [vmem:[#allocation2 + $0x8] sm:$0xff]
  %v27 = vld [vmem:[%s0] sm:$0xf]
  %v28 = vld [vmem:[%s0 + $0x4] sm:$0xf]
  %v29 = vld [vmem:[%s1] sm:$0xf]
  %v30 = vld [vmem:[%s1 + $0x4] sm:$0xf]
  %v31 = vld [vmem:[%s1 + $0x8] sm:$0xf]
  %v32 = vld [vmem:[%s1 + $0xc] sm:$0xf]
  %v33 = vld [vmem:[%s1 + $0x10] sm:$0xf]
  %v34 = vld [vmem:[%s1 + $0x14] sm:$0xf]
  %v35 = vld [vmem:[%s1 + $0x18] sm:$0xf]
  %v36 = vld [vmem:[%s1 + $0x1c] sm:$0xf]
  %v37 = vld [vmem:[%s1 + $0x20] sm:$0xf]
  %v38 = vld [vmem:[%s1 + $0x24] sm:$0xf]
  %v39 = vld [vmem:[%s1 + $0x28] sm:$0xf]
  %v40 = vld [vmem:[%s1 + $0x2c] sm:$0xf]
  %v41 = vld [vmem:[%s1 + $0x30] sm:$0xf]
  %v42 = vld [vmem:[%s1 + $0x34] sm:$0xf]
  %v43 = vld [vmem:[%s1 + $0x38] sm:$0xf]
  %v44 = vld [vmem:[%s1 + $0x3c] sm:$0xf]
  %v47 = vunpack.c.l.b16 %v27
  %v48 = vunpack.c.l.b16 %v28
  %v49 = vpack.c.b16 %v48, %v47
  %v67 = vunpack.c.l.b16 %v29
  %v68 = vunpack.c.l.b16 %v30
  %v69 = vunpack.c.l.b16 %v31
  %v70 = vunpack.c.l.b16 %v32
  %v71 = vunpack.c.l.b16 %v33
  %v72 = vunpack.c.l.b16 %v34
  %v73 = vunpack.c.l.b16 %v35
  %v74 = vunpack.c.l.b16 %v36
  %v75 = vunpack.c.l.b16 %v37
  %v76 = vunpack.c.l.b16 %v38
  %v77 = vunpack.c.l.b16 %v39
  %v78 = vunpack.c.l.b16 %v40
  %v79 = vunpack.c.l.b16 %v41
  %v80 = vunpack.c.l.b16 %v42
  %v81 = vunpack.c.l.b16 %v43
  %v82 = vunpack.c.l.b16 %v44
  %v83 = vpack.c.b16 %v68, %v67
  %v84 = vpack.c.b16 %v70, %v69
  %v85 = vpack.c.b16 %v72, %v71
  %v86 = vpack.c.b16 %v74, %v73
  %v87 = vpack.c.b16 %v76, %v75
  %v88 = vpack.c.b16 %v78, %v77
  %v89 = vpack.c.b16 %v80, %v79
  %v90 = vpack.c.b16 %v82, %v81
  %99 = vmatprep.subr.bf16.mxu0 0
  %100 = vmatpush1.bf16.msra.mxu0 %v90
  %101 = vmatprep.subr.bf16.mxu0 0
  %102 = vmatpush1.bf16.msra.mxu0 %v89
  %103 = vmatprep.subr.bf16.mxu0 0
  %104 = vmatpush1.bf16.msra.mxu0 %v88
  %105 = vmatprep.subr.bf16.mxu0 0
  %106 = vmatpush1.bf16.msra.mxu0 %v87
  %107 = vmatprep.subr.bf16.mxu0 0
  %108 = vmatpush1.bf16.msra.mxu0 %v86
  %109 = vmatprep.subr.bf16.mxu0 0
  %110 = vmatpush1.bf16.msra.mxu0 %v85
  %111 = vmatprep.subr.bf16.mxu0 0
  %112 = vmatpush1.bf16.msra.mxu0 %v84
  %113 = vmatprep.subr.bf16.mxu0 0
  %114 = vmatpush1.bf16.msra.mxu0 %v83
  %115 = vmatprep.subr.bf16.mxu0 0
  %116 = vmatpush2.bf16.msra.mxu0 0
  %117 = vmatprep.subr.bf16.mxu0 0
  %118 = vmatpush2.bf16.msra.mxu0 0
  %119 = vmatprep.subr.bf16.mxu0 0
  %120 = vmatpush2.bf16.msra.mxu0 0
  %121 = vmatprep.subr.bf16.mxu0 0
  %122 = vmatpush2.bf16.msra.mxu0 0
  %123 = vmatprep.subr.bf16.mxu0 0
  %124 = vmatpush2.bf16.msra.mxu0 0
  %125 = vmatprep.subr.bf16.mxu0 0
  %126 = vmatpush2.bf16.msra.mxu0 0
  %127 = vmatprep.subr.bf16.mxu0 0
  %128 = vmatpush2.bf16.msra.mxu0 0
  %129 = vmatprep.subr.bf16.mxu0 0
  %130 = vmatpush2.bf16.msra.mxu0 0
  %131 = vmatprep.mubr.bf16.mxu0 0
  %132 = vmatmul.mubr.bf16.gmra.mxu0 %v49
  %v133 = vpop.f32.mrf.mxu0
  %v134 = vadd.f32 0.0, %v133
  %v135 = vpop.f32.mrf.mxu0
  %v136 = vpop.f32.mrf.mxu0
  %v137 = vadd.f32 0.0, %v136
  %v138 = vpop.f32.mrf.mxu0
  %139 = vdwg.mxu0
  %v140 = vadd.f32 %v25, %v134
  %v141 = vadd.f32 %v26, %v137
  %vm142 = vcmask 261120
  %143 = vst.msk [vmem:[#allocation2] sm:$0xff] %vm142, %v140
  %144 = vst.msk [vmem:[#allocation2 + $0x8] sm:$0xff] %vm142, %v141
  // Predicated region
  $region22: #{srclip_forward.120} parent=0 // pred_check
    %p145 = pneg %p18
  $region23: #{srclip_forward.120} parent=0 // pred_check_branch
    %147 = sbr.rel (%p145) target = $region25
  $region24: #{srclip_forward.120} parent=0 // pred_region
    %v148 = vld [vmem:[#allocation2] sm:$0xff]
    %v149 = vld [vmem:[#allocation2 + $0x8] sm:$0xff]
    %v150 = vld [vmem:[%s2] sm:$0x1]
    %v152 = vlaneseq
    %v153 = vshrl.u32 %v152, 7
    %v154 = vsub.s32 0, %v153
    %v155 = vrot.slane %v150, %v154
    %v157 = vadd.f32 %v148, %v155
    %v158 = vadd.f32 %v149, %v155
    %v159 = vld [vmem:[%s3] sm:$0xff]
    %v160 = vld [vmem:[%s3 + $0x8] sm:$0xff]
    %v161 = vadd.f32 %v157, %v159
    %v162 = vadd.f32 %v158, %v160
    %163 = vst.msk [vmem:[%s4] sm:$0xff] %vm142, %v161
    %164 = vst.msk [vmem:[%s4 + $0x8] sm:$0xff] %vm142, %v162
  $region25: #{srclip_forward.120} parent=0 // pred_fallthru
    _
  // Predicated region
  $region26: #{srclip_forward.120} parent=0 // pred_check
    _
  $region27: #{srclip_forward.120} parent=0 // pred_check_branch
    %166 = sbr.rel (0) target = $region29
  $region28: #{srclip_forward.120} parent=0 // pred_region
    _
  $region29: #{srclip_forward.120} parent=0 // pred_fallthru
    _
  // Predicated region
  $region30: #{srclip_forward.120} parent=0 // pred_check
    _
  $region31: #{srclip_forward.120} parent=0 // pred_check_branch
    %168 = sbr.rel (0) target = $region33
  $region32: #{srclip_forward.120} parent=0 // pred_region
    _
  $region33: #{srclip_forward.120} parent=0 // pred_fallthru
    _

// kernel: srclip_forward.129
$region0: #{srclip_forward.129}
  #allocation0 [shape = 'u32[]', space=smem, size = 0x4, offset = 0x4, fixed_abs, tag = 'smem constant byte address 0x4 - core index']
  #allocation1 [shape = 'u32[144,128]{1,0:T(1,128)}', space=vmem, size = 0x12000, scoped, tag = 'internal scratch']
  #allocation2 [shape = 'f32[2,32]{1,0:T(2,128)}', space=vmem, size = 0x400, scoped, tag = 'scratch operand']
  %s0 = inlined_call_operand.vmem [shape: bf16[2,32], index: 0, kind: input, shape index: {}]
  %s1 = inlined_call_operand.vmem [shape: bf16[32,32], index: 1, kind: input, shape index: {}]
  %s2 = inlined_call_operand.vmem [shape: f32[1,32], index: 2, kind: input, shape index: {}]
  %s3 = inlined_call_operand.vmem [shape: f32[2,32], index: 3, kind: output, shape index: {}]
  %s4 = sld [smem:[#allocation0]]
  $region30: #{srclip_forward.129} parent=0
    _
  %s6 = ssub.s32 1, %s4
  %s7 = scalar_select 0, %s6, %s4
  // Predicated region
  $region2: #{srclip_forward.129} parent=0 // pred_check
    _
  $region3: #{srclip_forward.129} parent=0 // pred_check_branch
    %9 = sbr.rel (0) target = $region5
  $region4: #{srclip_forward.129} parent=0 // pred_region
    _
  $region5: #{srclip_forward.129} parent=0 // pred_fallthru
    _
  // Predicated region
  $region6: #{srclip_forward.129} parent=0 // pred_check
    _
  $region7: #{srclip_forward.129} parent=0 // pred_check_branch
    %11 = sbr.rel (0) target = $region9
  $region8: #{srclip_forward.129} parent=0 // pred_region
    _
  $region9: #{srclip_forward.129} parent=0 // pred_fallthru
    _
  // Predicated region
  $region10: #{srclip_forward.129} parent=0 // pred_check
    _
  $region11: #{srclip_forward.129} parent=0 // pred_check_branch
    %13 = sbr.rel (0) target = $region13
  $region12: #{srclip_forward.129} parent=0 // pred_region
    _
  $region13: #{srclip_forward.129} parent=0 // pred_fallthru
    _
  %p15 = scmp.eq.s32.totalorder 0, 0
  // Predicated region
  $region14: #{srclip_forward.129} parent=0 // pred_check
    %p16 = pneg %p15
  $region15: #{srclip_forward.129} parent=0 // pred_check_branch
    %18 = sbr.rel (%p16) target = $region17
  $region16: #{srclip_forward.129} parent=0 // pred_region
    %vm19 = vcmask 254976
    %20 = vst.msk [vmem:[#allocation2] sm:$0x3] %vm19, 0.0
  $region17: #{srclip_forward.129} parent=0 // pred_fallthru
    _
  %v21 = vld [vmem:[#allocation2] sm:$0x3]
  %v22 = vld [vmem:[%s0] sm:$0x1]
  %v23 = vld [vmem:[%s1] sm:$0xf]
  %v24 = vld [vmem:[%s1 + $0x4] sm:$0xf]
  %v25 = vld [vmem:[%s1 + $0x8] sm:$0xf]
  %v26 = vld [vmem:[%s1 + $0xc] sm:$0xf]
  %v31 = vunpack.c.l.b16 %v23
  %v32 = vunpack.c.l.b16 %v24
  %v33 = vunpack.c.l.b16 %v25
  %v34 = vunpack.c.l.b16 %v26
  %v35 = vpack.c.b16 %v32, %v31
  %v36 = vpack.c.b16 %v34, %v33
  %vm39 = vcmask 261120
  %v41 = vsel %vm39, %v22, 0
  %43 = vmatprep.subr.bf16.mxu0 0
  %44 = vmatpush1.bf16.msra.mxu0 0
  %45 = vmatprep.subr.bf16.mxu0 0
  %46 = vmatpush1.bf16.msra.mxu0 0
  %47 = vmatprep.subr.bf16.mxu0 0
  %48 = vmatpush1.bf16.msra.mxu0 0
  %49 = vmatprep.subr.bf16.mxu0 0
  %50 = vmatpush1.bf16.msra.mxu0 0
  %51 = vmatprep.subr.bf16.mxu0 0
  %52 = vmatpush1.bf16.msra.mxu0 0
  %53 = vmatprep.subr.bf16.mxu0 0
  %54 = vmatpush1.bf16.msra.mxu0 0
  %55 = vmatprep.subr.bf16.mxu0 0
  %56 = vmatpush1.bf16.msra.mxu0 %v36
  %57 = vmatprep.subr.bf16.mxu0 0
  %58 = vmatpush1.bf16.msra.mxu0 %v35
  %59 = vmatprep.subr.bf16.mxu0 0
  %60 = vmatpush2.bf16.msra.mxu0 0
  %61 = vmatprep.subr.bf16.mxu0 0
  %62 = vmatpush2.bf16.msra.mxu0 0
  %63 = vmatprep.subr.bf16.mxu0 0
  %64 = vmatpush2.bf16.msra.mxu0 0
  %65 = vmatprep.subr.bf16.mxu0 0
  %66 = vmatpush2.bf16.msra.mxu0 0
  %67 = vmatprep.subr.bf16.mxu0 0
  %68 = vmatpush2.bf16.msra.mxu0 0
  %69 = vmatprep.subr.bf16.mxu0 0
  %70 = vmatpush2.bf16.msra.mxu0 0
  %71 = vmatprep.subr.bf16.mxu0 0
  %72 = vmatpush2.bf16.msra.mxu0 0
  %73 = vmatprep.subr.bf16.mxu0 0
  %74 = vmatpush2.bf16.msra.mxu0 0
  %75 = vmatprep.mubr.bf16.mxu0 0
  %76 = vmatmul.mubr.bf16.gmra.mxu0 %v41
  %v77 = vpop.f32.mrf.mxu0
  %v78 = vadd.f32 0.0, %v77
  %v79 = vpop.f32.mrf.mxu0
  %v80 = vpop.f32.mrf.mxu0
  %v81 = vpop.f32.mrf.mxu0
  %82 = vdwg.mxu0
  %v83 = vadd.f32 %v21, %v78
  %vm84 = vcmask 254976
  %85 = vst.msk [vmem:[#allocation2] sm:$0x3] %vm84, %v83
  // Predicated region
  $region18: #{srclip_forward.129} parent=0 // pred_check
    %p86 = pneg %p15
  $region19: #{srclip_forward.129} parent=0 // pred_check_branch
    %88 = sbr.rel (%p86) target = $region21
  $region20: #{srclip_forward.129} parent=0 // pred_region
    %v89 = vld [vmem:[#allocation2] sm:$0x3]
    %v90 = vld [vmem:[%s2] sm:$0x1]
    %v92 = vlaneseq
    %v93 = vshrl.u32 %v92, 7
    %v94 = vsub.s32 0, %v93
    %v95 = vrot.slane %v90, %v94
    %v97 = vadd.f32 %v89, %v95
    %98 = vst.msk [vmem:[%s3] sm:$0x3] %vm84, %v97
  $region21: #{srclip_forward.129} parent=0 // pred_fallthru
    _
  // Predicated region
  $region22: #{srclip_forward.129} parent=0 // pred_check
    _
  $region23: #{srclip_forward.129} parent=0 // pred_check_branch
    %100 = sbr.rel (0) target = $region25
  $region24: #{srclip_forward.129} parent=0 // pred_region
    _
  $region25: #{srclip_forward.129} parent=0 // pred_fallthru
    _
  // Predicated region
  $region26: #{srclip_forward.129} parent=0 // pred_check
    _
  $region27: #{srclip_forward.129} parent=0 // pred_check_branch
    %102 = sbr.rel (0) target = $region29
  $region28: #{srclip_forward.129} parent=0 // pred_region
    _
  $region29: #{srclip_forward.129} parent=0 // pred_fallthru
    _

// kernel: srclip_forward.130
$region0: #{srclip_forward.130}
  #allocation0 [shape = 'u32[]', space=smem, size = 0x4, offset = 0x4, fixed_abs, tag = 'smem constant byte address 0x4 - core index']
  #allocation1 [shape = 'u32[144,128]{1,0:T(1,128)}', space=vmem, size = 0x12000, scoped, tag = 'internal scratch']
  %s0 = inlined_call_operand.vmem [shape: f32[2,32], index: 0, kind: input, shape index: {}]
  %s1 = inlined_call_operand.hbm [shape: f32[2,32], index: 1, kind: output, shape index: {}]
  %s2 = sld [smem:[#allocation0]]
  $region14: #{srclip_forward.130} parent=0
    _
  %s4 = ssub.s32 1, %s2
  %s5 = scalar_select 0, %s4, %s2
  $region1: #{srclip_forward.130} parent=0
    #allocation2 [shape = 'u8[1024]{0}', space=vmem, size = 0x400, scoped, tag = 'output window, operand 0, single buffered']
    #allocation3 [shape = 's32[1]{0}', space=sflag, size = 0x4, scoped, tag = 'scoped memory for srclip_forward.130']
    %6 = vsyncpa [#allocation3], 0
    // Predicated region
    $region2: #{srclip_forward.130} parent=1 // pred_check
      _
    $region3: #{srclip_forward.130} parent=1 // pred_check_branch
      %8 = sbr.rel (0) target = $region5
    $region4: #{srclip_forward.130} parent=1 // pred_region
      _
    $region5: #{srclip_forward.130} parent=1 // pred_fallthru
      _
    %v9 = vld [vmem:[%s0] sm:$0x3]
    %v10 = vmul.f32 %v9, %v9
    %vm11 = vcmask 254976
    %v12 = vsel %vm11, %v10, 0.0
    %13 = vadd.xlane.f32.xlu0 %v12
    %v14 = vpop.xlane.xlu0 %13
    %v15 = vrsqrt.pop %v14
    %v16 = vmul.f32 %v14, %v15
    %vm17 = vcmp.eq.f32.partialorder %v14, inf
    %v18 = vsel %vm17, %v14, %v16
    %vm19 = vcmp.eq.f32.partialorder %v14, 0.0
    %v20 = vand.u32 %v14, 2147483648
    %v21 = vsel %vm19, %v20, %v18
    %v22 = vmax.f32 %v21, 1e-12
    %v23 = vrcp.pop %v22
    %v24 = vmul.f32 %v9, %v23
    %25 = vst.msk [vmem:[#allocation2] sm:$0x3] %vm11, %v24
    // Predicated region
    $region6: #{srclip_forward.130} parent=1 // pred_check
      _
    $region7: #{srclip_forward.130} parent=1 // pred_check_branch
      %27 = sbr.rel (0) target = $region9
    $region8: #{srclip_forward.130} parent=1 // pred_region
      %s29 = ssub.s32 32, 32
      %30 = vsyncadd [#allocation3], %s29
      %s32 = sshll.u32 [#allocation2], 4
      %s33 = int_to_ptr.vmem [resolvable:$true] %s32
      %35 = dma.vmem_to_hbm [thread:$0]  %s33, 32, %s1, [#allocation3]
    $region9: #{srclip_forward.130} parent=1 // pred_fallthru
      _
    // Predicated region
    $region10: #{srclip_forward.130} parent=1 // pred_check
      _
    $region11: #{srclip_forward.130} parent=1 // pred_check_branch
      %37 = sbr.rel (0) target = $region13
    $region12: #{srclip_forward.130} parent=1 // pred_region
      %38 = dma.done [#allocation3], 32
    $region13: #{srclip_forward.130} parent=1 // pred_fallthru
      _
    %39 = vsyncpa [#allocation3], 1

// kernel: srclip_forward.75
$region0: #{srclip_forward.75}
  #allocation0 [shape = 'u32[]', space=smem, size = 0x4, offset = 0x4, fixed_abs, tag = 'smem constant byte address 0x4 - core index']
  #allocation1 [shape = 'u32[144,128]{1,0:T(1,128)}', space=vmem, size = 0x12000, scoped, tag = 'internal scratch']
  %s0 = inlined_call_operand.vmem [shape: f32[10,32], index: 0, kind: input, shape index: {}]
  %s1 = inlined_call_operand.vmem [shape: f32[1,32], index: 1, kind: input, shape index: {}]
  %s2 = inlined_call_operand.vmem [shape: f32[1,32], index: 2, kind: input, shape index: {}]
  %s3 = inlined_call_operand.vmem [shape: f32[10,32], index: 3, kind: output, shape index: {}]
  %s4 = sld [smem:[#allocation0]]
  $region22: #{srclip_forward.75} parent=0
    _
  %s6 = ssub.s32 1, %s4
  %s7 = scalar_select 0, %s6, %s4
  // Predicated region
  $region2: #{srclip_forward.75} parent=0 // pred_check
    _
  $region3: #{srclip_forward.75} parent=0 // pred_check_branch
    %9 = sbr.rel (0) target = $region5
  $region4: #{srclip_forward.75} parent=0 // pred_region
    _
  $region5: #{srclip_forward.75} parent=0 // pred_fallthru
    _
  // Predicated region
  $region6: #{srclip_forward.75} parent=0 // pred_check
    _
  $region7: #{srclip_forward.75} parent=0 // pred_check_branch
    %11 = sbr.rel (0) target = $region9
  $region8: #{srclip_forward.75} parent=0 // pred_region
    _
  $region9: #{srclip_forward.75} parent=0 // pred_fallthru
    _
  // Predicated region
  $region10: #{srclip_forward.75} parent=0 // pred_check
    _
  $region11: #{srclip_forward.75} parent=0 // pred_check_branch
    %13 = sbr.rel (0) target = $region13
  $region12: #{srclip_forward.75} parent=0 // pred_region
    _
  $region13: #{srclip_forward.75} parent=0 // pred_fallthru
    _
  %v14 = vld [vmem:[%s0] sm:$0xff]
  %v15 = vld [vmem:[%s0 + $0x8] sm:$0x3]
  %vm16 = vcmask 261120
  %v17 = vsel %vm16, %v14, 0.0
  %18 = vadd.xlane.f32.xlu0 %v17
  %v19 = vpop.xlane.xlu0 %18
  %vm20 = vcmask 254976
  %v21 = vsel %vm20, %v15, 0.0
  %22 = vadd.xlane.f32.xlu0 %v21
  %v23 = vpop.xlane.xlu0 %22
  %v24 = vrcp.pop 32.0
  %v25 = vmul.f32 %v19, %v24
  %v26 = vmul.f32 %v23, %v24
  %v27 = vsub.f32 %v14, %v25
  %v28 = vsub.f32 %v15, %v26
  %v29 = vmul.f32 %v27, %v27
  %v30 = vmul.f32 %v28, %v28
  %v31 = vsel %vm16, %v29, 0.0
  %32 = vadd.xlane.f32.xlu0 %v31
  %v33 = vpop.xlane.xlu0 %32
  %v34 = vsel %vm20, %v30, 0.0
  %35 = vadd.xlane.f32.xlu0 %v34
  %v36 = vpop.xlane.xlu0 %35
  %v37 = vmul.f32 %v33, %v24
  %v38 = vmul.f32 %v36, %v24
  %v39 = vadd.f32 %v37, 1e-05
  %v40 = vadd.f32 %v38, 1e-05
  %v41 = vrsqrt.pop %v39
  %v42 = vrsqrt.pop %v40
  %v43 = vmul.f32 %v27, %v41
  %v44 = vmul.f32 %v28, %v42
  %v45 = vld [vmem:[%s1] sm:$0x1]
  %v47 = vlaneseq
  %v48 = vshrl.u32 %v47, 7
  %v49 = vsub.s32 0, %v48
  %v50 = vrot.slane %v45, %v49
  %v52 = vmul.f32 %v43, %v50
  %v53 = vmul.f32 %v44, %v50
  %v54 = vld [vmem:[%s2] sm:$0x1]
  %v56 = vlaneseq
  %v57 = vshrl.u32 %v56, 7
  %v58 = vsub.s32 0, %v57
  %v59 = vrot.slane %v54, %v58
  %v61 = vadd.f32 %v52, %v59
  %v62 = vadd.f32 %v53, %v59
  %63 = vst.msk [vmem:[%s3] sm:$0xff] %vm16, %v61
  %64 = vst.msk [vmem:[%s3 + $0x8] sm:$0x3] %vm20, %v62
  // Predicated region
  $region14: #{srclip_forward.75} parent=0 // pred_check
    _
  $region15: #{srclip_forward.75} parent=0 // pred_check_branch
    %66 = sbr.rel (0) target = $region17
  $region16: #{srclip_forward.75} parent=0 // pred_region
    _
  $region17: #{srclip_forward.75} parent=0 // pred_fallthru
    _
  // Predicated region
  $region18: #{srclip_forward.75} parent=0 // pred_check
    _
  $region19: #{srclip_forward.75} parent=0 // pred_check_branch
    %68 = sbr.rel (0) target = $region21
  $region20: #{srclip_forward.75} parent=0 // pred_region
    _
  $region21: #{srclip_forward.75} parent=0 // pred_fallthru
    _

// kernel: srclip_forward.76
$region0: #{srclip_forward.76}
  #allocation0 [shape = 'u32[]', space=smem, size = 0x4, offset = 0x4, fixed_abs, tag = 'smem constant byte address 0x4 - core index']
  #allocation1 [shape = 'u32[144,128]{1,0:T(1,128)}', space=vmem, size = 0x12000, scoped, tag = 'internal scratch']
  %s0 = inlined_call_operand.vmem [shape: f32[10,32], index: 0, kind: input, shape index: {}]
  %s1 = inlined_call_operand.vmem [shape: f32[1,32], index: 1, kind: input, shape index: {}]
  %s2 = inlined_call_operand.vmem [shape: f32[1,32], index: 2, kind: input, shape index: {}]
  %s3 = inlined_call_operand.vmem [shape: bf16[10,32], index: 3, kind: output, shape index: {}]
  %s4 = sld [smem:[#allocation0]]
  $region22: #{srclip_forward.76} parent=0
    _
  %s6 = ssub.s32 1, %s4
  %s7 = scalar_select 0, %s6, %s4
  // Predicated region
  $region2: #{srclip_forward.76} parent=0 // pred_check
    _
  $region3: #{srclip_forward.76} parent=0 // pred_check_branch
    %9 = sbr.rel (0) target = $region5
  $region4: #{srclip_forward.76} parent=0 // pred_region
    _
  $region5: #{srclip_forward.76} parent=0 // pred_fallthru
    _
  // Predicated region
  $region6: #{srclip_forward.76} parent=0 // pred_check
    _
  $region7: #{srclip_forward.76} parent=0 // pred_check_branch
    %11 = sbr.rel (0) target = $region9
  $region8: #{srclip_forward.76} parent=0 // pred_region
    _
  $region9: #{srclip_forward.76} parent=0 // pred_fallthru
    _
  // Predicated region
  $region10: #{srclip_forward.76} parent=0 // pred_check
    _
  $region11: #{srclip_forward.76} parent=0 // pred_check_branch
    %13 = sbr.rel (0) target = $region13
  $region12: #{srclip_forward.76} parent=0 // pred_region
    _
  $region13: #{srclip_forward.76} parent=0 // pred_fallthru
    _
  %v14 = vld [vmem:[%s0] sm:$0xff]
  %v15 = vld [vmem:[%s0 + $0x8] sm:$0x3]
  %vm16 = vcmask 261120
  %v17 = vsel %vm16, %v14, 0.0
  %18 = vadd.xlane.f32.xlu0 %v17
  %v19 = vpop.xlane.xlu0 %18
  %vm20 = vcmask 254976
  %v21 = vsel %vm20, %v15, 0.0
  %22 = vadd.xlane.f32.xlu0 %v21
  %v23 = vpop.xlane.xlu0 %22
  %v24 = vrcp.pop 32.0
  %v25 = vmul.f32 %v19, %v24
  %v26 = vmul.f32 %v23, %v24
  %v27 = vsub.f32 %v14, %v25
  %v28 = vsub.f32 %v15, %v26
  %v29 = vmul.f32 %v27, %v27
  %v30 = vmul.f32 %v28, %v28
  %v31 = vsel %vm16, %v29, 0.0
  %32 = vadd.xlane.f32.xlu0 %v31
  %v33 = vpop.xlane.xlu0 %32
  %v34 = vsel %vm20, %v30, 0.0
  %35 = vadd.xlane.f32.xlu0 %v34
  %v36 = vpop.xlane.xlu0 %35
  %v37 = vmul.f32 %v33, %v24
  %v38 = vmul.f32 %v36, %v24
  %v39 = vadd.f32 %v37, 1e-05
  %v40 = vadd.f32 %v38, 1e-05
  %v41 = vrsqrt.pop %v39
  %v42 = vrsqrt.pop %v40
  %v43 = vmul.f32 %v27, %v41
  %v44 = vmul.f32 %v28, %v42
  %v45 = vld [vmem:[%s1] sm:$0x1]
  %v47 = vlaneseq
  %v48 = vshrl.u32 %v47, 7
  %v49 = vsub.s32 0, %v48
  %v50 = vrot.slane %v45, %v49
  %v52 = vmul.f32 %v43, %v50
  %v53 = vmul.f32 %v44, %v50
  %v54 = vld [vmem:[%s2] sm:$0x1]
  %v56 = vlaneseq
  %v57 = vshrl.u32 %v56, 7
  %v58 = vsub.s32 0, %v57
  %v59 = vrot.slane %v54, %v58
  %v61 = vadd.f32 %v52, %v59
  %v62 = vadd.f32 %v53, %v59
  %v63 = vpack.c.bf16 %v62, %v61
  %v65 = vunpack.c.l.b16 %v63
  %v66 = vunpack.c.h.b16 %v63
  %v67 = vpack.c.b16 %v65, %v65
  %v68 = vpack.c.b16 %v66, %v66
  %vm71 = vcmask 257024
  %72 = vst.msk [vmem:[%s3] sm:$0xf] %vm71, %v67
  %vm73 = vcmask 253952
  %74 = vst.msk [vmem:[%s3 + $0x4] sm:$0x1] %vm73, %v68
  // Predicated region
  $region14: #{srclip_forward.76} parent=0 // pred_check
    _
  $region15: #{srclip_forward.76} parent=0 // pred_check_branch
    %76 = sbr.rel (0) target = $region17
  $region16: #{srclip_forward.76} parent=0 // pred_region
    _
  $region17: #{srclip_forward.76} parent=0 // pred_fallthru
    _
  // Predicated region
  $region18: #{srclip_forward.76} parent=0 // pred_check
    _
  $region19: #{srclip_forward.76} parent=0 // pred_check_branch
    %78 = sbr.rel (0) target = $region21
  $region20: #{srclip_forward.76} parent=0 // pred_region
    _
  $region21: #{srclip_forward.76} parent=0 // pred_fallthru
    _

// kernel: srclip_forward.74
$region0: #{srclip_forward.74}
  #allocation0 [shape = 'u32[]', space=smem, size = 0x4, offset = 0x4, fixed_abs, tag = 'smem constant byte address 0x4 - core index']
  #allocation1 [shape = 'u32[144,128]{1,0:T(1,128)}', space=vmem, size = 0x12000, scoped, tag = 'internal scratch']
  #allocation2 [shape = 'f32[8,32]{1,0:T(8,128)}', space=vmem, size = 0x1000, scoped, tag = 'scratch operand']
  %s0 = inlined_call_operand.vmem [shape: bf16[8,192], index: 0, kind: input, shape index: {}]
  %s1 = inlined_call_operand.vmem [shape: bf16[192,32], index: 1, kind: input, shape index: {}]
  %s2 = inlined_call_operand.vmem [shape: f32[1,32], index: 2, kind: input, shape index: {}]
  %s3 = inlined_call_operand.vmem [shape: f32[8,32], index: 3, kind: output, shape index: {}]
  %s4 = sld [smem:[#allocation0]]
  $region30: #{srclip_forward.74} parent=0
    _
  %s6 = ssub.s32 1, %s4
  %s7 = scalar_select 0, %s6, %s4
  // Predicated region
  $region2: #{srclip_forward.74} parent=0 // pred_check
    _
  $region3: #{srclip_forward.74} parent=0 // pred_check_branch
    %9 = sbr.rel (0) target = $region5
  $region4: #{srclip_forward.74} parent=0 // pred_region
    _
  $region5: #{srclip_forward.74} parent=0 // pred_fallthru
    _
  // Predicated region
  $region6: #{srclip_forward.74} parent=0 // pred_check
    _
  $region7: #{srclip_forward.74} parent=0 // pred_check_branch
    %11 = sbr.rel (0) target = $region9
  $region8: #{srclip_forward.74} parent=0 // pred_region
    _
  $region9: #{srclip_forward.74} parent=0 // pred_fallthru
    _
  // Predicated region
  $region10: #{srclip_forward.74} parent=0 // pred_check
    _
  $region11: #{srclip_forward.74} parent=0 // pred_check_branch
    %13 = sbr.rel (0) target = $region13
  $region12: #{srclip_forward.74} parent=0 // pred_region
    _
  $region13: #{srclip_forward.74} parent=0 // pred_fallthru
    _
  %p15 = scmp.eq.s32.totalorder 0, 0
  // Predicated region
  $region14: #{srclip_forward.74} parent=0 // pred_check
    %p16 = pneg %p15
  $region15: #{srclip_forward.74} parent=0 // pred_check_branch
    %18 = sbr.rel (%p16) target = $region17
  $region16: #{srclip_forward.74} parent=0 // pred_region
    %vm19 = vcmask 261120
    %20 = vst.msk [vmem:[#allocation2] sm:$0xff] %vm19, 0.0
  $region17: #{srclip_forward.74} parent=0 // pred_fallthru
    _
  %v21 = vld [vmem:[#allocation2] sm:$0xff]
  %v22 = vld [vmem:[%s0] sm:$0xff]
  %v23 = vld [vmem:[%s1] sm:$0xf]
  %v24 = vld [vmem:[%s1 + $0x4] sm:$0xf]
  %v25 = vld [vmem:[%s1 + $0x8] sm:$0xf]
  %v26 = vld [vmem:[%s1 + $0xc] sm:$0xf]
  %v27 = vld [vmem:[%s1 + $0x10] sm:$0xf]
  %v28 = vld [vmem:[%s1 + $0x14] sm:$0xf]
  %v29 = vld [vmem:[%s1 + $0x18] sm:$0xf]
  %v30 = vld [vmem:[%s1 + $0x1c] sm:$0xf]
  %v31 = vld [vmem:[%s1 + $0x20] sm:$0xf]
  %v32 = vld [vmem:[%s1 + $0x24] sm:$0xf]
  %v33 = vld [vmem:[%s1 + $0x28] sm:$0xf]
  %v34 = vld [vmem:[%s1 + $0x2c] sm:$0xf]
  %v35 = vld [vmem:[%s1 + $0x30] sm:$0xf]
  %v36 = vld [vmem:[%s1 + $0x34] sm:$0xf]
  %v37 = vld [vmem:[%s1 + $0x38] sm:$0xf]
  %v38 = vld [vmem:[%s1 + $0x3c] sm:$0xf]
  %v39 = vld [vmem:[%s1 + $0x40] sm:$0xf]
  %v40 = vld [vmem:[%s1 + $0x44] sm:$0xf]
  %v41 = vld [vmem:[%s1 + $0x48] sm:$0xf]
  %v42 = vld [vmem:[%s1 + $0x4c] sm:$0xf]
  %v43 = vld [vmem:[%s1 + $0x50] sm:$0xf]
  %v44 = vld [vmem:[%s1 + $0x54] sm:$0xf]
  %v45 = vld [vmem:[%s1 + $0x58] sm:$0xf]
  %v46 = vld [vmem:[%s1 + $0x5c] sm:$0xf]
  %v48 = vunpack.c.l.b16 %v22
  %v49 = vunpack.c.h.b16 %v22
  %v50 = vpack.c.b16 %v48, %v48
  %v51 = vpack.c.b16 %v49, %v49
  %v77 = vunpack.c.l.b16 %v23
  %v78 = vunpack.c.l.b16 %v24
  %v79 = vunpack.c.l.b16 %v25
  %v80 = vunpack.c.l.b16 %v26
  %v81 = vunpack.c.l.b16 %v27
  %v82 = vunpack.c.l.b16 %v28
  %v83 = vunpack.c.l.b16 %v29
  %v84 = vunpack.c.l.b16 %v30
  %v85 = vunpack.c.l.b16 %v31
  %v86 = vunpack.c.l.b16 %v32
  %v87 = vunpack.c.l.b16 %v33
  %v88 = vunpack.c.l.b16 %v34
  %v89 = vunpack.c.l.b16 %v35
  %v90 = vunpack.c.l.b16 %v36
  %v91 = vunpack.c.l.b16 %v37
  %v92 = vunpack.c.l.b16 %v38
  %v93 = vunpack.c.l.b16 %v39
  %v94 = vunpack.c.l.b16 %v40
  %v95 = vunpack.c.l.b16 %v41
  %v96 = vunpack.c.l.b16 %v42
  %v97 = vunpack.c.l.b16 %v43
  %v98 = vunpack.c.l.b16 %v44
  %v99 = vunpack.c.l.b16 %v45
  %v100 = vunpack.c.l.b16 %v46
  %v101 = vpack.c.b16 %v78, %v77
  %v102 = vpack.c.b16 %v80, %v79
  %v103 = vpack.c.b16 %v82, %v81
  %v104 = vpack.c.b16 %v84, %v83
  %v105 = vpack.c.b16 %v86, %v85
  %v106 = vpack.c.b16 %v88, %v87
  %v107 = vpack.c.b16 %v90, %v89
  %v108 = vpack.c.b16 %v92, %v91
  %v109 = vpack.c.b16 %v94, %v93
  %v110 = vpack.c.b16 %v96, %v95
  %v111 = vpack.c.b16 %v98, %v97
  %v112 = vpack.c.b16 %v100, %v99
  %vm125 = vcmask 523264
  %v127 = vsel %vm125, %v51, 0
  %129 = vmatprep.subr.bf16.mxu0 0
  %130 = vmatpush1.bf16.msra.mxu0 %v108
  %131 = vmatprep.subr.bf16.mxu0 0
  %132 = vmatpush1.bf16.msra.mxu0 %v107
  %133 = vmatprep.subr.bf16.mxu0 0
  %134 = vmatpush1.bf16.msra.mxu0 %v106
  %135 = vmatprep.subr.bf16.mxu0 0
  %136 = vmatpush1.bf16.msra.mxu0 %v105
  %137 = vmatprep.subr.bf16.mxu0 0
  %138 = vmatpush1.bf16.msra.mxu0 %v104
  %139 = vmatprep.subr.bf16.mxu0 0
  %140 = vmatpush1.bf16.msra.mxu0 %v103
  %141 = vmatprep.subr.bf16.mxu0 0
  %142 = vmatpush1.bf16.msra.mxu0 %v102
  %143 = vmatprep.subr.bf16.mxu0 0
  %144 = vmatpush1.bf16.msra.mxu0 %v101
  %145 = vmatprep.subr.bf16.mxu0 0
  %146 = vmatpush2.bf16.msra.mxu0 0
  %147 = vmatprep.subr.bf16.mxu0 0
  %148 = vmatpush2.bf16.msra.mxu0 0
  %149 = vmatprep.subr.bf16.mxu0 0
  %150 = vmatpush2.bf16.msra.mxu0 0
  %151 = vmatprep.subr.bf16.mxu0 0
  %152 = vmatpush2.bf16.msra.mxu0 0
  %153 = vmatprep.subr.bf16.mxu0 0
  %154 = vmatpush2.bf16.msra.mxu0 %v112
  %155 = vmatprep.subr.bf16.mxu0 0
  %156 = vmatpush2.bf16.msra.mxu0 %v111
  %157 = vmatprep.subr.bf16.mxu0 0
  %158 = vmatpush2.bf16.msra.mxu0 %v110
  %159 = vmatprep.subr.bf16.mxu0 0
  %160 = vmatpush2.bf16.msra.mxu0 %v109
  %161 = vmatprep.mubr.bf16.mxu0 %v127
  %162 = vmatmul.mubr.bf16.gmra.mxu0 %v50
  %v163 = vpop.f32.mrf.mxu0
  %v164 = vadd.f32 0.0, %v163
  %v165 = vpop.f32.mrf.mxu0
  %v166 = vpop.f32.mrf.mxu0
  %v167 = vpop.f32.mrf.mxu0
  %168 = vdwg.mxu0
  %v169 = vadd.f32 %v21, %v164
  %vm170 = vcmask 261120
  %171 = vst.msk [vmem:[#allocation2] sm:$0xff] %vm170, %v169
  // Predicated region
  $region18: #{srclip_forward.74} parent=0 // pred_check
    %p172 = pneg %p15
  $region19: #{srclip_forward.74} parent=0 // pred_check_branch
    %174 = sbr.rel (%p172) target = $region21
  $region20: #{srclip_forward.74} parent=0 // pred_region
    %v175 = vld [vmem:[#allocation2] sm:$0xff]
    %v176 = vld [vmem:[%s2] sm:$0x1]
    %v178 = vlaneseq
    %v179 = vshrl.u32 %v178, 7
    %v180 = vsub.s32 0, %v179
    %v181 = vrot.slane %v176, %v180
    %v183 = vadd.f32 %v175, %v181
    %184 = vst.msk [vmem:[%s3] sm:$0xff] %vm170, %v183
  $region21: #{srclip_forward.74} parent=0 // pred_fallthru
    _
  // Predicated region
  $region22: #{srclip_forward.74} parent=0 // pred_check
    _
  $region23: #{srclip_forward.74} parent=0 // pred_check_branch
    %186 = sbr.rel (0) target = $region25
  $region24: #{srclip_forward.74} parent=0 // pred_region
    _
  $region25: #{srclip_forward.74} parent=0 // pred_fallthru
    _
  // Predicated region
  $region26: #{srclip_forward.74} parent=0 // pred_check
    _
  $region27: #{srclip_forward.74} parent=0 // pred_check_branch
    %188 = sbr.rel (0) target = $region29
  $region28: #{srclip_forward.74} parent=0 // pred_region
    _
  $region29: #{srclip_forward.74} parent=0 // pred_fallthru
    _

// kernel: srclip_forward.77
$region0: #{srclip_forward.77}
  #allocation0 [shape = 'u32[]', space=smem, size = 0x4, offset = 0x4, fixed_abs, tag = 'smem constant byte address 0x4 - core index']
  #allocation1 [shape = 'u32[144,128]{1,0:T(1,128)}', space=vmem, size = 0x12000, scoped, tag = 'internal scratch']
  #allocation2 [shape = 'f32[10,96]{1,0:T(8,128)}', space=vmem, size = 0x2000, scoped, tag = 'scratch operand']
  %s0 = inlined_call_operand.vmem [shape: bf16[10,32], index: 0, kind: input, shape index: {}]
  %s1 = inlined_call_operand.vmem [shape: bf16[32,96], index: 1, kind: input, shape index: {}]
  %s2 = inlined_call_operand.vmem [shape: f32[1,96], index: 2, kind: input, shape index: {}]
  %s3 = inlined_call_operand.vmem [shape: bf16[10,96], index: 3, kind: output, shape index: {}]
  %s4 = sld [smem:[#allocation0]]
  $region30: #{srclip_forward.77} parent=0
    _
  %s6 = ssub.s32 1, %s4
  %s7 = scalar_select 0, %s6, %s4
  // Predicated region
  $region2: #{srclip_forward.77} parent=0 // pred_check
    _
  $region3: #{srclip_forward.77} parent=0 // pred_check_branch
    %9 = sbr.rel (0) target = $region5
  $region4: #{srclip_forward.77} parent=0 // pred_region
    _
  $region5: #{srclip_forward.77} parent=0 // pred_fallthru
    _
  // Predicated region
  $region6: #{srclip_forward.77} parent=0 // pred_check
    _
  $region7: #{srclip_forward.77} parent=0 // pred_check_branch
    %11 = sbr.rel (0) target = $region9
  $region8: #{srclip_forward.77} parent=0 // pred_region
    _
  $region9: #{srclip_forward.77} parent=0 // pred_fallthru
    _
  // Predicated region
  $region10: #{srclip_forward.77} parent=0 // pred_check
    _
  $region11: #{srclip_forward.77} parent=0 // pred_check_branch
    %13 = sbr.rel (0) target = $region13
  $region12: #{srclip_forward.77} parent=0 // pred_region
    _
  $region13: #{srclip_forward.77} parent=0 // pred_fallthru
    _
  %p15 = scmp.eq.s32.totalorder 0, 0
  // Predicated region
  $region14: #{srclip_forward.77} parent=0 // pred_check
    %p16 = pneg %p15
  $region15: #{srclip_forward.77} parent=0 // pred_check_branch
    %18 = sbr.rel (%p16) target = $region17
  $region16: #{srclip_forward.77} parent=0 // pred_region
    %vm19 = vcmask 785408
    %20 = vst.msk [vmem:[#allocation2] sm:$0xff] %vm19, 0.0
    %vm21 = vcmask 779264
    %22 = vst.msk [vmem:[#allocation2 + $0x8] sm:$0x3] %vm21, 0.0
  $region17: #{srclip_forward.77} parent=0 // pred_fallthru
    _
  %v23 = vld [vmem:[#allocation2] sm:$0xff]
  %v24 = vld [vmem:[#allocation2 + $0x8] sm:$0x3]
  %v25 = vld [vmem:[%s0] sm:$0xf]
  %v26 = vld [vmem:[%s0 + $0x4] sm:$0x1]
  %v27 = vld [vmem:[%s1] sm:$0xf]
  %v28 = vld [vmem:[%s1 + $0x4] sm:$0xf]
  %v29 = vld [vmem:[%s1 + $0x8] sm:$0xf]
  %v30 = vld [vmem:[%s1 + $0xc] sm:$0xf]
  %v33 = vunpack.c.l.b16 %v25
  %v34 = vunpack.c.l.b16 %v26
  %v35 = vpack.c.b16 %v34, %v33
  %v40 = vunpack.c.l.b16 %v27
  %v41 = vunpack.c.l.b16 %v28
  %v42 = vunpack.c.l.b16 %v29
  %v43 = vunpack.c.l.b16 %v30
  %v44 = vpack.c.b16 %v41, %v40
  %v45 = vpack.c.b16 %v43, %v42
  %vm48 = vcmask 261120
  %v50 = vsel %vm48, %v35, 0
  %52 = vmatprep.subr.bf16.mxu0 0
  %53 = vmatpush1.bf16.msra.mxu0 0
  %54 = vmatprep.subr.bf16.mxu0 0
  %55 = vmatpush1.bf16.msra.mxu0 0
  %56 = vmatprep.subr.bf16.mxu0 0
  %57 = vmatpush1.bf16.msra.mxu0 0
  %58 = vmatprep.subr.bf16.mxu0 0
  %59 = vmatpush1.bf16.msra.mxu0 0
  %60 = vmatprep.subr.bf16.mxu0 0
  %61 = vmatpush1.bf16.msra.mxu0 0
  %62 = vmatprep.subr.bf16.mxu0 0
  %63 = vmatpush1.bf16.msra.mxu0 0
  %64 = vmatprep.subr.bf16.mxu0 0
  %65 = vmatpush1.bf16.msra.mxu0 %v45
  %66 = vmatprep.subr.bf16.mxu0 0
  %67 = vmatpush1.bf16.msra.mxu0 %v44
  %68 = vmatprep.subr.bf16.mxu0 0
  %69 = vmatpush2.bf16.msra.mxu0 0
  %70 = vmatprep.subr.bf16.mxu0 0
  %71 = vmatpush2.bf16.msra.mxu0 0
  %72 = vmatprep.subr.bf16.mxu0 0
  %73 = vmatpush2.bf16.msra.mxu0 0
  %74 = vmatprep.subr.bf16.mxu0 0
  %75 = vmatpush2.bf16.msra.mxu0 0
  %76 = vmatprep.subr.bf16.mxu0 0
  %77 = vmatpush2.bf16.msra.mxu0 0
  %78 = vmatprep.subr.bf16.mxu0 0
  %79 = vmatpush2.bf16.msra.mxu0 0
  %80 = vmatprep.subr.bf16.mxu0 0
  %81 = vmatpush2.bf16.msra.mxu0 0
  %82 = vmatprep.subr.bf16.mxu0 0
  %83 = vmatpush2.bf16.msra.mxu0 0
  %84 = vmatprep.mubr.bf16.mxu0 0
  %85 = vmatmul.mubr.bf16.gmra.mxu0 %v50
  %v86 = vpop.f32.mrf.mxu0
  %v87 = vadd.f32 0.0, %v86
  %v88 = vpop.f32.mrf.mxu0
  %v89 = vpop.f32.mrf.mxu0
  %v90 = vadd.f32 0.0, %v89
  %v91 = vpop.f32.mrf.mxu0
  %92 = vdwg.mxu0
  %v93 = vadd.f32 %v23, %v87
  %v94 = vadd.f32 %v24, %v90
  %vm95 = vcmask 785408
  %96 = vst.msk [vmem:[#allocation2] sm:$0xff] %vm95, %v93
  %vm97 = vcmask 779264
  %98 = vst.msk [vmem:[#allocation2 + $0x8] sm:$0x3] %vm97, %v94
  // Predicated region
  $region18: #{srclip_forward.77} parent=0 // pred_check
    %p99 = pneg %p15
  $region19: #{srclip_forward.77} parent=0 // pred_check_branch
    %101 = sbr.rel (%p99) target = $region21
  $region20: #{srclip_forward.77} parent=0 // pred_region
    %v102 = vld [vmem:[#allocation2] sm:$0xff]
    %v103 = vld [vmem:[#allocation2 + $0x8] sm:$0x3]
    %v104 = vld [vmem:[%s2] sm:$0x1]
    %v106 = vlaneseq
    %v107 = vshrl.u32 %v106, 7
    %v108 = vsub.s32 0, %v107
    %v109 = vrot.slane %v104, %v108
    %v111 = vadd.f32 %v102, %v109
    %v112 = vadd.f32 %v103, %v109
    %v113 = vpack.c.bf16 %v112, %v111
    %v115 = vunpack.c.l.b16 %v113
    %v116 = vunpack.c.h.b16 %v113
    %v117 = vpack.c.b16 %v115, %v115
    %v118 = vpack.c.b16 %v116, %v116
    %vm121 = vcmask 781312
    %122 = vst.msk [vmem:[%s3] sm:$0xf] %vm121, %v117
    %vm123 = vcmask 778240
    %124 = vst.msk [vmem:[%s3 + $0x4] sm:$0x1] %vm123, %v118
  $region21: #{srclip_forward.77} parent=0 // pred_fallthru
    _
  // Predicated region
  $region22: #{srclip_forward.77} parent=0 // pred_check
    _
  $region23: #{srclip_forward.77} parent=0 // pred_check_branch
    %126 = sbr.rel (0) target = $region25
  $region24: #{srclip_forward.77} parent=0 // pred_region
    _
  $region25: #{srclip_forward.77} parent=0 // pred_fallthru
    _
  // Predicated region
  $region26: #{srclip_forward.77} parent=0 // pred_check
    _
  $region27: #{srclip_forward.77} parent=0 // pred_check_branch
    %128 = sbr.rel (0) target = $region29
  $region28: #{srclip_forward.77} parent=0 // pred_region
    _
  $region29: #{srclip_forward.77} parent=0 // pred_fallthru
    _

// kernel: srclip_forward.78
$region0: #{srclip_forward.78}
  #allocation0 [shape = 'u32[]', space=smem, size = 0x4, offset = 0x4, fixed_abs, tag = 'smem constant byte address 0x4 - core index']
  #allocation1 [shape = 'u32[144,128]{1,0:T(1,128)}', space=vmem, size = 0x12000, scoped, tag = 'internal scratch']
  %s0 = inlined_call_operand.vmem [shape: bf16[8,5,8], index: 0, kind: input, shape index: {}]
  %s1 = inlined_call_operand.vmem [shape: bf16[8,5,8], index: 1, kind: input, shape index: {}]
  %s2 = inlined_call_operand.vmem [shape: bf16[8,5,8], index: 2, kind: input, shape index: {}]
  %s3 = inlined_call_operand.vmem [shape: bf16[8,5,8], index: 3, kind: output, shape index: {}]
  %s4 = sld [smem:[#allocation0]]
  $region45: #{srclip_forward.78} parent=0
    _
  %s6 = ssub.s32 1, %s4
  %s7 = scalar_select 0, %s6, %s4
  loop: start=0, step=1, limit=10
  $region2: #{srclip_forward.78} parent=0 // loop_pre_header
    _
  $region3: #{srclip_forward.78} parent=0 // loop_header
    %s9 = sphi 0, %s13
    %p10 = scmp.ge.s32.totalorder %s9, 10
    %s19 = sphi 0, %s21
    %s22 = sphi 0, %s19
    %s23 = sphi 0, %s22
    %s39 = sphi 0, %s23
    %s45 = sphi 0, %s47
    %s48 = sphi 0, %s45
    %s49 = sphi 0, %s48
    %s65 = sphi 0, %s49
    %s71 = sphi 0, %s73
    %s74 = sphi 0, %s71
    %s75 = sphi 0, %s74
    %s91 = sphi 0, %s75
    %s97 = sphi 0, %s99
    %s100 = sphi 0, %s97
    %s101 = sphi 0, %s100
    %s117 = sphi 0, %s101
  $region4: #{srclip_forward.78} parent=0 // loop_header_branch
    %12 = sbr.rel (%p10) target = $region8
  $region5: #{srclip_forward.78} parent=0 // loop_body
    %s14 = ssub.s32 %s9, 1
    %s15 = ssub.s32 %s9, 2
    %s16 = sadd.s32 %s9, 1
    %s17 = ssub.s32 %s9, %s16
    %p18 = scmp.eq.s32.totalorder %s17, 0
    %s20 = sadd.s32 %s19, 1
    %s21 = scalar_select %p18, %s19, %s20
    %p24 = pneg %p18
    %p25 = scmp.eq.s32.totalorder %s9, 7
    %p26 = por %p24, %p25
    %p27 = scmp.ne.s32.totalorder %s19, %s22
    %p28 = scmp.eq.s32.totalorder %s9, 0
    %p29 = por %p27, %p28
    %p30 = scmp.ne.s32.totalorder %s19, %s22
    %p31 = scmp.eq.s32.totalorder %s14, 7
    %p32 = por %p30, %p31
    %p33 = scmp.ne.s32.totalorder %s22, %s23
    %p34 = scmp.eq.s32.totalorder %s14, 0
    %p35 = por %p33, %p34
    %p36 = scmp.ne.s32.totalorder %s22, %s23
    %p37 = scmp.eq.s32.totalorder %s15, 7
    %p38 = por %p36, %p37
    %p40 = scmp.ne.s32.totalorder %s23, %s39
    %p41 = scmp.eq.s32.totalorder %s15, 0
    %p42 = por %p40, %p41
    %s43 = ssub.s32 %s9, %s16
    %p44 = scmp.eq.s32.totalorder %s43, 0
    %s46 = sadd.s32 %s45, 1
    %s47 = scalar_select %p44, %s45, %s46
    %p50 = pneg %p44
    %p51 = scmp.eq.s32.totalorder %s9, 7
    %p52 = por %p50, %p51
    %p53 = scmp.ne.s32.totalorder %s45, %s48
    %p54 = scmp.eq.s32.totalorder %s9, 0
    %p55 = por %p53, %p54
    %p56 = scmp.ne.s32.totalorder %s45, %s48
    %p57 = scmp.eq.s32.totalorder %s14, 7
    %p58 = por %p56, %p57
    %p59 = scmp.ne.s32.totalorder %s48, %s49
    %p60 = scmp.eq.s32.totalorder %s14, 0
    %p61 = por %p59, %p60
    %p62 = scmp.ne.s32.totalorder %s48, %s49
    %p63 = scmp.eq.s32.totalorder %s15, 7
    %p64 = por %p62, %p63
    %p66 = scmp.ne.s32.totalorder %s49, %s65
    %p67 = scmp.eq.s32.totalorder %s15, 0
    %p68 = por %p66, %p67
    %s69 = ssub.s32 %s9, %s16
    %p70 = scmp.eq.s32.totalorder %s69, 0
    %s72 = sadd.s32 %s71, 1
    %s73 = scalar_select %p70, %s71, %s72
    %p76 = pneg %p70
    %p77 = scmp.eq.s32.totalorder %s9, 7
    %p78 = por %p76, %p77
    %p79 = scmp.ne.s32.totalorder %s71, %s74
    %p80 = scmp.eq.s32.totalorder %s9, 0
    %p81 = por %p79, %p80
    %p82 = scmp.ne.s32.totalorder %s71, %s74
    %p83 = scmp.eq.s32.totalorder %s14, 7
    %p84 = por %p82, %p83
    %p85 = scmp.ne.s32.totalorder %s74, %s75
    %p86 = scmp.eq.s32.totalorder %s14, 0
    %p87 = por %p85, %p86
    %p88 = scmp.ne.s32.totalorder %s74, %s75
    %p89 = scmp.eq.s32.totalorder %s15, 7
    %p90 = por %p88, %p89
    %p92 = scmp.ne.s32.totalorder %s75, %s91
    %p93 = scmp.eq.s32.totalorder %s15, 0
    %p94 = por %p92, %p93
    %s95 = ssub.s32 %s9, %s16
    %p96 = scmp.eq.s32.totalorder %s95, 0
    %s98 = sadd.s32 %s97, 1
    %s99 = scalar_select %p96, %s97, %s98
    %p102 = pneg %p96
    %p103 = scmp.eq.s32.totalorder %s9, 7
    %p104 = por %p102, %p103
    %p105 = scmp.ne.s32.totalorder %s97, %s100
    %p106 = scmp.eq.s32.totalorder %s9, 0
    %p107 = por %p105, %p106
    %p108 = scmp.ne.s32.totalorder %s97, %s100
    %p109 = scmp.eq.s32.totalorder %s14, 7
    %p110 = por %p108, %p109
    %p111 = scmp.ne.s32.totalorder %s100, %s101
    %p112 = scmp.eq.s32.totalorder %s14, 0
    %p113 = por %p111, %p112
    %p114 = scmp.ne.s32.totalorder %s100, %s101
    %p115 = scmp.eq.s32.totalorder %s15, 7
    %p116 = por %p114, %p115
    %p118 = scmp.ne.s32.totalorder %s101, %s117
    %p119 = scmp.eq.s32.totalorder %s15, 0
    %p120 = por %p118, %p119
    %p121 = scmp.le.s32.totalorder 1, %s9
    %p122 = scmp.lt.s32.totalorder %s9, 9
    %p123 = pnand %p121, %p122
    %p124 = pneg %p123
    // Predicated region
    $region9: #{srclip_forward.78} parent=5 // pred_check
      _
    $region10: #{srclip_forward.78} parent=5 // pred_check_branch
      %126 = sbr.rel (%p123) target = $region12
    $region11: #{srclip_forward.78} parent=5 // pred_region
      %s127 = ssub.s32 %s9, 1
    $region12: #{srclip_forward.78} parent=5 // pred_fallthru
      _
    %p128 = scmp.lt.s32.totalorder %s9, 8
    // Predicated region
    $region13: #{srclip_forward.78} parent=5 // pred_check
      %p129 = pneg %p128
    $region14: #{srclip_forward.78} parent=5 // pred_check_branch
      %131 = sbr.rel (%p129) target = $region16
    $region15: #{srclip_forward.78} parent=5 // pred_region
      // Predicated region
      $region17: #{srclip_forward.78} parent=15 // pred_check
        %p132 = pneg %p29
      $region18: #{srclip_forward.78} parent=15 // pred_check_branch
        %134 = sbr.rel (%p132) target = $region20
      $region19: #{srclip_forward.78} parent=15 // pred_region
        %p135 = scmp.lt.s32.totalorder %s9, 7
        %s136 = scalar_select %p135, %s9, 7
        %s137 = smul.addr %s136, 4
        %s138 = scalar_lea.vmem %s0, %s137
      $region20: #{srclip_forward.78} parent=15 // pred_fallthru
        _
      // Predicated region
      $region21: #{srclip_forward.78} parent=15 // pred_check
        %p139 = pneg %p55
      $region22: #{srclip_forward.78} parent=15 // pred_check_branch
        %141 = sbr.rel (%p139) target = $region24
      $region23: #{srclip_forward.78} parent=15 // pred_region
        %p142 = scmp.lt.s32.totalorder %s9, 7
        %s143 = scalar_select %p142, %s9, 7
        %s144 = smul.addr %s143, 4
        %s145 = scalar_lea.vmem %s1, %s144
      $region24: #{srclip_forward.78} parent=15 // pred_fallthru
        _
      // Predicated region
      $region25: #{srclip_forward.78} parent=15 // pred_check
        %p146 = pneg %p81
      $region26: #{srclip_forward.78} parent=15 // pred_check_branch
        %148 = sbr.rel (%p146) target = $region28
      $region27: #{srclip_forward.78} parent=15 // pred_region
        %p149 = scmp.lt.s32.totalorder %s9, 7
        %s150 = scalar_select %p149, %s9, 7
        %s151 = smul.addr %s150, 4
        %s152 = scalar_lea.vmem %s2, %s151
      $region28: #{srclip_forward.78} parent=15 // pred_fallthru
        _
    $region16: #{srclip_forward.78} parent=5 // pred_fallthru
      _
    %p153 = scmp.le.s32.totalorder 1, %s9
    %p154 = scmp.lt.s32.totalorder %s9, 9
    %p155 = pnand %p153, %p154
    %p156 = pneg %p155
    // Predicated region
    $region29: #{srclip_forward.78} parent=5 // pred_check
      _
    $region30: #{srclip_forward.78} parent=5 // pred_check_branch
      %158 = sbr.rel (%p155) target = $region32
    $region31: #{srclip_forward.78} parent=5 // pred_region
      %s159 = ssub.s32 %s9, 1
      %p160 = scmp.lt.s32.totalorder %s14, 7
      %s161 = scalar_select %p160, %s14, 7
      %s162 = smul.addr %s161, 4
      %s163 = scalar_lea.vmem %s0, %s162
      %p164 = pneg %p35
      %p165 = pneg %p32
      %p166 = scmp.lt.s32.totalorder %s14, 7
      %s167 = scalar_select %p166, %s14, 7
      %s168 = smul.addr %s167, 4
      %s169 = scalar_lea.vmem %s1, %s168
      %p170 = pneg %p61
      %p171 = pneg %p58
      %p172 = scmp.lt.s32.totalorder %s14, 7
      %s173 = scalar_select %p172, %s14, 7
      %s174 = smul.addr %s173, 4
      %s175 = scalar_lea.vmem %s2, %s174
      %p176 = pneg %p87
      %p177 = pneg %p84
      %p178 = pneg %p113
      %p179 = pneg %p110
      %p180 = scmp.lt.s32.totalorder %s14, 7
      %s181 = scalar_select %p180, %s14, 7
      %s182 = smul.addr %s181, 4
      %s183 = scalar_lea.vmem %s3, %s182
      %p184 = scmp.lt.s32.totalorder %s14, 7
      %s185 = scalar_select %p184, %s14, 7
      %s186 = smul.addr %s185, 4
      %s187 = scalar_lea.vmem %s0, %s186
      %p188 = scmp.lt.s32.totalorder %s14, 7
      %s189 = scalar_select %p188, %s14, 7
      %s190 = smul.addr %s189, 4
      %s191 = scalar_lea.vmem %s1, %s190
      %p192 = scmp.lt.s32.totalorder %s14, 7
      %s193 = scalar_select %p192, %s14, 7
      %s194 = smul.addr %s193, 4
      %s195 = scalar_lea.vmem %s2, %s194
      %p196 = scmp.lt.s32.totalorder %s14, 7
      %s197 = scalar_select %p196, %s14, 7
      %s198 = smul.addr %s197, 4
      %s199 = scalar_lea.vmem %s3, %s198
      %v201 = vld [vmem:[%s187] sm:$0x7]
      %v202 = vld [vmem:[%s191] sm:$0x7]
      %v203 = vld [vmem:[%s195] sm:$0x7]
      %vm204 = vcmask 64512
      %v206 = vsel %vm204, %v201, 0
      %v209 = vsel %vm204, %v202, 0
      %211 = vmatprep.subr.bf16.mxu0 0
      %212 = vmatpush1.bf16.xpose.msra.mxu0 0
      %213 = vmatprep.subr.bf16.mxu0 0
      %214 = vmatpush1.bf16.xpose.msra.mxu0 0
      %215 = vmatprep.subr.bf16.mxu0 0
      %216 = vmatpush1.bf16.xpose.msra.mxu0 0
      %217 = vmatprep.subr.bf16.mxu0 0
      %218 = vmatpush1.bf16.xpose.msra.mxu0 0
      %219 = vmatprep.subr.bf16.mxu0 0
      %220 = vmatpush1.bf16.xpose.msra.mxu0 0
      %221 = vmatprep.subr.bf16.mxu0 0
      %222 = vmatpush1.bf16.xpose.msra.mxu0 0
      %223 = vmatprep.subr.bf16.mxu0 0
      %224 = vmatpush1.bf16.xpose.msra.mxu0 0
      %225 = vmatprep.subr.bf16.mxu0 0
      %226 = vmatpush1.bf16.xpose.msra.mxu0 %v209
      %227 = vmatprep.subr.bf16.mxu0 0
      %228 = vmatpush2.bf16.xpose.msra.mxu0 0
      %229 = vmatprep.subr.bf16.mxu0 0
      %230 = vmatpush2.bf16.xpose.msra.mxu0 0
      %231 = vmatprep.subr.bf16.mxu0 0
      %232 = vmatpush2.bf16.xpose.msra.mxu0 0
      %233 = vmatprep.subr.bf16.mxu0 0
      %234 = vmatpush2.bf16.xpose.msra.mxu0 0
      %235 = vmatprep.subr.bf16.mxu0 0
      %236 = vmatpush2.bf16.xpose.msra.mxu0 0
      %237 = vmatprep.subr.bf16.mxu0 0
      %238 = vmatpush2.bf16.xpose.msra.mxu0 0
      %239 = vmatprep.subr.bf16.mxu0 0
      %240 = vmatpush2.bf16.xpose.msra.mxu0 0
      %241 = vmatprep.subr.bf16.mxu0 0
      %242 = vmatpush2.bf16.xpose.msra.mxu0 0
      %243 = vmatprep.mubr.bf16.mxu0 0
      %244 = vmatmul.mubr.bf16.gmra.mxu0 %v206
      %v245 = vpop.f32.mrf.mxu0
      %v246 = vadd.f32 0.0, %v245
      %v247 = vpop.f32.mrf.mxu0
      %v248 = vpop.f32.mrf.mxu0
      %v249 = vpop.f32.mrf.mxu0
      %250 = vdwg.mxu0
      %v251 = vmul.f32 %v246, 0.35355338
      %vm252 = vcmask 36864
      %v253 = vsel %vm252, %v251, -inf
      %254 = vmax.xlane.f32.xlu0 %v253
      %v255 = vpop.xlane.xlu0 %254
      %v256 = vsub.f32 %v251, %v255
      %v257 = vmul.f32 %v256, 1.442695
      %v258 = vpow.pop %v257
      %v259 = vsel %vm252, %v258, 0.0
      %260 = vadd.xlane.f32.xlu0 %v259
      %v261 = vpop.xlane.xlu0 %260
      %v262 = vrcp.pop %v261
      %v263 = vpack.c.bf16 %v258, %v258
      %vm264 = vcmask 39936
      %v266 = vsel %vm264, %v263, 0
      %vm268 = vcmask 1041408
      %vm269 = vcmask 1042432
      %v270 = vsel %vm268, 4294967295, 65535
      %v271 = vsel %vm269, %v270, 0
      %v273 = vand.u32 %v203, %v271
      %275 = vmatprep.subr.bf16.mxu0 0
      %276 = vmatpush1.bf16.msra.mxu0 0
      %277 = vmatprep.subr.bf16.mxu0 0
      %278 = vmatpush1.bf16.msra.mxu0 0
      %279 = vmatprep.subr.bf16.mxu0 0
      %280 = vmatpush1.bf16.msra.mxu0 0
      %281 = vmatprep.subr.bf16.mxu0 0
      %282 = vmatpush1.bf16.msra.mxu0 0
      %283 = vmatprep.subr.bf16.mxu0 0
      %284 = vmatpush1.bf16.msra.mxu0 0
      %285 = vmatprep.subr.bf16.mxu0 0
      %286 = vmatpush1.bf16.msra.mxu0 0
      %287 = vmatprep.subr.bf16.mxu0 0
      %288 = vmatpush1.bf16.msra.mxu0 0
      %289 = vmatprep.subr.bf16.mxu0 0
      %290 = vmatpush1.bf16.msra.mxu0 %v273
      %291 = vmatprep.subr.bf16.mxu0 0
      %292 = vmatpush2.bf16.msra.mxu0 0
      %293 = vmatprep.subr.bf16.mxu0 0
      %294 = vmatpush2.bf16.msra.mxu0 0
      %295 = vmatprep.subr.bf16.mxu0 0
      %296 = vmatpush2.bf16.msra.mxu0 0
      %297 = vmatprep.subr.bf16.mxu0 0
      %298 = vmatpush2.bf16.msra.mxu0 0
      %299 = vmatprep.subr.bf16.mxu0 0
      %300 = vmatpush2.bf16.msra.mxu0 0
      %301 = vmatprep.subr.bf16.mxu0 0
      %302 = vmatpush2.bf16.msra.mxu0 0
      %303 = vmatprep.subr.bf16.mxu0 0
      %304 = vmatpush2.bf16.msra.mxu0 0
      %305 = vmatprep.subr.bf16.mxu0 0
      %306 = vmatpush2.bf16.msra.mxu0 0
      %307 = vmatprep.mubr.bf16.mxu0 0
      %308 = vmatmul.mubr.bf16.gmra.mxu0 %v266
      %v309 = vpop.f32.mrf.mxu0
      %v310 = vadd.f32 0.0, %v309
      %v311 = vpop.f32.mrf.mxu0
      %v312 = vpop.f32.mrf.mxu0
      %v313 = vpop.f32.mrf.mxu0
      %314 = vdwg.mxu0
      %v315 = vmul.f32 %v310, %v262
      %v316 = vpack.c.bf16 %v315, %v315
      %vm317 = vcmask 59392
      %vm318 = vsmask.f32 2304
      %vm319 = vmand %vm317, %vm318
      %v320 = vld [vmem:[%s199] sm:$0x7]
      %v321 = vsel %vm319, %v316, %v320
      %322 = vst [vmem:[%s199] sm:$0x7] %v321
      %p323 = scmp.lt.s32.totalorder %s14, 7
      %s324 = scalar_select %p323, %s14, 7
      %s325 = smul.addr %s324, 4
      %s326 = scalar_lea.vmem %s3, %s325
      // Predicated region
      $region33: #{srclip_forward.78} parent=31 // pred_check
        %p327 = pneg %p110
      $region34: #{srclip_forward.78} parent=31 // pred_check_branch
        %329 = sbr.rel (%p327) target = $region36
      $region35: #{srclip_forward.78} parent=31 // pred_region
        _
      $region36: #{srclip_forward.78} parent=31 // pred_fallthru
        _
    $region32: #{srclip_forward.78} parent=5 // pred_fallthru
      _
    %p330 = scmp.le.s32.totalorder 2, %s9
    // Predicated region
    $region37: #{srclip_forward.78} parent=5 // pred_check
      %p331 = pneg %p330
    $region38: #{srclip_forward.78} parent=5 // pred_check_branch
      %333 = sbr.rel (%p331) target = $region40
    $region39: #{srclip_forward.78} parent=5 // pred_region
      %s334 = ssub.s32 %s9, 2
      // Predicated region
      $region41: #{srclip_forward.78} parent=39 // pred_check
        %p335 = pneg %p116
      $region42: #{srclip_forward.78} parent=39 // pred_check_branch
        %337 = sbr.rel (%p335) target = $region44
      $region43: #{srclip_forward.78} parent=39 // pred_region
        %p338 = scmp.lt.s32.totalorder %s15, 7
        %s339 = scalar_select %p338, %s15, 7
        %s340 = smul.addr %s339, 4
        %s341 = scalar_lea.vmem %s3, %s340
      $region44: #{srclip_forward.78} parent=39 // pred_fallthru
        _
    $region40: #{srclip_forward.78} parent=5 // pred_fallthru
      _
  $region6: #{srclip_forward.78} parent=0 // loop_footer
    %s13 = sadd.s32 1, %s9
  $region7: #{srclip_forward.78} parent=0 // loop_footer_branch
    %8 = sbr.rel target = $region3
  $region8: #{srclip_forward.78} parent=0 // loop_exit
    _

// kernel: srclip_forward.79
$region0: #{srclip_forward.79}
  #allocation0 [shape = 'u32[]', space=smem, size = 0x4, offset = 0x4, fixed_abs, tag = 'smem constant byte address 0x4 - core index']
  #allocation1 [shape = 'u32[144,128]{1,0:T(1,128)}', space=vmem, size = 0x12000, scoped, tag = 'internal scratch']
  #allocation2 [shape = 'f32[10,32]{1,0:T(8,128)}', space=vmem, size = 0x2000, scoped, tag = 'scratch operand']
  %s0 = inlined_call_operand.vmem [shape: bf16[10,32], index: 0, kind: input, shape index: {}]
  %s1 = inlined_call_operand.vmem [shape: bf16[32,32], index: 1, kind: input, shape index: {}]
  %s2 = inlined_call_operand.vmem [shape: f32[1,32], index: 2, kind: input, shape index: {}]
  %s3 = inlined_call_operand.vmem [shape: f32[10,32], index: 3, kind: input, shape index: {}]
  %s4 = inlined_call_operand.vmem [shape: f32[10,32], index: 4, kind: output, shape index: {}]
  %s5 = sld [smem:[#allocation0]]
  $region34: #{srclip_forward.79} parent=0
    _
  %s7 = ssub.s32 1, %s5
  %s8 = scalar_select 0, %s7, %s5
  // Predicated region
  $region2: #{srclip_forward.79} parent=0 // pred_check
    _
  $region3: #{srclip_forward.79} parent=0 // pred_check_branch
    %10 = sbr.rel (0) target = $region5
  $region4: #{srclip_forward.79} parent=0 // pred_region
    _
  $region5: #{srclip_forward.79} parent=0 // pred_fallthru
    _
  // Predicated region
  $region6: #{srclip_forward.79} parent=0 // pred_check
    _
  $region7: #{srclip_forward.79} parent=0 // pred_check_branch
    %12 = sbr.rel (0) target = $region9
  $region8: #{srclip_forward.79} parent=0 // pred_region
    _
  $region9: #{srclip_forward.79} parent=0 // pred_fallthru
    _
  // Predicated region
  $region10: #{srclip_forward.79} parent=0 // pred_check
    _
  $region11: #{srclip_forward.79} parent=0 // pred_check_branch
    %14 = sbr.rel (0) target = $region13
  $region12: #{srclip_forward.79} parent=0 // pred_region
    _
  $region13: #{srclip_forward.79} parent=0 // pred_fallthru
    _
  // Predicated region
  $region14: #{srclip_forward.79} parent=0 // pred_check
    _
  $region15: #{srclip_forward.79} parent=0 // pred_check_branch
    %16 = sbr.rel (0) target = $region17
  $region16: #{srclip_forward.79} parent=0 // pred_region
    _
  $region17: #{srclip_forward.79} parent=0 // pred_fallthru
    _
  %p18 = scmp.eq.s32.totalorder 0, 0
  // Predicated region
  $region18: #{srclip_forward.79} parent=0 // pred_check
    %p19 = pneg %p18
  $region19: #{srclip_forward.79} parent=0 // pred_check_branch
    %21 = sbr.rel (%p19) target = $region21
  $region20: #{srclip_forward.79} parent=0 // pred_region
    %vm22 = vcmask 261120
    %23 = vst.msk [vmem:[#allocation2] sm:$0xff] %vm22, 0.0
    %vm24 = vcmask 254976
    %25 = vst.msk [vmem:[#allocation2 + $0x8] sm:$0x3] %vm24, 0.0
  $region21: #{srclip_forward.79} parent=0 // pred_fallthru
    _
  %v26 = vld [vmem:[#allocation2] sm:$0xff]
  %v27 = vld [vmem:[#allocation2 + $0x8] sm:$0x3]
  %v28 = vld [vmem:[%s0] sm:$0xf]
  %v29 = vld [vmem:[%s0 + $0x4] sm:$0x1]
  %v30 = vld [vmem:[%s1] sm:$0xf]
  %v31 = vld [vmem:[%s1 + $0x4] sm:$0xf]
  %v32 = vld [vmem:[%s1 + $0x8] sm:$0xf]
  %v33 = vld [vmem:[%s1 + $0xc] sm:$0xf]
  %v36 = vunpack.c.l.b16 %v28
  %v37 = vunpack.c.l.b16 %v29
  %v38 = vpack.c.b16 %v37, %v36
  %v43 = vunpack.c.l.b16 %v30
  %v44 = vunpack.c.l.b16 %v31
  %v45 = vunpack.c.l.b16 %v32
  %v46 = vunpack.c.l.b16 %v33
  %v47 = vpack.c.b16 %v44, %v43
  %v48 = vpack.c.b16 %v46, %v45
  %vm51 = vcmask 261120
  %v53 = vsel %vm51, %v38, 0
  %55 = vmatprep.subr.bf16.mxu0 0
  %56 = vmatpush1.bf16.msra.mxu0 0
  %57 = vmatprep.subr.bf16.mxu0 0
  %58 = vmatpush1.bf16.msra.mxu0 0
  %59 = vmatprep.subr.bf16.mxu0 0
  %60 = vmatpush1.bf16.msra.mxu0 0
  %61 = vmatprep.subr.bf16.mxu0 0
  %62 = vmatpush1.bf16.msra.mxu0 0
  %63 = vmatprep.subr.bf16.mxu0 0
  %64 = vmatpush1.bf16.msra.mxu0 0
  %65 = vmatprep.subr.bf16.mxu0 0
  %66 = vmatpush1.bf16.msra.mxu0 0
  %67 = vmatprep.subr.bf16.mxu0 0
  %68 = vmatpush1.bf16.msra.mxu0 %v48
  %69 = vmatprep.subr.bf16.mxu0 0
  %70 = vmatpush1.bf16.msra.mxu0 %v47
  %71 = vmatprep.subr.bf16.mxu0 0
  %72 = vmatpush2.bf16.msra.mxu0 0
  %73 = vmatprep.subr.bf16.mxu0 0
  %74 = vmatpush2.bf16.msra.mxu0 0
  %75 = vmatprep.subr.bf16.mxu0 0
  %76 = vmatpush2.bf16.msra.mxu0 0
  %77 = vmatprep.subr.bf16.mxu0 0
  %78 = vmatpush2.bf16.msra.mxu0 0
  %79 = vmatprep.subr.bf16.mxu0 0
  %80 = vmatpush2.bf16.msra.mxu0 0
  %81 = vmatprep.subr.bf16.mxu0 0
  %82 = vmatpush2.bf16.msra.mxu0 0
  %83 = vmatprep.subr.bf16.mxu0 0
  %84 = vmatpush2.bf16.msra.mxu0 0
  %85 = vmatprep.subr.bf16.mxu0 0
  %86 = vmatpush2.bf16.msra.mxu0 0
  %87 = vmatprep.mubr.bf16.mxu0 0
  %88 = vmatmul.mubr.bf16.gmra.mxu0 %v53
  %v89 = vpop.f32.mrf.mxu0
  %v90 = vadd.f32 0.0, %v89
  %v91 = vpop.f32.mrf.mxu0
  %v92 = vpop.f32.mrf.mxu0
  %v93 = vadd.f32 0.0, %v92
  %v94 = vpop.f32.mrf.mxu0
  %95 = vdwg.mxu0
  %v96 = vadd.f32 %v26, %v90
  %v97 = vadd.f32 %v27, %v93
  %98 = vst.msk [vmem:[#allocation2] sm:$0xff] %vm51, %v96
  %vm99 = vcmask 254976
  %100 = vst.msk [vmem:[#allocation2 + $0x8] sm:$0x3] %vm99, %v97
  // Predicated region
  $region22: #{srclip_forward.79} parent=0 // pred_check
    %p101 = pneg %p18
  $region23: #{srclip_forward.79} parent=0 // pred_check_branch
    %103 = sbr.rel (%p101) target = $region25
  $region24: #{srclip_forward.79} parent=0 // pred_region
    %v104 = vld [vmem:[#allocation2] sm:$0xff]
    %v105 = vld [vmem:[#allocation2 + $0x8] sm:$0x3]
    %v106 = vld [vmem:[%s2] sm:$0x1]
    %v108 = vlaneseq
    %v109 = vshrl.u32 %v108, 7
    %v110 = vsub.s32 0, %v109
    %v111 = vrot.slane %v106, %v110
    %v113 = vadd.f32 %v104, %v111
    %v114 = vadd.f32 %v105, %v111
    %v115 = vld [vmem:[%s3] sm:$0xff]
    %v116 = vld [vmem:[%s3 + $0x8] sm:$0x3]
    %v117 = vadd.f32 %v113, %v115
    %v118 = vadd.f32 %v114, %v116
    %119 = vst.msk [vmem:[%s4] sm:$0xff] %vm51, %v117
    %120 = vst.msk [vmem:[%s4 + $0x8] sm:$0x3] %vm99, %v118
  $region25: #{srclip_forward.79} parent=0 // pred_fallthru
    _
  // Predicated region
  $region26: #{srclip_forward.79} parent=0 // pred_check
    _
  $region27: #{srclip_forward.79} parent=0 // pred_check_branch
    %122 = sbr.rel (0) target = $region29
  $region28: #{srclip_forward.79} parent=0 // pred_region
    _
  $region29: #{srclip_forward.79} parent=0 // pred_fallthru
    _
  // Predicated region
  $region30: #{srclip_forward.79} parent=0 // pred_check
    _
  $region31: #{srclip_forward.79} parent=0 // pred_check_branch
    %124 = sbr.rel (0) target = $region33
  $region32: #{srclip_forward.79} parent=0 // pred_region
    _
  $region33: #{srclip_forward.79} parent=0 // pred_fallthru
    _

// kernel: srclip_forward.82
$region0: #{srclip_forward.82}
  #allocation0 [shape = 'u32[]', space=smem, size = 0x4, offset = 0x4, fixed_abs, tag = 'smem constant byte address 0x4 - core index']
  #allocation1 [shape = 'u32[144,128]{1,0:T(1,128)}', space=vmem, size = 0x12000, scoped, tag = 'internal scratch']
  #allocation2 [shape = 'f32[10,32]{1,0:T(8,128)}', space=vmem, size = 0x2000, scoped, tag = 'scratch operand']
  %s0 = inlined_call_operand.vmem [shape: bf16[10,128], index: 0, kind: input, shape index: {}]
  %s1 = inlined_call_operand.vmem [shape: bf16[128,32], index: 1, kind: input, shape index: {}]
  %s2 = inlined_call_operand.vmem [shape: f32[1,32], index: 2, kind: input, shape index: {}]
  %s3 = inlined_call_operand.vmem [shape: f32[10,32], index: 3, kind: input, shape index: {}]
  %s4 = inlined_call_operand.vmem [shape: f32[10,32], index: 4, kind: output, shape index: {}]
  %s5 = sld [smem:[#allocation0]]
  $region34: #{srclip_forward.82} parent=0
    _
  %s7 = ssub.s32 1, %s5
  %s8 = scalar_select 0, %s7, %s5
  // Predicated region
  $region2: #{srclip_forward.82} parent=0 // pred_check
    _
  $region3: #{srclip_forward.82} parent=0 // pred_check_branch
    %10 = sbr.rel (0) target = $region5
  $region4: #{srclip_forward.82} parent=0 // pred_region
    _
  $region5: #{srclip_forward.82} parent=0 // pred_fallthru
    _
  // Predicated region
  $region6: #{srclip_forward.82} parent=0 // pred_check
    _
  $region7: #{srclip_forward.82} parent=0 // pred_check_branch
    %12 = sbr.rel (0) target = $region9
  $region8: #{srclip_forward.82} parent=0 // pred_region
    _
  $region9: #{srclip_forward.82} parent=0 // pred_fallthru
    _
  // Predicated region
  $region10: #{srclip_forward.82} parent=0 // pred_check
    _
  $region11: #{srclip_forward.82} parent=0 // pred_check_branch
    %14 = sbr.rel (0) target = $region13
  $region12: #{srclip_forward.82} parent=0 // pred_region
    _
  $region13: #{srclip_forward.82} parent=0 // pred_fallthru
    _
  // Predicated region
  $region14: #{srclip_forward.82} parent=0 // pred_check
    _
  $region15: #{srclip_forward.82} parent=0 // pred_check_branch
    %16 = sbr.rel (0) target = $region17
  $region16: #{srclip_forward.82} parent=0 // pred_region
    _
  $region17: #{srclip_forward.82} parent=0 // pred_fallthru
    _
  %p18 = scmp.eq.s32.totalorder 0, 0
  // Predicated region
  $region18: #{srclip_forward.82} parent=0 // pred_check
    %p19 = pneg %p18
  $region19: #{srclip_forward.82} parent=0 // pred_check_branch
    %21 = sbr.rel (%p19) target = $region21
  $region20: #{srclip_forward.82} parent=0 // pred_region
    %vm22 = vcmask 261120
    %23 = vst.msk [vmem:[#allocation2] sm:$0xff] %vm22, 0.0
    %vm24 = vcmask 254976
    %25 = vst.msk [vmem:[#allocation2 + $0x8] sm:$0x3] %vm24, 0.0
  $region21: #{srclip_forward.82} parent=0 // pred_fallthru
    _
  %v26 = vld [vmem:[#allocation2] sm:$0xff]
  %v27 = vld [vmem:[#allocation2 + $0x8] sm:$0x3]
  %v28 = vld [vmem:[%s0] sm:$0xf]
  %v29 = vld [vmem:[%s0 + $0x4] sm:$0x1]
  %v30 = vld [vmem:[%s1] sm:$0xf]
  %v31 = vld [vmem:[%s1 + $0x4] sm:$0xf]
  %v32 = vld [vmem:[%s1 + $0x8] sm:$0xf]
  %v33 = vld [vmem:[%s1 + $0xc] sm:$0xf]
  %v34 = vld [vmem:[%s1 + $0x10] sm:$0xf]
  %v35 = vld [vmem:[%s1 + $0x14] sm:$0xf]
  %v36 = vld [vmem:[%s1 + $0x18] sm:$0xf]
  %v37 = vld [vmem:[%s1 + $0x1c] sm:$0xf]
  %v38 = vld [vmem:[%s1 + $0x20] sm:$0xf]
  %v39 = vld [vmem:[%s1 + $0x24] sm:$0xf]
  %v40 = vld [vmem:[%s1 + $0x28] sm:$0xf]
  %v41 = vld [vmem:[%s1 + $0x2c] sm:$0xf]
  %v42 = vld [vmem:[%s1 + $0x30] sm:$0xf]
  %v43 = vld [vmem:[%s1 + $0x34] sm:$0xf]
  %v44 = vld [vmem:[%s1 + $0x38] sm:$0xf]
  %v45 = vld [vmem:[%s1 + $0x3c] sm:$0xf]
  %v48 = vunpack.c.l.b16 %v28
  %v49 = vunpack.c.l.b16 %v29
  %v50 = vpack.c.b16 %v49, %v48
  %v68 = vunpack.c.l.b16 %v30
  %v69 = vunpack.c.l.b16 %v31
  %v70 = vunpack.c.l.b16 %v32
  %v71 = vunpack.c.l.b16 %v33
  %v72 = vunpack.c.l.b16 %v34
  %v73 = vunpack.c.l.b16 %v35
  %v74 = vunpack.c.l.b16 %v36
  %v75 = vunpack.c.l.b16 %v37
  %v76 = vunpack.c.l.b16 %v38
  %v77 = vunpack.c.l.b16 %v39
  %v78 = vunpack.c.l.b16 %v40
  %v79 = vunpack.c.l.b16 %v41
  %v80 = vunpack.c.l.b16 %v42
  %v81 = vunpack.c.l.b16 %v43
  %v82 = vunpack.c.l.b16 %v44
  %v83 = vunpack.c.l.b16 %v45
  %v84 = vpack.c.b16 %v69, %v68
  %v85 = vpack.c.b16 %v71, %v70
  %v86 = vpack.c.b16 %v73, %v72
  %v87 = vpack.c.b16 %v75, %v74
  %v88 = vpack.c.b16 %v77, %v76
  %v89 = vpack.c.b16 %v79, %v78
  %v90 = vpack.c.b16 %v81, %v80
  %v91 = vpack.c.b16 %v83, %v82
  %100 = vmatprep.subr.bf16.mxu0 0
  %101 = vmatpush1.bf16.msra.mxu0 %v91
  %102 = vmatprep.subr.bf16.mxu0 0
  %103 = vmatpush1.bf16.msra.mxu0 %v90
  %104 = vmatprep.subr.bf16.mxu0 0
  %105 = vmatpush1.bf16.msra.mxu0 %v89
  %106 = vmatprep.subr.bf16.mxu0 0
  %107 = vmatpush1.bf16.msra.mxu0 %v88
  %108 = vmatprep.subr.bf16.mxu0 0
  %109 = vmatpush1.bf16.msra.mxu0 %v87
  %110 = vmatprep.subr.bf16.mxu0 0
  %111 = vmatpush1.bf16.msra.mxu0 %v86
  %112 = vmatprep.subr.bf16.mxu0 0
  %113 = vmatpush1.bf16.msra.mxu0 %v85
  %114 = vmatprep.subr.bf16.mxu0 0
  %115 = vmatpush1.bf16.msra.mxu0 %v84
  %116 = vmatprep.subr.bf16.mxu0 0
  %117 = vmatpush2.bf16.msra.mxu0 0
  %118 = vmatprep.subr.bf16.mxu0 0
  %119 = vmatpush2.bf16.msra.mxu0 0
  %120 = vmatprep.subr.bf16.mxu0 0
  %121 = vmatpush2.bf16.msra.mxu0 0
  %122 = vmatprep.subr.bf16.mxu0 0
  %123 = vmatpush2.bf16.msra.mxu0 0
  %124 = vmatprep.subr.bf16.mxu0 0
  %125 = vmatpush2.bf16.msra.mxu0 0
  %126 = vmatprep.subr.bf16.mxu0 0
  %127 = vmatpush2.bf16.msra.mxu0 0
  %128 = vmatprep.subr.bf16.mxu0 0
  %129 = vmatpush2.bf16.msra.mxu0 0
  %130 = vmatprep.subr.bf16.mxu0 0
  %131 = vmatpush2.bf16.msra.mxu0 0
  %132 = vmatprep.mubr.bf16.mxu0 0
  %133 = vmatmul.mubr.bf16.gmra.mxu0 %v50
  %v134 = vpop.f32.mrf.mxu0
  %v135 = vadd.f32 0.0, %v134
  %v136 = vpop.f32.mrf.mxu0
  %v137 = vpop.f32.mrf.mxu0
  %v138 = vadd.f32 0.0, %v137
  %v139 = vpop.f32.mrf.mxu0
  %140 = vdwg.mxu0
  %v141 = vadd.f32 %v26, %v135
  %v142 = vadd.f32 %v27, %v138
  %vm143 = vcmask 261120
  %144 = vst.msk [vmem:[#allocation2] sm:$0xff] %vm143, %v141
  %vm145 = vcmask 254976
  %146 = vst.msk [vmem:[#allocation2 + $0x8] sm:$0x3] %vm145, %v142
  // Predicated region
  $region22: #{srclip_forward.82} parent=0 // pred_check
    %p147 = pneg %p18
  $region23: #{srclip_forward.82} parent=0 // pred_check_branch
    %149 = sbr.rel (%p147) target = $region25
  $region24: #{srclip_forward.82} parent=0 // pred_region
    %v150 = vld [vmem:[#allocation2] sm:$0xff]
    %v151 = vld [vmem:[#allocation2 + $0x8] sm:$0x3]
    %v152 = vld [vmem:[%s2] sm:$0x1]
    %v154 = vlaneseq
    %v155 = vshrl.u32 %v154, 7
    %v156 = vsub.s32 0, %v155
    %v157 = vrot.slane %v152, %v156
    %v159 = vadd.f32 %v150, %v157
    %v160 = vadd.f32 %v151, %v157
    %v161 = vld [vmem:[%s3] sm:$0xff]
    %v162 = vld [vmem:[%s3 + $0x8] sm:$0x3]
    %v163 = vadd.f32 %v159, %v161
    %v164 = vadd.f32 %v160, %v162
    %165 = vst.msk [vmem:[%s4] sm:$0xff] %vm143, %v163
    %166 = vst.msk [vmem:[%s4 + $0x8] sm:$0x3] %vm145, %v164
  $region25: #{srclip_forward.82} parent=0 // pred_fallthru
    _
  // Predicated region
  $region26: #{srclip_forward.82} parent=0 // pred_check
    _
  $region27: #{srclip_forward.82} parent=0 // pred_check_branch
    %168 = sbr.rel (0) target = $region29
  $region28: #{srclip_forward.82} parent=0 // pred_region
    _
  $region29: #{srclip_forward.82} parent=0 // pred_fallthru
    _
  // Predicated region
  $region30: #{srclip_forward.82} parent=0 // pred_check
    _
  $region31: #{srclip_forward.82} parent=0 // pred_check_branch
    %170 = sbr.rel (0) target = $region33
  $region32: #{srclip_forward.82} parent=0 // pred_region
    _
  $region33: #{srclip_forward.82} parent=0 // pred_fallthru
    _

// kernel: srclip_forward.81
$region0: #{srclip_forward.81}
  #allocation0 [shape = 'u32[]', space=smem, size = 0x4, offset = 0x4, fixed_abs, tag = 'smem constant byte address 0x4 - core index']
  #allocation1 [shape = 'u32[144,128]{1,0:T(1,128)}', space=vmem, size = 0x12000, scoped, tag = 'internal scratch']
  #allocation2 [shape = 'f32[10,128]{1,0:T(8,128)}', space=vmem, size = 0x2000, scoped, tag = 'scratch operand']
  %s0 = inlined_call_operand.vmem [shape: bf16[10,32], index: 0, kind: input, shape index: {}]
  %s1 = inlined_call_operand.vmem [shape: bf16[32,128], index: 1, kind: input, shape index: {}]
  %s2 = inlined_call_operand.vmem [shape: f32[1,128], index: 2, kind: input, shape index: {}]
  %s3 = inlined_call_operand.vmem [shape: bf16[10,128], index: 3, kind: output, shape index: {}]
  %s4 = sld [smem:[#allocation0]]
  $region30: #{srclip_forward.81} parent=0
    _
  %s6 = ssub.s32 1, %s4
  %s7 = scalar_select 0, %s6, %s4
  // Predicated region
  $region2: #{srclip_forward.81} parent=0 // pred_check
    _
  $region3: #{srclip_forward.81} parent=0 // pred_check_branch
    %9 = sbr.rel (0) target = $region5
  $region4: #{srclip_forward.81} parent=0 // pred_region
    _
  $region5: #{srclip_forward.81} parent=0 // pred_fallthru
    _
  // Predicated region
  $region6: #{srclip_forward.81} parent=0 // pred_check
    _
  $region7: #{srclip_forward.81} parent=0 // pred_check_branch
    %11 = sbr.rel (0) target = $region9
  $region8: #{srclip_forward.81} parent=0 // pred_region
    _
  $region9: #{srclip_forward.81} parent=0 // pred_fallthru
    _
  // Predicated region
  $region10: #{srclip_forward.81} parent=0 // pred_check
    _
  $region11: #{srclip_forward.81} parent=0 // pred_check_branch
    %13 = sbr.rel (0) target = $region13
  $region12: #{srclip_forward.81} parent=0 // pred_region
    _
  $region13: #{srclip_forward.81} parent=0 // pred_fallthru
    _
  %p15 = scmp.eq.s32.totalorder 0, 0
  // Predicated region
  $region14: #{srclip_forward.81} parent=0 // pred_check
    %p16 = pneg %p15
  $region15: #{srclip_forward.81} parent=0 // pred_check_branch
    %18 = sbr.rel (%p16) target = $region17
  $region16: #{srclip_forward.81} parent=0 // pred_region
    %19 = vst [vmem:[#allocation2] sm:$0xff] 0.0
    %20 = vst [vmem:[#allocation2 + $0x8] sm:$0x3] 0.0
  $region17: #{srclip_forward.81} parent=0 // pred_fallthru
    _
  %v21 = vld [vmem:[#allocation2] sm:$0xff]
  %v22 = vld [vmem:[#allocation2 + $0x8] sm:$0x3]
  %v23 = vld [vmem:[%s0] sm:$0xf]
  %v24 = vld [vmem:[%s0 + $0x4] sm:$0x1]
  %v25 = vld [vmem:[%s1] sm:$0xf]
  %v26 = vld [vmem:[%s1 + $0x4] sm:$0xf]
  %v27 = vld [vmem:[%s1 + $0x8] sm:$0xf]
  %v28 = vld [vmem:[%s1 + $0xc] sm:$0xf]
  %v31 = vunpack.c.l.b16 %v23
  %v32 = vunpack.c.l.b16 %v24
  %v33 = vpack.c.b16 %v32, %v31
  %v38 = vunpack.c.l.b16 %v25
  %v39 = vunpack.c.l.b16 %v26
  %v40 = vunpack.c.l.b16 %v27
  %v41 = vunpack.c.l.b16 %v28
  %v42 = vpack.c.b16 %v39, %v38
  %v43 = vpack.c.b16 %v41, %v40
  %vm46 = vcmask 261120
  %v48 = vsel %vm46, %v33, 0
  %50 = vmatprep.subr.bf16.mxu0 0
  %51 = vmatpush1.bf16.msra.mxu0 0
  %52 = vmatprep.subr.bf16.mxu0 0
  %53 = vmatpush1.bf16.msra.mxu0 0
  %54 = vmatprep.subr.bf16.mxu0 0
  %55 = vmatpush1.bf16.msra.mxu0 0
  %56 = vmatprep.subr.bf16.mxu0 0
  %57 = vmatpush1.bf16.msra.mxu0 0
  %58 = vmatprep.subr.bf16.mxu0 0
  %59 = vmatpush1.bf16.msra.mxu0 0
  %60 = vmatprep.subr.bf16.mxu0 0
  %61 = vmatpush1.bf16.msra.mxu0 0
  %62 = vmatprep.subr.bf16.mxu0 0
  %63 = vmatpush1.bf16.msra.mxu0 %v43
  %64 = vmatprep.subr.bf16.mxu0 0
  %65 = vmatpush1.bf16.msra.mxu0 %v42
  %66 = vmatprep.subr.bf16.mxu0 0
  %67 = vmatpush2.bf16.msra.mxu0 0
  %68 = vmatprep.subr.bf16.mxu0 0
  %69 = vmatpush2.bf16.msra.mxu0 0
  %70 = vmatprep.subr.bf16.mxu0 0
  %71 = vmatpush2.bf16.msra.mxu0 0
  %72 = vmatprep.subr.bf16.mxu0 0
  %73 = vmatpush2.bf16.msra.mxu0 0
  %74 = vmatprep.subr.bf16.mxu0 0
  %75 = vmatpush2.bf16.msra.mxu0 0
  %76 = vmatprep.subr.bf16.mxu0 0
  %77 = vmatpush2.bf16.msra.mxu0 0
  %78 = vmatprep.subr.bf16.mxu0 0
  %79 = vmatpush2.bf16.msra.mxu0 0
  %80 = vmatprep.subr.bf16.mxu0 0
  %81 = vmatpush2.bf16.msra.mxu0 0
  %82 = vmatprep.mubr.bf16.mxu0 0
  %83 = vmatmul.mubr.bf16.gmra.mxu0 %v48
  %v84 = vpop.f32.mrf.mxu0
  %v85 = vadd.f32 0.0, %v84
  %v86 = vpop.f32.mrf.mxu0
  %v87 = vpop.f32.mrf.mxu0
  %v88 = vadd.f32 0.0, %v87
  %v89 = vpop.f32.mrf.mxu0
  %90 = vdwg.mxu0
  %v91 = vadd.f32 %v21, %v85
  %v92 = vadd.f32 %v22, %v88
  %93 = vst [vmem:[#allocation2] sm:$0xff] %v91
  %94 = vst [vmem:[#allocation2 + $0x8] sm:$0x3] %v92
  // Predicated region
  $region18: #{srclip_forward.81} parent=0 // pred_check
    %p95 = pneg %p15
  $region19: #{srclip_forward.81} parent=0 // pred_check_branch
    %97 = sbr.rel (%p95) target = $region21
  $region20: #{srclip_forward.81} parent=0 // pred_region
    %v98 = vld [vmem:[#allocation2] sm:$0xff]
    %v99 = vld [vmem:[#allocation2 + $0x8] sm:$0x3]
    %v100 = vld [vmem:[%s2] sm:$0x1]
    %v102 = vlaneseq
    %v103 = vshrl.u32 %v102, 7
    %v104 = vsub.s32 0, %v103
    %v105 = vrot.slane %v100, %v104
    %v107 = vadd.f32 %v98, %v105
    %v108 = vadd.f32 %v99, %v105
    %v109 = vmul.f32 %v107, 0.70710677
    %v110 = vmul.f32 %v108, 0.70710677
    %v111 = vand.u32 2147483647, %v109
    %v112 = vand.u32 2147483647, %v110
    %v113 = vmul.f32 %v111, 0.3275911
    %v114 = vmul.f32 %v112, 0.3275911
    %v115 = vadd.f32 %v113, 1.0
    %v116 = vadd.f32 %v114, 1.0
    %v117 = vrcp.pop %v115
    %v118 = vrcp.pop %v116
    %v119 = vmul.f32 %v117, 1.0614054
    %v120 = vmul.f32 %v118, 1.0614054
    %v121 = vadd.f32 %v119, -1.4531521
    %v122 = vadd.f32 %v120, -1.4531521
    %v123 = vmul.f32 %v121, %v117
    %v124 = vmul.f32 %v122, %v118
    %v125 = vadd.f32 %v123, 1.4214138
    %v126 = vadd.f32 %v124, 1.4214138
    %v127 = vmul.f32 %v125, %v117
    %v128 = vmul.f32 %v126, %v118
    %v129 = vadd.f32 %v127, -0.28449672
    %v130 = vadd.f32 %v128, -0.28449672
    %v131 = vmul.f32 %v129, %v117
    %v132 = vmul.f32 %v130, %v118
    %v133 = vadd.f32 %v131, 0.2548296
    %v134 = vadd.f32 %v132, 0.2548296
    %v135 = vmul.f32 %v133, %v117
    %v136 = vmul.f32 %v134, %v118
    %v137 = vsub.f32 0.0, %v111
    %v138 = vsub.f32 0.0, %v112
    %v139 = vmul.f32 %v137, %v111
    %v140 = vmul.f32 %v138, %v112
    %v141 = vmul.f32 %v139, 1.442695
    %v142 = vpow.pop %v141
    %v143 = vmul.f32 %v140, 1.442695
    %v144 = vpow.pop %v143
    %v145 = vmul.f32 %v135, %v142
    %v146 = vmul.f32 %v136, %v144
    %v147 = vsub.f32 1.0, %v145
    %v148 = vsub.f32 1.0, %v146
    %vm149 = vcmp.ge.f32.partialorder %v109, 0.0
    %vm150 = vcmp.ge.f32.partialorder %v110, 0.0
    %v151 = vsub.f32 0.0, %v147
    %v152 = vsub.f32 0.0, %v148
    %v153 = vsel %vm149, %v147, %v151
    %v154 = vsel %vm150, %v148, %v152
    %v155 = vmul.f32 %v107, 0.5
    %v156 = vmul.f32 %v108, 0.5
    %v157 = vadd.f32 %v153, 1.0
    %v158 = vadd.f32 %v154, 1.0
    %v159 = vmul.f32 %v155, %v157
    %v160 = vmul.f32 %v156, %v158
    %v161 = vpack.c.bf16 %v160, %v159
    %v163 = vunpack.c.l.b16 %v161
    %v164 = vunpack.c.h.b16 %v161
    %v165 = vpack.c.b16 %v163, %v163
    %v166 = vpack.c.b16 %v164, %v164
    %169 = vst [vmem:[%s3] sm:$0xf] %v165
    %170 = vst [vmem:[%s3 + $0x4] sm:$0x1] %v166
  $region21: #{srclip_forward.81} parent=0 // pred_fallthru
    _
  // Predicated region
  $region22: #{srclip_forward.81} parent=0 // pred_check
    _
  $region23: #{srclip_forward.81} parent=0 // pred_check_branch
    %172 = sbr.rel (0) target = $region25
  $region24: #{srclip_forward.81} parent=0 // pred_region
    _
  $region25: #{srclip_forward.81} parent=0 // pred_fallthru
    _
  // Predicated region
  $region26: #{srclip_forward.81} parent=0 // pred_check
    _
  $region27: #{srclip_forward.81} parent=0 // pred_check_branch
    %174 = sbr.rel (0) target = $region29
  $region28: #{srclip_forward.81} parent=0 // pred_region
    _
  $region29: #{srclip_forward.81} parent=0 // pred_fallthru
    _

// kernel: srclip_forward.83
$region0: #{srclip_forward.83}
  #allocation0 [shape = 'u32[]', space=smem, size = 0x4, offset = 0x4, fixed_abs, tag = 'smem constant byte address 0x4 - core index']
  #allocation1 [shape = 'u32[144,128]{1,0:T(1,128)}', space=vmem, size = 0x12000, scoped, tag = 'internal scratch']
  #allocation2 [shape = 'f32[10,32]{1,0:T(8,128)}', space=vmem, size = 0x2000, scoped, tag = 'scratch operand']
  %s0 = inlined_call_operand.vmem [shape: bf16[10,32], index: 0, kind: input, shape index: {}]
  %s1 = inlined_call_operand.vmem [shape: bf16[32,32], index: 1, kind: input, shape index: {}]
  %s2 = inlined_call_operand.vmem [shape: f32[1,32], index: 2, kind: input, shape index: {}]
  %s3 = inlined_call_operand.vmem [shape: bf16[10,32], index: 3, kind: output, shape index: {}]
  %s4 = sld [smem:[#allocation0]]
  $region30: #{srclip_forward.83} parent=0
    _
  %s6 = ssub.s32 1, %s4
  %s7 = scalar_select 0, %s6, %s4
  // Predicated region
  $region2: #{srclip_forward.83} parent=0 // pred_check
    _
  $region3: #{srclip_forward.83} parent=0 // pred_check_branch
    %9 = sbr.rel (0) target = $region5
  $region4: #{srclip_forward.83} parent=0 // pred_region
    _
  $region5: #{srclip_forward.83} parent=0 // pred_fallthru
    _
  // Predicated region
  $region6: #{srclip_forward.83} parent=0 // pred_check
    _
  $region7: #{srclip_forward.83} parent=0 // pred_check_branch
    %11 = sbr.rel (0) target = $region9
  $region8: #{srclip_forward.83} parent=0 // pred_region
    _
  $region9: #{srclip_forward.83} parent=0 // pred_fallthru
    _
  // Predicated region
  $region10: #{srclip_forward.83} parent=0 // pred_check
    _
  $region11: #{srclip_forward.83} parent=0 // pred_check_branch
    %13 = sbr.rel (0) target = $region13
  $region12: #{srclip_forward.83} parent=0 // pred_region
    _
  $region13: #{srclip_forward.83} parent=0 // pred_fallthru
    _
  %p15 = scmp.eq.s32.totalorder 0, 0
  // Predicated region
  $region14: #{srclip_forward.83} parent=0 // pred_check
    %p16 = pneg %p15
  $region15: #{srclip_forward.83} parent=0 // pred_check_branch
    %18 = sbr.rel (%p16) target = $region17
  $region16: #{srclip_forward.83} parent=0 // pred_region
    %vm19 = vcmask 261120
    %20 = vst.msk [vmem:[#allocation2] sm:$0xff] %vm19, 0.0
    %vm21 = vcmask 254976
    %22 = vst.msk [vmem:[#allocation2 + $0x8] sm:$0x3] %vm21, 0.0
  $region17: #{srclip_forward.83} parent=0 // pred_fallthru
    _
  %v23 = vld [vmem:[#allocation2] sm:$0xff]
  %v24 = vld [vmem:[#allocation2 + $0x8] sm:$0x3]
  %v25 = vld [vmem:[%s0] sm:$0xf]
  %v26 = vld [vmem:[%s0 + $0x4] sm:$0x1]
  %v27 = vld [vmem:[%s1] sm:$0xf]
  %v28 = vld [vmem:[%s1 + $0x4] sm:$0xf]
  %v29 = vld [vmem:[%s1 + $0x8] sm:$0xf]
  %v30 = vld [vmem:[%s1 + $0xc] sm:$0xf]
  %v33 = vunpack.c.l.b16 %v25
  %v34 = vunpack.c.l.b16 %v26
  %v35 = vpack.c.b16 %v34, %v33
  %v40 = vunpack.c.l.b16 %v27
  %v41 = vunpack.c.l.b16 %v28
  %v42 = vunpack.c.l.b16 %v29
  %v43 = vunpack.c.l.b16 %v30
  %v44 = vpack.c.b16 %v41, %v40
  %v45 = vpack.c.b16 %v43, %v42
  %vm48 = vcmask 261120
  %v50 = vsel %vm48, %v35, 0
  %52 = vmatprep.subr.bf16.mxu0 0
  %53 = vmatpush1.bf16.msra.mxu0 0
  %54 = vmatprep.subr.bf16.mxu0 0
  %55 = vmatpush1.bf16.msra.mxu0 0
  %56 = vmatprep.subr.bf16.mxu0 0
  %57 = vmatpush1.bf16.msra.mxu0 0
  %58 = vmatprep.subr.bf16.mxu0 0
  %59 = vmatpush1.bf16.msra.mxu0 0
  %60 = vmatprep.subr.bf16.mxu0 0
  %61 = vmatpush1.bf16.msra.mxu0 0
  %62 = vmatprep.subr.bf16.mxu0 0
  %63 = vmatpush1.bf16.msra.mxu0 0
  %64 = vmatprep.subr.bf16.mxu0 0
  %65 = vmatpush1.bf16.msra.mxu0 %v45
  %66 = vmatprep.subr.bf16.mxu0 0
  %67 = vmatpush1.bf16.msra.mxu0 %v44
  %68 = vmatprep.subr.bf16.mxu0 0
  %69 = vmatpush2.bf16.msra.mxu0 0
  %70 = vmatprep.subr.bf16.mxu0 0
  %71 = vmatpush2.bf16.msra.mxu0 0
  %72 = vmatprep.subr.bf16.mxu0 0
  %73 = vmatpush2.bf16.msra.mxu0 0
  %74 = vmatprep.subr.bf16.mxu0 0
  %75 = vmatpush2.bf16.msra.mxu0 0
  %76 = vmatprep.subr.bf16.mxu0 0
  %77 = vmatpush2.bf16.msra.mxu0 0
  %78 = vmatprep.subr.bf16.mxu0 0
  %79 = vmatpush2.bf16.msra.mxu0 0
  %80 = vmatprep.subr.bf16.mxu0 0
  %81 = vmatpush2.bf16.msra.mxu0 0
  %82 = vmatprep.subr.bf16.mxu0 0
  %83 = vmatpush2.bf16.msra.mxu0 0
  %84 = vmatprep.mubr.bf16.mxu0 0
  %85 = vmatmul.mubr.bf16.gmra.mxu0 %v50
  %v86 = vpop.f32.mrf.mxu0
  %v87 = vadd.f32 0.0, %v86
  %v88 = vpop.f32.mrf.mxu0
  %v89 = vpop.f32.mrf.mxu0
  %v90 = vadd.f32 0.0, %v89
  %v91 = vpop.f32.mrf.mxu0
  %92 = vdwg.mxu0
  %v93 = vadd.f32 %v23, %v87
  %v94 = vadd.f32 %v24, %v90
  %95 = vst.msk [vmem:[#allocation2] sm:$0xff] %vm48, %v93
  %vm96 = vcmask 254976
  %97 = vst.msk [vmem:[#allocation2 + $0x8] sm:$0x3] %vm96, %v94
  // Predicated region
  $region18: #{srclip_forward.83} parent=0 // pred_check
    %p98 = pneg %p15
  $region19: #{srclip_forward.83} parent=0 // pred_check_branch
    %100 = sbr.rel (%p98) target = $region21
  $region20: #{srclip_forward.83} parent=0 // pred_region
    %v101 = vld [vmem:[#allocation2] sm:$0xff]
    %v102 = vld [vmem:[#allocation2 + $0x8] sm:$0x3]
    %v103 = vld [vmem:[%s2] sm:$0x1]
    %v105 = vlaneseq
    %v106 = vshrl.u32 %v105, 7
    %v107 = vsub.s32 0, %v106
    %v108 = vrot.slane %v103, %v107
    %v110 = vadd.f32 %v101, %v108
    %v111 = vadd.f32 %v102, %v108
    %v112 = vpack.c.bf16 %v111, %v110
    %v114 = vunpack.c.l.b16 %v112
    %v115 = vunpack.c.h.b16 %v112
    %v116 = vpack.c.b16 %v114, %v114
    %v117 = vpack.c.b16 %v115, %v115
    %vm120 = vcmask 257024
    %121 = vst.msk [vmem:[%s3] sm:$0xf] %vm120, %v116
    %vm122 = vcmask 253952
    %123 = vst.msk [vmem:[%s3 + $0x4] sm:$0x1] %vm122, %v117
  $region21: #{srclip_forward.83} parent=0 // pred_fallthru
    _
  // Predicated region
  $region22: #{srclip_forward.83} parent=0 // pred_check
    _
  $region23: #{srclip_forward.83} parent=0 // pred_check_branch
    %125 = sbr.rel (0) target = $region25
  $region24: #{srclip_forward.83} parent=0 // pred_region
    _
  $region25: #{srclip_forward.83} parent=0 // pred_fallthru
    _
  // Predicated region
  $region26: #{srclip_forward.83} parent=0 // pred_check
    _
  $region27: #{srclip_forward.83} parent=0 // pred_check_branch
    %127 = sbr.rel (0) target = $region29
  $region28: #{srclip_forward.83} parent=0 // pred_region
    _
  $region29: #{srclip_forward.83} parent=0 // pred_fallthru
    _

// kernel: srclip_forward.102
$region0: #{srclip_forward.102}
  #allocation0 [shape = 'u32[]', space=smem, size = 0x4, offset = 0x4, fixed_abs, tag = 'smem constant byte address 0x4 - core index']
  #allocation1 [shape = 'u32[144,128]{1,0:T(1,128)}', space=vmem, size = 0x12000, scoped, tag = 'internal scratch']
  #allocation2 [shape = 'f32[10,32]{1,0:T(8,128)}', space=vmem, size = 0x2000, scoped, tag = 'scratch operand']
  %s0 = inlined_call_operand.vmem [shape: bf16[10,128], index: 0, kind: input, shape index: {}]
  %s1 = inlined_call_operand.vmem [shape: bf16[128,32], index: 1, kind: input, shape index: {}]
  %s2 = inlined_call_operand.vmem [shape: f32[1,32], index: 2, kind: input, shape index: {}]
  %s3 = inlined_call_operand.vmem [shape: f32[10,32], index: 3, kind: input, shape index: {}]
  %s4 = inlined_call_operand.vmem [shape: bf16[10,32], index: 4, kind: input, shape index: {}]
  %s5 = inlined_call_operand.vmem [shape: f32[10,32], index: 5, kind: output, shape index: {}]
  %s6 = sld [smem:[#allocation0]]
  $region38: #{srclip_forward.102} parent=0
    _
  %s8 = ssub.s32 1, %s6
  %s9 = scalar_select 0, %s8, %s6
  // Predicated region
  $region2: #{srclip_forward.102} parent=0 // pred_check
    _
  $region3: #{srclip_forward.102} parent=0 // pred_check_branch
    %11 = sbr.rel (0) target = $region5
  $region4: #{srclip_forward.102} parent=0 // pred_region
    _
  $region5: #{srclip_forward.102} parent=0 // pred_fallthru
    _
  // Predicated region
  $region6: #{srclip_forward.102} parent=0 // pred_check
    _
  $region7: #{srclip_forward.102} parent=0 // pred_check_branch
    %13 = sbr.rel (0) target = $region9
  $region8: #{srclip_forward.102} parent=0 // pred_region
    _
  $region9: #{srclip_forward.102} parent=0 // pred_fallthru
    _
  // Predicated region
  $region10: #{srclip_forward.102} parent=0 // pred_check
    _
  $region11: #{srclip_forward.102} parent=0 // pred_check_branch
    %15 = sbr.rel (0) target = $region13
  $region12: #{srclip_forward.102} parent=0 // pred_region
    _
  $region13: #{srclip_forward.102} parent=0 // pred_fallthru
    _
  // Predicated region
  $region14: #{srclip_forward.102} parent=0 // pred_check
    _
  $region15: #{srclip_forward.102} parent=0 // pred_check_branch
    %17 = sbr.rel (0) target = $region17
  $region16: #{srclip_forward.102} parent=0 // pred_region
    _
  $region17: #{srclip_forward.102} parent=0 // pred_fallthru
    _
  // Predicated region
  $region18: #{srclip_forward.102} parent=0 // pred_check
    _
  $region19: #{srclip_forward.102} parent=0 // pred_check_branch
    %19 = sbr.rel (0) target = $region21
  $region20: #{srclip_forward.102} parent=0 // pred_region
    _
  $region21: #{srclip_forward.102} parent=0 // pred_fallthru
    _
  %p21 = scmp.eq.s32.totalorder 0, 0
  // Predicated region
  $region22: #{srclip_forward.102} parent=0 // pred_check
    %p22 = pneg %p21
  $region23: #{srclip_forward.102} parent=0 // pred_check_branch
    %24 = sbr.rel (%p22) target = $region25
  $region24: #{srclip_forward.102} parent=0 // pred_region
    %vm25 = vcmask 261120
    %26 = vst.msk [vmem:[#allocation2] sm:$0xff] %vm25, 0.0
    %vm27 = vcmask 254976
    %28 = vst.msk [vmem:[#allocation2 + $0x8] sm:$0x3] %vm27, 0.0
  $region25: #{srclip_forward.102} parent=0 // pred_fallthru
    _
  %v29 = vld [vmem:[#allocation2] sm:$0xff]
  %v30 = vld [vmem:[#allocation2 + $0x8] sm:$0x3]
  %v31 = vld [vmem:[%s0] sm:$0xf]
  %v32 = vld [vmem:[%s0 + $0x4] sm:$0x1]
  %v33 = vld [vmem:[%s1] sm:$0xf]
  %v34 = vld [vmem:[%s1 + $0x4] sm:$0xf]
  %v35 = vld [vmem:[%s1 + $0x8] sm:$0xf]
  %v36 = vld [vmem:[%s1 + $0xc] sm:$0xf]
  %v37 = vld [vmem:[%s1 + $0x10] sm:$0xf]
  %v38 = vld [vmem:[%s1 + $0x14] sm:$0xf]
  %v39 = vld [vmem:[%s1 + $0x18] sm:$0xf]
  %v40 = vld [vmem:[%s1 + $0x1c] sm:$0xf]
  %v41 = vld [vmem:[%s1 + $0x20] sm:$0xf]
  %v42 = vld [vmem:[%s1 + $0x24] sm:$0xf]
  %v43 = vld [vmem:[%s1 + $0x28] sm:$0xf]
  %v44 = vld [vmem:[%s1 + $0x2c] sm:$0xf]
  %v45 = vld [vmem:[%s1 + $0x30] sm:$0xf]
  %v46 = vld [vmem:[%s1 + $0x34] sm:$0xf]
  %v47 = vld [vmem:[%s1 + $0x38] sm:$0xf]
  %v48 = vld [vmem:[%s1 + $0x3c] sm:$0xf]
  %v51 = vunpack.c.l.b16 %v31
  %v52 = vunpack.c.l.b16 %v32
  %v53 = vpack.c.b16 %v52, %v51
  %v71 = vunpack.c.l.b16 %v33
  %v72 = vunpack.c.l.b16 %v34
  %v73 = vunpack.c.l.b16 %v35
  %v74 = vunpack.c.l.b16 %v36
  %v75 = vunpack.c.l.b16 %v37
  %v76 = vunpack.c.l.b16 %v38
  %v77 = vunpack.c.l.b16 %v39
  %v78 = vunpack.c.l.b16 %v40
  %v79 = vunpack.c.l.b16 %v41
  %v80 = vunpack.c.l.b16 %v42
  %v81 = vunpack.c.l.b16 %v43
  %v82 = vunpack.c.l.b16 %v44
  %v83 = vunpack.c.l.b16 %v45
  %v84 = vunpack.c.l.b16 %v46
  %v85 = vunpack.c.l.b16 %v47
  %v86 = vunpack.c.l.b16 %v48
  %v87 = vpack.c.b16 %v72, %v71
  %v88 = vpack.c.b16 %v74, %v73
  %v89 = vpack.c.b16 %v76, %v75
  %v90 = vpack.c.b16 %v78, %v77
  %v91 = vpack.c.b16 %v80, %v79
  %v92 = vpack.c.b16 %v82, %v81
  %v93 = vpack.c.b16 %v84, %v83
  %v94 = vpack.c.b16 %v86, %v85
  %103 = vmatprep.subr.bf16.mxu0 0
  %104 = vmatpush1.bf16.msra.mxu0 %v94
  %105 = vmatprep.subr.bf16.mxu0 0
  %106 = vmatpush1.bf16.msra.mxu0 %v93
  %107 = vmatprep.subr.bf16.mxu0 0
  %108 = vmatpush1.bf16.msra.mxu0 %v92
  %109 = vmatprep.subr.bf16.mxu0 0
  %110 = vmatpush1.bf16.msra.mxu0 %v91
  %111 = vmatprep.subr.bf16.mxu0 0
  %112 = vmatpush1.bf16.msra.mxu0 %v90
  %113 = vmatprep.subr.bf16.mxu0 0
  %114 = vmatpush1.bf16.msra.mxu0 %v89
  %115 = vmatprep.subr.bf16.mxu0 0
  %116 = vmatpush1.bf16.msra.mxu0 %v88
  %117 = vmatprep.subr.bf16.mxu0 0
  %118 = vmatpush1.bf16.msra.mxu0 %v87
  %119 = vmatprep.subr.bf16.mxu0 0
  %120 = vmatpush2.bf16.msra.mxu0 0
  %121 = vmatprep.subr.bf16.mxu0 0
  %122 = vmatpush2.bf16.msra.mxu0 0
  %123 = vmatprep.subr.bf16.mxu0 0
  %124 = vmatpush2.bf16.msra.mxu0 0
  %125 = vmatprep.subr.bf16.mxu0 0
  %126 = vmatpush2.bf16.msra.mxu0 0
  %127 = vmatprep.subr.bf16.mxu0 0
  %128 = vmatpush2.bf16.msra.mxu0 0
  %129 = vmatprep.subr.bf16.mxu0 0
  %130 = vmatpush2.bf16.msra.mxu0 0
  %131 = vmatprep.subr.bf16.mxu0 0
  %132 = vmatpush2.bf16.msra.mxu0 0
  %133 = vmatprep.subr.bf16.mxu0 0
  %134 = vmatpush2.bf16.msra.mxu0 0
  %135 = vmatprep.mubr.bf16.mxu0 0
  %136 = vmatmul.mubr.bf16.gmra.mxu0 %v53
  %v137 = vpop.f32.mrf.mxu0
  %v138 = vadd.f32 0.0, %v137
  %v139 = vpop.f32.mrf.mxu0
  %v140 = vpop.f32.mrf.mxu0
  %v141 = vadd.f32 0.0, %v140
  %v142 = vpop.f32.mrf.mxu0
  %143 = vdwg.mxu0
  %v144 = vadd.f32 %v29, %v138
  %v145 = vadd.f32 %v30, %v141
  %vm146 = vcmask 261120
  %147 = vst.msk [vmem:[#allocation2] sm:$0xff] %vm146, %v144
  %vm148 = vcmask 254976
  %149 = vst.msk [vmem:[#allocation2 + $0x8] sm:$0x3] %vm148, %v145
  // Predicated region
  $region26: #{srclip_forward.102} parent=0 // pred_check
    %p150 = pneg %p21
  $region27: #{srclip_forward.102} parent=0 // pred_check_branch
    %152 = sbr.rel (%p150) target = $region29
  $region28: #{srclip_forward.102} parent=0 // pred_region
    %v153 = vld [vmem:[#allocation2] sm:$0xff]
    %v154 = vld [vmem:[#allocation2 + $0x8] sm:$0x3]
    %v155 = vld [vmem:[%s2] sm:$0x1]
    %v157 = vlaneseq
    %v158 = vshrl.u32 %v157, 7
    %v159 = vsub.s32 0, %v158
    %v160 = vrot.slane %v155, %v159
    %v162 = vadd.f32 %v153, %v160
    %v163 = vadd.f32 %v154, %v160
    %v164 = vld [vmem:[%s3] sm:$0xff]
    %v165 = vld [vmem:[%s3 + $0x8] sm:$0x3]
    %v166 = vadd.f32 %v162, %v164
    %v167 = vadd.f32 %v163, %v165
    %v168 = vld [vmem:[%s4] sm:$0xf]
    %v169 = vld [vmem:[%s4 + $0x4] sm:$0x1]
    %v170 = vunpack.c.l.bf16 %v168
    %v171 = vunpack.c.l.bf16 %v169
    %v172 = vadd.f32 %v166, %v170
    %v173 = vadd.f32 %v167, %v171
    %174 = vst.msk [vmem:[%s5] sm:$0xff] %vm146, %v172
    %175 = vst.msk [vmem:[%s5 + $0x8] sm:$0x3] %vm148, %v173
  $region29: #{srclip_forward.102} parent=0 // pred_fallthru
    _
  // Predicated region
  $region30: #{srclip_forward.102} parent=0 // pred_check
    _
  $region31: #{srclip_forward.102} parent=0 // pred_check_branch
    %177 = sbr.rel (0) target = $region33
  $region32: #{srclip_forward.102} parent=0 // pred_region
    _
  $region33: #{srclip_forward.102} parent=0 // pred_fallthru
    _
  // Predicated region
  $region34: #{srclip_forward.102} parent=0 // pred_check
    _
  $region35: #{srclip_forward.102} parent=0 // pred_check_branch
    %179 = sbr.rel (0) target = $region37
  $region36: #{srclip_forward.102} parent=0 // pred_region
    _
  $region37: #{srclip_forward.102} parent=0 // pred_fallthru
    _

// kernel: srclip_forward.110
$region0: #{srclip_forward.110}
  #allocation0 [shape = 'u32[]', space=smem, size = 0x4, offset = 0x4, fixed_abs, tag = 'smem constant byte address 0x4 - core index']
  #allocation1 [shape = 'u32[144,128]{1,0:T(1,128)}', space=vmem, size = 0x12000, scoped, tag = 'internal scratch']
  %s0 = inlined_call_operand.vmem [shape: f32[2,32], index: 0, kind: input, shape index: {}]
  %s1 = inlined_call_operand.vmem [shape: f32[1,32], index: 1, kind: input, shape index: {}]
  %s2 = inlined_call_operand.vmem [shape: f32[1,32], index: 2, kind: input, shape index: {}]
  %s3 = inlined_call_operand.vmem [shape: bf16[2,32], index: 3, kind: output, shape index: {}]
  %s4 = sld [smem:[#allocation0]]
  $region22: #{srclip_forward.110} parent=0
    _
  %s6 = ssub.s32 1, %s4
  %s7 = scalar_select 0, %s6, %s4
  // Predicated region
  $region2: #{srclip_forward.110} parent=0 // pred_check
    _
  $region3: #{srclip_forward.110} parent=0 // pred_check_branch
    %9 = sbr.rel (0) target = $region5
  $region4: #{srclip_forward.110} parent=0 // pred_region
    _
  $region5: #{srclip_forward.110} parent=0 // pred_fallthru
    _
  // Predicated region
  $region6: #{srclip_forward.110} parent=0 // pred_check
    _
  $region7: #{srclip_forward.110} parent=0 // pred_check_branch
    %11 = sbr.rel (0) target = $region9
  $region8: #{srclip_forward.110} parent=0 // pred_region
    _
  $region9: #{srclip_forward.110} parent=0 // pred_fallthru
    _
  // Predicated region
  $region10: #{srclip_forward.110} parent=0 // pred_check
    _
  $region11: #{srclip_forward.110} parent=0 // pred_check_branch
    %13 = sbr.rel (0) target = $region13
  $region12: #{srclip_forward.110} parent=0 // pred_region
    _
  $region13: #{srclip_forward.110} parent=0 // pred_fallthru
    _
  %v14 = vld [vmem:[%s0] sm:$0x3]
  %vm15 = vcmask 254976
  %v16 = vsel %vm15, %v14, 0.0
  %17 = vadd.xlane.f32.xlu0 %v16
  %v18 = vpop.xlane.xlu0 %17
  %v19 = vrcp.pop 32.0
  %v20 = vmul.f32 %v18, %v19
  %v21 = vsub.f32 %v14, %v20
  %v22 = vmul.f32 %v21, %v21
  %v23 = vsel %vm15, %v22, 0.0
  %24 = vadd.xlane.f32.xlu0 %v23
  %v25 = vpop.xlane.xlu0 %24
  %v26 = vmul.f32 %v25, %v19
  %v27 = vadd.f32 %v26, 1e-05
  %v28 = vrsqrt.pop %v27
  %v29 = vmul.f32 %v21, %v28
  %v30 = vld [vmem:[%s1] sm:$0x1]
  %v32 = vlaneseq
  %v33 = vshrl.u32 %v32, 7
  %v34 = vsub.s32 0, %v33
  %v35 = vrot.slane %v30, %v34
  %v37 = vmul.f32 %v29, %v35
  %v38 = vld [vmem:[%s2] sm:$0x1]
  %v40 = vlaneseq
  %v41 = vshrl.u32 %v40, 7
  %v42 = vsub.s32 0, %v41
  %v43 = vrot.slane %v38, %v42
  %v45 = vadd.f32 %v37, %v43
  %v46 = vpack.c.bf16 %v45, %v45
  %vm47 = vcmask 253952
  %48 = vst.msk [vmem:[%s3] sm:$0x1] %vm47, %v46
  // Predicated region
  $region14: #{srclip_forward.110} parent=0 // pred_check
    _
  $region15: #{srclip_forward.110} parent=0 // pred_check_branch
    %50 = sbr.rel (0) target = $region17
  $region16: #{srclip_forward.110} parent=0 // pred_region
    _
  $region17: #{srclip_forward.110} parent=0 // pred_fallthru
    _
  // Predicated region
  $region18: #{srclip_forward.110} parent=0 // pred_check
    _
  $region19: #{srclip_forward.110} parent=0 // pred_check_branch
    %52 = sbr.rel (0) target = $region21
  $region20: #{srclip_forward.110} parent=0 // pred_region
    _
  $region21: #{srclip_forward.110} parent=0 // pred_fallthru
    _

</llo_original>
